<compile_context>
chip_gen: v6e
topology: v6e:2x2x1
jax: 0.10.0
libtpu: 0.0.40
codegen_flags: <defaults>
</compile_context>

<pallas_src>
import math

import jax
import jax.numpy as jnp
from jax.experimental import pallas as pl
from jax.experimental.pallas import tpu as pltpu


def _mlp_kernel(x_ref, w1_ref, b1_ref, w2_ref, b2_ref, w3_ref, b3_ref, o_ref):
    # layer1: (TB,48)bf16 @ (48,1024)bf16 -> f32 acc, +b1, relu
    h1 = jnp.dot(x_ref[...], w1_ref[...], preferred_element_type=jnp.float32)
    h1 = jnp.maximum(h1 + b1_ref[...], 0.0)
    # layer2: (TB,1024)bf16 @ (1024,1024)bf16 -> f32 acc, +b2, relu
    h2 = jnp.dot(h1.astype(jnp.bfloat16), w2_ref[...],
                 preferred_element_type=jnp.float32)
    h2 = jnp.maximum(h2 + b2_ref[...], 0.0)
    # layer3: (1024 -> 1) as a lane reduction (avoids an N=1 MXU pass).
    out = jnp.sum(h2 * w3_ref[...].astype(jnp.float32), axis=-1, keepdims=True)
    o_ref[...] = (out + b3_ref[0, 0]).astype(o_ref.dtype)


def mlp_forward(x, w1, b1, w2, b2, w3, b3, *, block_b=512):
    """Fused forward pass.  x: (B, 48) float.  Returns (B, 1) float32.

    Weights may be f32 or bf16; they are cast to bf16 for the MXU with f32
    accumulation.  Batch is tiled into TB-row blocks; weights stay resident in
    VMEM across grid steps (constant index maps).
    """
    B, d_in = x.shape
    d_h = w1.shape[1]

    # Batch tile: multiple of 8 (sublane), capped at block_b, shrunk for tiny B.
    tb = min(block_b, max(8, ((B + 7) // 8) * 8))
    tb = ((tb + 7) // 8) * 8
    nb = pl.cdiv(B, tb)
    bp = nb * tb

    xb = x.astype(jnp.bfloat16)
    if bp != B:
        xb = jnp.pad(xb, ((0, bp - B), (0, 0)))

    w1b = w1.astype(jnp.bfloat16)
    w2b = w2.astype(jnp.bfloat16)
    w3_row = w3.reshape(1, d_h).astype(jnp.bfloat16)
    b1f = b1.reshape(1, d_h).astype(jnp.float32)
    b2f = b2.reshape(1, d_h).astype(jnp.float32)
    b3s = b3.reshape(1, 1).astype(jnp.float32)

    # Weights / biases: full block, constant index map -> fetched once, reused.
    const2 = lambda a: pl.BlockSpec(a.shape, lambda i: (0, 0))

    flops = 2 * bp * (d_in * d_h + d_h * d_h + d_h)
    bytes_accessed = (xb.size * 2 + w1b.size * 2 + w2b.size * 2
                      + w3_row.size * 2 + b1f.size * 4 + b2f.size * 4
                      + 4 + bp * 4)

    out = pl.pallas_call(
        _mlp_kernel,
        out_shape=jax.ShapeDtypeStruct((bp, 1), jnp.float32),
        grid_spec=pltpu.PrefetchScalarGridSpec(
            num_scalar_prefetch=0,
            grid=(nb,),
            in_specs=[
                pl.BlockSpec((tb, d_in), lambda i: (i, 0)),      # x batch tile
                const2(w1b), const2(b1f),
                const2(w2b), const2(b2f),
                const2(w3_row),
                pl.BlockSpec(memory_space=pltpu.MemorySpace.SMEM),  # b3 scalar
            ],
            out_specs=pl.BlockSpec((tb, 1), lambda i: (i, 0)),
        ),
        compiler_params=pltpu.CompilerParams(
            dimension_semantics=("parallel",),
            vmem_limit_bytes=32 << 20,
        ),
        cost_estimate=pl.CostEstimate(
            flops=flops, transcendentals=0, bytes_accessed=bytes_accessed),
    )(xb, w1b, b1f, w2b, b2f, w3_row, b3s)
    return out[:B]


def init_params(key, d_in=48, d_hidden=1024, d_out=1):
    """PyTorch-Linear-style init: U(-1/sqrt(fan_in), 1/sqrt(fan_in)).

    Weights stored (in, out) in bf16 (MXU-native); biases stored f32.
    """
    def linear(k, fan_in, fan_out):
        kw, kb = jax.random.split(k)
        bound = 1.0 / math.sqrt(fan_in)
        w = jax.random.uniform(kw, (fan_in, fan_out), jnp.float32, -bound, bound)
        b = jax.random.uniform(kb, (1, fan_out), jnp.float32, -bound, bound)
        return w.astype(jnp.bfloat16), b

    k1, k2, k3 = jax.random.split(key, 3)
    w1, b1 = linear(k1, d_in, d_hidden)
    w2, b2 = linear(k2, d_hidden, d_hidden)
    w3, b3 = linear(k3, d_hidden, d_out)
    return w1, b1, w2, b2, w3, b3


def model_forward(x_dict, params, *, block_b=512):
    """Mirrors Model.forward: reshape each field to (B, -1), concat, run MLP."""
    B = x_dict["DAY"].shape[0]
    r = lambda a: a.reshape(B, -1).astype(jnp.float32)
    inp = jnp.concatenate(
        [
            r(x_dict["DESTINATION__AIRPORT"]),
            r(x_dict["ORGIN_AIRPORT"]),
            r(x_dict["SCHEDULED_ARRIVAL"]),
            r(x_dict["AIRLINE"]),
            r(x_dict["TAIL_NUMBER"]),
            r(x_dict["DAY"]),
            r(x_dict["MONTH"]),
        ],
        axis=1,
    )
    assert inp.shape == (B, 48), inp.shape
    return mlp_forward(inp, *params, block_b=block_b)


def _reference(x, w1, b1, w2, b2, w3, b3):
    """Plain-JAX reference with identical bf16-weight / f32-accumulate math."""
    xb = x.astype(jnp.bfloat16)
    h1 = jnp.dot(xb, w1.astype(jnp.bfloat16),
                 preferred_element_type=jnp.float32) + b1.astype(jnp.float32)
    h1 = jnp.maximum(h1, 0.0)
    h2 = jnp.dot(h1.astype(jnp.bfloat16), w2.astype(jnp.bfloat16),
                 preferred_element_type=jnp.float32) + b2.astype(jnp.float32)
    h2 = jnp.maximum(h2, 0.0)
    out = jnp.dot(h2, w3.astype(jnp.float32),
                  preferred_element_type=jnp.float32) + b3.reshape(1, 1)
    return out


if __name__ == "__main__":
    key = jax.random.PRNGKey(0)
    kparam, kdata = jax.random.split(key)

    params = init_params(kparam)
    w1, b1, w2, b2, w3, b3 = params

    # Feature widths summing to 48 (the model's fixed input size).
    B = 8
    widths = {
        "DESTINATION__AIRPORT": 10,
        "ORGIN_AIRPORT": 10,
        "SCHEDULED_ARRIVAL": 10,
        "AIRLINE": 7,
        "TAIL_NUMBER": 9,
        "DAY": 1,
        "MONTH": 1,
    }
    keys = jax.random.split(kdata, len(widths))
    x_dict = {
        name: jax.random.normal(k, (B, w), jnp.float32)
        for k, (name, w) in zip(keys, widths.items())
    }

    # --- test 1: model_forward (single-tile path) ---
    out = model_forward(x_dict, params)
    out = jax.block_until_ready(out)
    assert out.shape == (B, 1) and out.dtype == jnp.float32

    inp = jnp.concatenate(
        [x_dict["DESTINATION__AIRPORT"], x_dict["ORGIN_AIRPORT"],
         x_dict["SCHEDULED_ARRIVAL"], x_dict["AIRLINE"],
         x_dict["TAIL_NUMBER"], x_dict["DAY"], x_dict["MONTH"]], axis=1)
    ref = _reference(inp, *params)
    assert jnp.allclose(out, ref, atol=2e-2, rtol=2e-2), (
        float(jnp.max(jnp.abs(out - ref))))

    # --- test 2: multi-step grid + batch padding path (B=20, TB=8 -> 3 steps) ---
    B2 = 20
    x2 = jax.random.normal(jax.random.PRNGKey(1), (B2, 48), jnp.float32)
    out2 = mlp_forward(x2, *params, block_b=8)
    out2 = jax.block_until_ready(out2)
    assert out2.shape == (B2, 1)
    ref2 = _reference(x2, *params)
    assert jnp.allclose(out2, ref2, atol=2e-2, rtol=2e-2), (
        float(jnp.max(jnp.abs(out2 - ref2))))

    print("KERNEL_OK")
</pallas_src>

<mosaic_0001>
module attributes {stable_mosaic.version = 11 : i64} {
  func.func @_mlp_kernel(%arg0: i32, %arg1: memref<8x48xbf16, #tpu.memory_space<vmem>>, %arg2: memref<48x1024xbf16, #tpu.memory_space<vmem>>, %arg3: memref<1x1024xf32, #tpu.memory_space<vmem>>, %arg4: memref<1024x1024xbf16, #tpu.memory_space<vmem>>, %arg5: memref<1x1024xf32, #tpu.memory_space<vmem>>, %arg6: memref<1x1024xbf16, #tpu.memory_space<vmem>>, %arg7: memref<1x1xf32, #tpu.memory_space<smem>>, %arg8: memref<8x1xf32, #tpu.memory_space<vmem>>) attributes {dimension_semantics = [#tpu.dimension_semantics<parallel>], iteration_bounds = array<i64: 1>, scalar_prefetch = 0 : i64, scratch_operands = 0 : i64, tpu.core_type = #tpu.core_type<tc>, window_params = [{transform_indices = @transform_0, window_bounds = array<i64: 8, 48>}, {pipeline_mode = #tpu.pipeline_mode<synchronous>, transform_indices = @transform_1, window_bounds = array<i64: 48, 1024>}, {pipeline_mode = #tpu.pipeline_mode<synchronous>, transform_indices = @transform_2, window_bounds = array<i64: 1, 1024>}, {pipeline_mode = #tpu.pipeline_mode<synchronous>, transform_indices = @transform_3, window_bounds = array<i64: 1024, 1024>}, {pipeline_mode = #tpu.pipeline_mode<synchronous>, transform_indices = @transform_4, window_bounds = array<i64: 1, 1024>}, {pipeline_mode = #tpu.pipeline_mode<synchronous>, transform_indices = @transform_5, window_bounds = array<i64: 1, 1024>}, {transform_indices = @transform_6, window_bounds = array<i64: 1, 1>}, {transform_indices = @transform_7, window_bounds = array<i64: 8, 1>}]} {
    %c0 = arith.constant 0 : index
    %c0_0 = arith.constant 0 : index
    %0 = vector.load %arg1[%c0, %c0_0] : memref<8x48xbf16, #tpu.memory_space<vmem>>, vector<8x48xbf16>
    %c0_1 = arith.constant 0 : index
    %c0_2 = arith.constant 0 : index
    %1 = vector.load %arg2[%c0_1, %c0_2] : memref<48x1024xbf16, #tpu.memory_space<vmem>>, vector<48x1024xbf16>
    %cst = arith.constant dense<0.000000e+00> : vector<8x1024xf32>
    %2 = tpu.matmul %0, %1, %cst {dimension_numbers = #tpu.dot_dimension_numbers<[1], [0], [0], [1], [0, 0, 1, 1], [], []>} : vector<8x48xbf16>, vector<48x1024xbf16>, vector<8x1024xf32> -> vector<8x1024xf32>
    %c0_3 = arith.constant 0 : index
    %c0_4 = arith.constant 0 : index
    %3 = vector.load %arg3[%c0_3, %c0_4] : memref<1x1024xf32, #tpu.memory_space<vmem>>, vector<1x1024xf32>
    %4 = vector.broadcast %3 : vector<1x1024xf32> to vector<8x1024xf32>
    %5 = arith.addf %2, %4 : vector<8x1024xf32>
    %cst_5 = arith.constant 0.000000e+00 : f32
    %6 = vector.broadcast %cst_5 : f32 to vector<8x1024xf32>
    %7 = arith.maximumf %5, %6 : vector<8x1024xf32>
    %8 = arith.truncf %7 : vector<8x1024xf32> to vector<8x1024xbf16>
    %c0_6 = arith.constant 0 : index
    %c0_7 = arith.constant 0 : index
    %9 = vector.load %arg4[%c0_6, %c0_7] : memref<1024x1024xbf16, #tpu.memory_space<vmem>>, vector<1024x1024xbf16>
    %cst_8 = arith.constant dense<0.000000e+00> : vector<8x1024xf32>
    %10 = tpu.matmul %8, %9, %cst_8 {dimension_numbers = #tpu.dot_dimension_numbers<[1], [0], [0], [1], [0, 0, 1, 1], [], []>} : vector<8x1024xbf16>, vector<1024x1024xbf16>, vector<8x1024xf32> -> vector<8x1024xf32>
    %c0_9 = arith.constant 0 : index
    %c0_10 = arith.constant 0 : index
    %11 = vector.load %arg5[%c0_9, %c0_10] : memref<1x1024xf32, #tpu.memory_space<vmem>>, vector<1x1024xf32>
    %12 = vector.broadcast %11 : vector<1x1024xf32> to vector<8x1024xf32>
    %13 = arith.addf %10, %12 : vector<8x1024xf32>
    %cst_11 = arith.constant 0.000000e+00 : f32
    %14 = vector.broadcast %cst_11 : f32 to vector<8x1024xf32>
    %15 = arith.maximumf %13, %14 : vector<8x1024xf32>
    %c0_12 = arith.constant 0 : index
    %c0_13 = arith.constant 0 : index
    %16 = vector.load %arg6[%c0_12, %c0_13] : memref<1x1024xbf16, #tpu.memory_space<vmem>>, vector<1x1024xbf16>
    %17 = arith.extf %16 : vector<1x1024xbf16> to vector<1x1024xf32>
    %18 = vector.broadcast %17 : vector<1x1024xf32> to vector<8x1024xf32>
    %19 = arith.mulf %15, %18 : vector<8x1024xf32>
    %cst_14 = arith.constant dense<0.000000e+00> : vector<8xf32>
    %20 = vector.multi_reduction <add>, %19, %cst_14 [1] : vector<8x1024xf32> to vector<8xf32>
    %21 = vector.shape_cast %20 : vector<8xf32> to vector<8x1xf32>
    %c0_15 = arith.constant 0 : index
    %c0_16 = arith.constant 0 : index
    %22 = memref.load %arg7[%c0_15, %c0_16] : memref<1x1xf32, #tpu.memory_space<smem>>
    %23 = vector.broadcast %22 : f32 to vector<8x1xf32>
    %24 = arith.addf %21, %23 : vector<8x1xf32>
    %c0_17 = arith.constant 0 : index
    %c0_18 = arith.constant 0 : index
    %25 = vector.load %arg8[%c0_17, %c0_18] : memref<8x1xf32, #tpu.memory_space<vmem>>, vector<8x1xf32>
    tpu.vector_store %arg8[%c0_17, %c0_18], %24 {strides = array<i32>} : memref<8x1xf32, #tpu.memory_space<vmem>>, vector<8x1xf32>,
    return
  }
  func.func @transform_0(%arg0: i32) -> (i32, i32) {
    %c0_i32 = arith.constant 0 : i32
    %c0_i32_0 = arith.constant 0 : i32
    return %arg0, %c0_i32 : i32, i32
  }
  func.func @transform_1(%arg0: i32) -> (i32, i32) {
    %c0_i32 = arith.constant 0 : i32
    %c0_i32_0 = arith.constant 0 : i32
    %c0_i32_1 = arith.constant 0 : i32
    return %c0_i32, %c0_i32_0 : i32, i32
  }
  func.func @transform_2(%arg0: i32) -> (i32, i32) {
    %c0_i32 = arith.constant 0 : i32
    %c0_i32_0 = arith.constant 0 : i32
    %c0_i32_1 = arith.constant 0 : i32
    return %c0_i32, %c0_i32_0 : i32, i32
  }
  func.func @transform_3(%arg0: i32) -> (i32, i32) {
    %c0_i32 = arith.constant 0 : i32
    %c0_i32_0 = arith.constant 0 : i32
    %c0_i32_1 = arith.constant 0 : i32
    return %c0_i32, %c0_i32_0 : i32, i32
  }
  func.func @transform_4(%arg0: i32) -> (i32, i32) {
    %c0_i32 = arith.constant 0 : i32
    %c0_i32_0 = arith.constant 0 : i32
    %c0_i32_1 = arith.constant 0 : i32
    return %c0_i32, %c0_i32_0 : i32, i32
  }
  func.func @transform_5(%arg0: i32) -> (i32, i32) {
    %c0_i32 = arith.constant 0 : i32
    %c0_i32_0 = arith.constant 0 : i32
    %c0_i32_1 = arith.constant 0 : i32
    return %c0_i32, %c0_i32_0 : i32, i32
  }
  func.func @transform_6(%arg0: i32) -> (i32, i32) {
    %c0_i32 = arith.constant 0 : i32
    %c0_i32_0 = arith.constant 0 : i32
    %c0_i32_1 = arith.constant 0 : i32
    return %c0_i32, %c0_i32_0 : i32, i32
  }
  func.func @transform_7(%arg0: i32) -> (i32, i32) {
    %c0_i32 = arith.constant 0 : i32
    %c0_i32_0 = arith.constant 0 : i32
    return %arg0, %c0_i32 : i32, i32
  }
}

</mosaic_0001>

<llo_original>
// kernel: tpu_custom_call.1
$region0: #{tpu_custom_call.1}
  #allocation0 [shape = 'u32[]', space=smem, size = 0x4, offset = 0x4, fixed_abs, tag = 'smem constant byte address 0x4 - core index']
  #allocation1 [shape = 'u32[144,128]{1,0:T(1,128)}', space=vmem, size = 0x12000, scoped, tag = 'internal scratch']
  #allocation2 [shape = 'f32[1,1]{1,0:T(1,128)S(6)}', space=smem, size = 0x200, scoped, tag = 'scoped memory for tpu_custom_call.1']
  %s0 = inlined_call_operand.hbm [shape: bf16[8,48], index: 0, kind: input, shape index: {}]
  %s1 = inlined_call_operand.hbm [shape: bf16[48,1024], index: 1, kind: input, shape index: {}]
  %s2 = inlined_call_operand.hbm [shape: f32[1,1024], index: 2, kind: input, shape index: {}]
  %s3 = inlined_call_operand.hbm [shape: bf16[1024,1024], index: 3, kind: input, shape index: {}]
  %s4 = inlined_call_operand.hbm [shape: f32[1,1024], index: 4, kind: input, shape index: {}]
  %s5 = inlined_call_operand.hbm [shape: bf16[1,1024], index: 5, kind: input, shape index: {}]
  %s6 = inlined_call_operand.<no memory space> [shape: f32[1,1], index: 6, kind: input, shape index: {}]
  %s7 = inlined_call_operand.vmem [shape: f32[8,1], index: 7, kind: output, shape index: {}]
  %s8 = sld [smem:[#allocation0]]
  $region62: #{tpu_custom_call.1} parent=0
    _
  %s10 = ssub.s32 1, %s8
  %s11 = scalar_select 0, %s10, %s8
  %12 = sst [smem:[#allocation2]] %s6
  $region1: #{tpu_custom_call.1} parent=0
    #allocation3 [shape = 'u8[2048]{0}', space=vmem, size = 0x800, scoped, tag = 'input window, operand 0, single buffered']
    #allocation4 [shape = 's32[1]{0}', space=sflag, size = 0x4, scoped, tag = 'scoped memory for tpu_custom_call.1']
    #allocation5 [shape = 'u8[98304]{0}', space=vmem, size = 0x18000, scoped, tag = 'input window, operand 1, single buffered']
    #allocation6 [shape = 's32[1]{0}', space=sflag, size = 0x4, scoped, tag = 'scoped memory for tpu_custom_call.1']
    #allocation7 [shape = 'u8[4096]{0}', space=vmem, size = 0x1000, scoped, tag = 'input window, operand 2, single buffered']
    #allocation8 [shape = 'u8[2097152]{0}', space=vmem, size = 0x200000, scoped, tag = 'input window, operand 3, single buffered']
    #allocation9 [shape = 's32[1]{0}', space=sflag, size = 0x4, scoped, tag = 'scoped memory for tpu_custom_call.1']
    #allocation10 [shape = 'u8[4096]{0}', space=vmem, size = 0x1000, scoped, tag = 'input window, operand 4, single buffered']
    #allocation11 [shape = 'u8[4096]{0}', space=vmem, size = 0x1000, scoped, tag = 'input window, operand 5, single buffered']
    #allocation12 [shape = 's32[1]{0}', space=sflag, size = 0x4, scoped, tag = 'scoped memory for tpu_custom_call.1']
    %13 = vsyncpa [#allocation4], 0
    %14 = vsyncpa [#allocation6], 0
    %15 = vsyncpa [#allocation9], 0
    %16 = vsyncpa [#allocation12], 0
    // Predicated region
    $region2: #{tpu_custom_call.1} parent=1 // pred_check
      _
    $region3: #{tpu_custom_call.1} parent=1 // pred_check_branch
      %18 = sbr.rel (0) target = $region5
    $region4: #{tpu_custom_call.1} parent=1 // pred_region
      %s20 = ssub.s32 64, 64
      %21 = vsyncadd [#allocation4], %s20
      %s23 = sshll.u32 [#allocation3], 4
      %s24 = int_to_ptr.vmem [resolvable:$true] %s23
      %26 = dma.hbm_to_vmem [thread:$0]  %s0, 64, %s24, [#allocation4]
    $region5: #{tpu_custom_call.1} parent=1 // pred_fallthru
      _
    // Predicated region
    $region6: #{tpu_custom_call.1} parent=1 // pred_check
      _
    $region7: #{tpu_custom_call.1} parent=1 // pred_check_branch
      %28 = sbr.rel (0) target = $region9
    $region8: #{tpu_custom_call.1} parent=1 // pred_region
      %s30 = ssub.s32 3072, 3072
      %31 = vsyncadd [#allocation6], %s30
      %s32 = sshll.u32 [#allocation5], 4
      %s33 = int_to_ptr.vmem [resolvable:$true] %s32
      %38 = dma.hbm_to_vmem [thread:$0]  %s1, 3072, %s33, [#allocation6], 512, 512, 32
    $region9: #{tpu_custom_call.1} parent=1 // pred_fallthru
      _
    // Predicated region
    $region10: #{tpu_custom_call.1} parent=1 // pred_check
      _
    $region11: #{tpu_custom_call.1} parent=1 // pred_check_branch
      %40 = sbr.rel (0) target = $region13
    $region12: #{tpu_custom_call.1} parent=1 // pred_region
      %s42 = ssub.s32 128, 128
      %43 = vsyncadd [#allocation6], %s42
      %s45 = sshll.u32 [#allocation7], 4
      %s46 = int_to_ptr.vmem [resolvable:$true] %s45
      %48 = dma.hbm_to_vmem [thread:$0]  %s2, 128, %s46, [#allocation6]
    $region13: #{tpu_custom_call.1} parent=1 // pred_fallthru
      _
    // Predicated region
    $region14: #{tpu_custom_call.1} parent=1 // pred_check
      _
    $region15: #{tpu_custom_call.1} parent=1 // pred_check_branch
      %50 = sbr.rel (0) target = $region17
    $region16: #{tpu_custom_call.1} parent=1 // pred_region
      %s52 = ssub.s32 65536, 65536
      %53 = vsyncadd [#allocation9], %s52
      %s54 = sshll.u32 [#allocation8], 4
      %s55 = int_to_ptr.vmem [resolvable:$true] %s54
      %60 = dma.hbm_to_vmem [thread:$0]  %s3, 65536, %s55, [#allocation9], 512, 512, 32
    $region17: #{tpu_custom_call.1} parent=1 // pred_fallthru
      _
    // Predicated region
    $region18: #{tpu_custom_call.1} parent=1 // pred_check
      _
    $region19: #{tpu_custom_call.1} parent=1 // pred_check_branch
      %62 = sbr.rel (0) target = $region21
    $region20: #{tpu_custom_call.1} parent=1 // pred_region
      %s64 = ssub.s32 128, 128
      %65 = vsyncadd [#allocation9], %s64
      %s67 = sshll.u32 [#allocation10], 4
      %s68 = int_to_ptr.vmem [resolvable:$true] %s67
      %70 = dma.hbm_to_vmem [thread:$0]  %s4, 128, %s68, [#allocation9]
    $region21: #{tpu_custom_call.1} parent=1 // pred_fallthru
      _
    // Predicated region
    $region22: #{tpu_custom_call.1} parent=1 // pred_check
      _
    $region23: #{tpu_custom_call.1} parent=1 // pred_check_branch
      %72 = sbr.rel (0) target = $region25
    $region24: #{tpu_custom_call.1} parent=1 // pred_region
      %s74 = ssub.s32 128, 128
      %75 = vsyncadd [#allocation12], %s74
      %s77 = sshll.u32 [#allocation11], 4
      %s78 = int_to_ptr.vmem [resolvable:$true] %s77
      %80 = dma.hbm_to_vmem [thread:$0]  %s5, 128, %s78, [#allocation12]
    $region25: #{tpu_custom_call.1} parent=1 // pred_fallthru
      _
    // Predicated region
    $region26: #{tpu_custom_call.1} parent=1 // pred_check
      _
    $region27: #{tpu_custom_call.1} parent=1 // pred_check_branch
      %82 = sbr.rel (0) target = $region29
    $region28: #{tpu_custom_call.1} parent=1 // pred_region
      _
    $region29: #{tpu_custom_call.1} parent=1 // pred_fallthru
      _
    // Predicated region
    $region30: #{tpu_custom_call.1} parent=1 // pred_check
      _
    $region31: #{tpu_custom_call.1} parent=1 // pred_check_branch
      %84 = sbr.rel (0) target = $region33
    $region32: #{tpu_custom_call.1} parent=1 // pred_region
      %85 = dma.done [#allocation4], 64
    $region33: #{tpu_custom_call.1} parent=1 // pred_fallthru
      _
    // Predicated region
    $region34: #{tpu_custom_call.1} parent=1 // pred_check
      _
    $region35: #{tpu_custom_call.1} parent=1 // pred_check_branch
      %87 = sbr.rel (0) target = $region37
    $region36: #{tpu_custom_call.1} parent=1 // pred_region
      %88 = dma.done [#allocation6], 3072
    $region37: #{tpu_custom_call.1} parent=1 // pred_fallthru
      _
    // Predicated region
    $region38: #{tpu_custom_call.1} parent=1 // pred_check
      _
    $region39: #{tpu_custom_call.1} parent=1 // pred_check_branch
      %90 = sbr.rel (0) target = $region41
    $region40: #{tpu_custom_call.1} parent=1 // pred_region
      %91 = dma.done [#allocation6], 128
    $region41: #{tpu_custom_call.1} parent=1 // pred_fallthru
      _
    // Predicated region
    $region42: #{tpu_custom_call.1} parent=1 // pred_check
      _
    $region43: #{tpu_custom_call.1} parent=1 // pred_check_branch
      %93 = sbr.rel (0) target = $region45
    $region44: #{tpu_custom_call.1} parent=1 // pred_region
      %94 = dma.done [#allocation9], 65536
    $region45: #{tpu_custom_call.1} parent=1 // pred_fallthru
      _
    // Predicated region
    $region46: #{tpu_custom_call.1} parent=1 // pred_check
      _
    $region47: #{tpu_custom_call.1} parent=1 // pred_check_branch
      %96 = sbr.rel (0) target = $region49
    $region48: #{tpu_custom_call.1} parent=1 // pred_region
      %97 = dma.done [#allocation9], 128
    $region49: #{tpu_custom_call.1} parent=1 // pred_fallthru
      _
    // Predicated region
    $region50: #{tpu_custom_call.1} parent=1 // pred_check
      _
    $region51: #{tpu_custom_call.1} parent=1 // pred_check_branch
      %99 = sbr.rel (0) target = $region53
    $region52: #{tpu_custom_call.1} parent=1 // pred_region
      %100 = dma.done [#allocation12], 128
    $region53: #{tpu_custom_call.1} parent=1 // pred_fallthru
      _
    %v102 = vld [vmem:[#allocation3] sm:$0xf]
    %v103 = vld [vmem:[#allocation5] sm:$0xff]
    %v104 = vld [vmem:[#allocation5 + $0x8] sm:$0xff]
    %v105 = vld [vmem:[#allocation5 + $0x10] sm:$0xff]
    %v106 = vld [vmem:[#allocation5 + $0x18] sm:$0xff]
    %v107 = vld [vmem:[#allocation5 + $0x20] sm:$0xff]
    %v108 = vld [vmem:[#allocation5 + $0x28] sm:$0xff]
    %v109 = vld [vmem:[#allocation5 + $0x30] sm:$0xff]
    %v110 = vld [vmem:[#allocation5 + $0x38] sm:$0xff]
    %v111 = vld [vmem:[#allocation5 + $0x40] sm:$0xff]
    %v112 = vld [vmem:[#allocation5 + $0x48] sm:$0xff]
    %v113 = vld [vmem:[#allocation5 + $0x50] sm:$0xff]
    %v114 = vld [vmem:[#allocation5 + $0x58] sm:$0xff]
    %v115 = vld [vmem:[#allocation5 + $0x60] sm:$0xff]
    %v116 = vld [vmem:[#allocation5 + $0x68] sm:$0xff]
    %v117 = vld [vmem:[#allocation5 + $0x70] sm:$0xff]
    %v118 = vld [vmem:[#allocation5 + $0x78] sm:$0xff]
    %v119 = vld [vmem:[#allocation5 + $0x80] sm:$0xff]
    %v120 = vld [vmem:[#allocation5 + $0x88] sm:$0xff]
    %v121 = vld [vmem:[#allocation5 + $0x90] sm:$0xff]
    %v122 = vld [vmem:[#allocation5 + $0x98] sm:$0xff]
    %v123 = vld [vmem:[#allocation5 + $0xa0] sm:$0xff]
    %v124 = vld [vmem:[#allocation5 + $0xa8] sm:$0xff]
    %v125 = vld [vmem:[#allocation5 + $0xb0] sm:$0xff]
    %v126 = vld [vmem:[#allocation5 + $0xb8] sm:$0xff]
    %v127 = vld [vmem:[#allocation7] sm:$0xff]
    %v129 = vlaneseq
    %v130 = vshrl.u32 %v129, 7
    %v131 = vsub.s32 0, %v130
    %v132 = vrot.slane %v127, %v131
    %v133 = vlaneseq
    %v134 = vshrl.u32 %v133, 7
    %v135 = vsub.s32 1, %v134
    %v136 = vrot.slane %v127, %v135
    %v137 = vlaneseq
    %v138 = vshrl.u32 %v137, 7
    %v139 = vsub.s32 2, %v138
    %v140 = vrot.slane %v127, %v139
    %v141 = vlaneseq
    %v142 = vshrl.u32 %v141, 7
    %v143 = vsub.s32 3, %v142
    %v144 = vrot.slane %v127, %v143
    %v145 = vlaneseq
    %v146 = vshrl.u32 %v145, 7
    %v147 = vsub.s32 4, %v146
    %v148 = vrot.slane %v127, %v147
    %v149 = vlaneseq
    %v150 = vshrl.u32 %v149, 7
    %v151 = vsub.s32 5, %v150
    %v152 = vrot.slane %v127, %v151
    %v153 = vlaneseq
    %v154 = vshrl.u32 %v153, 7
    %v155 = vsub.s32 6, %v154
    %v156 = vrot.slane %v127, %v155
    %v157 = vlaneseq
    %v158 = vshrl.u32 %v157, 7
    %v159 = vsub.s32 7, %v158
    %v160 = vrot.slane %v127, %v159
    %v193 = vunpack.c.l.b16 %v103
    %v194 = vunpack.c.h.b16 %v103
    %v195 = vunpack.c.l.b16 %v104
    %v196 = vunpack.c.h.b16 %v104
    %v197 = vunpack.c.l.b16 %v105
    %v198 = vunpack.c.h.b16 %v105
    %v199 = vunpack.c.l.b16 %v106
    %v200 = vunpack.c.h.b16 %v106
    %v201 = vunpack.c.l.b16 %v107
    %v202 = vunpack.c.h.b16 %v107
    %v203 = vunpack.c.l.b16 %v108
    %v204 = vunpack.c.h.b16 %v108
    %v205 = vunpack.c.l.b16 %v109
    %v206 = vunpack.c.h.b16 %v109
    %v207 = vunpack.c.l.b16 %v110
    %v208 = vunpack.c.h.b16 %v110
    %v209 = vunpack.c.l.b16 %v111
    %v210 = vunpack.c.h.b16 %v111
    %v211 = vunpack.c.l.b16 %v112
    %v212 = vunpack.c.h.b16 %v112
    %v213 = vunpack.c.l.b16 %v113
    %v214 = vunpack.c.h.b16 %v113
    %v215 = vunpack.c.l.b16 %v114
    %v216 = vunpack.c.h.b16 %v114
    %v217 = vunpack.c.l.b16 %v115
    %v218 = vunpack.c.h.b16 %v115
    %v219 = vunpack.c.l.b16 %v116
    %v220 = vunpack.c.h.b16 %v116
    %v221 = vunpack.c.l.b16 %v117
    %v222 = vunpack.c.h.b16 %v117
    %v223 = vunpack.c.l.b16 %v118
    %v224 = vunpack.c.h.b16 %v118
    %v225 = vunpack.c.l.b16 %v119
    %v226 = vunpack.c.h.b16 %v119
    %v227 = vunpack.c.l.b16 %v120
    %v228 = vunpack.c.h.b16 %v120
    %v229 = vunpack.c.l.b16 %v121
    %v230 = vunpack.c.h.b16 %v121
    %v231 = vunpack.c.l.b16 %v122
    %v232 = vunpack.c.h.b16 %v122
    %v233 = vunpack.c.l.b16 %v123
    %v234 = vunpack.c.h.b16 %v123
    %v235 = vunpack.c.l.b16 %v124
    %v236 = vunpack.c.h.b16 %v124
    %v237 = vunpack.c.l.b16 %v125
    %v238 = vunpack.c.h.b16 %v125
    %v239 = vunpack.c.l.b16 %v126
    %v240 = vunpack.c.h.b16 %v126
    %v241 = vpack.c.b16 %v201, %v193
    %v242 = vpack.c.b16 %v202, %v194
    %v243 = vpack.c.b16 %v203, %v195
    %v244 = vpack.c.b16 %v204, %v196
    %v245 = vpack.c.b16 %v205, %v197
    %v246 = vpack.c.b16 %v206, %v198
    %v247 = vpack.c.b16 %v207, %v199
    %v248 = vpack.c.b16 %v208, %v200
    %v249 = vpack.c.b16 %v217, %v209
    %v250 = vpack.c.b16 %v218, %v210
    %v251 = vpack.c.b16 %v219, %v211
    %v252 = vpack.c.b16 %v220, %v212
    %v253 = vpack.c.b16 %v221, %v213
    %v254 = vpack.c.b16 %v222, %v214
    %v255 = vpack.c.b16 %v223, %v215
    %v256 = vpack.c.b16 %v224, %v216
    %v257 = vpack.c.b16 %v233, %v225
    %v258 = vpack.c.b16 %v234, %v226
    %v259 = vpack.c.b16 %v235, %v227
    %v260 = vpack.c.b16 %v236, %v228
    %v261 = vpack.c.b16 %v237, %v229
    %v262 = vpack.c.b16 %v238, %v230
    %v263 = vpack.c.b16 %v239, %v231
    %v264 = vpack.c.b16 %v240, %v232
    %vm289 = vcmask 392192
    %v291 = vsel %vm289, %v102, 0
    %293 = vmatprep.subr.bf16.mxu0 0
    %294 = vmatpush1.bf16.msra.mxu0 0
    %295 = vmatprep.subr.bf16.mxu0 0
    %296 = vmatpush1.bf16.msra.mxu0 0
    %297 = vmatprep.subr.bf16.mxu0 0
    %298 = vmatpush1.bf16.msra.mxu0 0
    %299 = vmatprep.subr.bf16.mxu0 0
    %300 = vmatpush1.bf16.msra.mxu0 0
    %301 = vmatprep.subr.bf16.mxu0 0
    %302 = vmatpush1.bf16.msra.mxu0 0
    %303 = vmatprep.subr.bf16.mxu0 %v258
    %304 = vmatpush1.bf16.msra.mxu0 %v257
    %305 = vmatprep.subr.bf16.mxu0 %v250
    %306 = vmatpush1.bf16.msra.mxu0 %v249
    %307 = vmatprep.subr.bf16.mxu0 %v242
    %308 = vmatpush1.bf16.msra.mxu0 %v241
    %309 = vmatprep.subr.bf16.mxu0 0
    %310 = vmatpush2.bf16.msra.mxu0 0
    %311 = vmatprep.subr.bf16.mxu0 0
    %312 = vmatpush2.bf16.msra.mxu0 0
    %313 = vmatprep.subr.bf16.mxu0 0
    %314 = vmatpush2.bf16.msra.mxu0 0
    %315 = vmatprep.subr.bf16.mxu0 0
    %316 = vmatpush2.bf16.msra.mxu0 0
    %317 = vmatprep.subr.bf16.mxu0 0
    %318 = vmatpush2.bf16.msra.mxu0 0
    %319 = vmatprep.subr.bf16.mxu0 0
    %320 = vmatpush2.bf16.msra.mxu0 0
    %321 = vmatprep.subr.bf16.mxu0 0
    %322 = vmatpush2.bf16.msra.mxu0 0
    %323 = vmatprep.subr.bf16.mxu0 0
    %324 = vmatpush2.bf16.msra.mxu0 0
    %325 = vmatprep.mubr.bf16.mxu0 0
    %326 = vmatmul.mubr.bf16.gmra.mxu0 %v291
    %v327 = vpop.f32.mrf.mxu0
    %v328 = vadd.f32 %v132, %v327
    %v329 = vpop.f32.mrf.mxu0
    %v330 = vadd.f32 %v136, %v329
    %v331 = vpop.f32.mrf.mxu0
    %v332 = vpop.f32.mrf.mxu0
    %333 = vdwg.mxu0
    %334 = vmatprep.subr.bf16.mxu0 0
    %335 = vmatpush1.bf16.msra.mxu0 0
    %336 = vmatprep.subr.bf16.mxu0 0
    %337 = vmatpush1.bf16.msra.mxu0 0
    %338 = vmatprep.subr.bf16.mxu0 0
    %339 = vmatpush1.bf16.msra.mxu0 0
    %340 = vmatprep.subr.bf16.mxu0 0
    %341 = vmatpush1.bf16.msra.mxu0 0
    %342 = vmatprep.subr.bf16.mxu0 0
    %343 = vmatpush1.bf16.msra.mxu0 0
    %344 = vmatprep.subr.bf16.mxu0 %v260
    %345 = vmatpush1.bf16.msra.mxu0 %v259
    %346 = vmatprep.subr.bf16.mxu0 %v252
    %347 = vmatpush1.bf16.msra.mxu0 %v251
    %348 = vmatprep.subr.bf16.mxu0 %v244
    %349 = vmatpush1.bf16.msra.mxu0 %v243
    %350 = vmatprep.subr.bf16.mxu0 0
    %351 = vmatpush2.bf16.msra.mxu0 0
    %352 = vmatprep.subr.bf16.mxu0 0
    %353 = vmatpush2.bf16.msra.mxu0 0
    %354 = vmatprep.subr.bf16.mxu0 0
    %355 = vmatpush2.bf16.msra.mxu0 0
    %356 = vmatprep.subr.bf16.mxu0 0
    %357 = vmatpush2.bf16.msra.mxu0 0
    %358 = vmatprep.subr.bf16.mxu0 0
    %359 = vmatpush2.bf16.msra.mxu0 0
    %360 = vmatprep.subr.bf16.mxu0 0
    %361 = vmatpush2.bf16.msra.mxu0 0
    %362 = vmatprep.subr.bf16.mxu0 0
    %363 = vmatpush2.bf16.msra.mxu0 0
    %364 = vmatprep.subr.bf16.mxu0 0
    %365 = vmatpush2.bf16.msra.mxu0 0
    %366 = vmatprep.mubr.bf16.mxu0 0
    %367 = vmatmul.mubr.bf16.gmra.mxu0 %v291
    %v368 = vpop.f32.mrf.mxu0
    %v369 = vadd.f32 %v140, %v368
    %v370 = vpop.f32.mrf.mxu0
    %v371 = vadd.f32 %v144, %v370
    %v372 = vpop.f32.mrf.mxu0
    %v373 = vpop.f32.mrf.mxu0
    %374 = vdwg.mxu0
    %375 = vmatprep.subr.bf16.mxu0 0
    %376 = vmatpush1.bf16.msra.mxu0 0
    %377 = vmatprep.subr.bf16.mxu0 0
    %378 = vmatpush1.bf16.msra.mxu0 0
    %379 = vmatprep.subr.bf16.mxu0 0
    %380 = vmatpush1.bf16.msra.mxu0 0
    %381 = vmatprep.subr.bf16.mxu0 0
    %382 = vmatpush1.bf16.msra.mxu0 0
    %383 = vmatprep.subr.bf16.mxu0 0
    %384 = vmatpush1.bf16.msra.mxu0 0
    %385 = vmatprep.subr.bf16.mxu0 %v262
    %386 = vmatpush1.bf16.msra.mxu0 %v261
    %387 = vmatprep.subr.bf16.mxu0 %v254
    %388 = vmatpush1.bf16.msra.mxu0 %v253
    %389 = vmatprep.subr.bf16.mxu0 %v246
    %390 = vmatpush1.bf16.msra.mxu0 %v245
    %391 = vmatprep.subr.bf16.mxu0 0
    %392 = vmatpush2.bf16.msra.mxu0 0
    %393 = vmatprep.subr.bf16.mxu0 0
    %394 = vmatpush2.bf16.msra.mxu0 0
    %395 = vmatprep.subr.bf16.mxu0 0
    %396 = vmatpush2.bf16.msra.mxu0 0
    %397 = vmatprep.subr.bf16.mxu0 0
    %398 = vmatpush2.bf16.msra.mxu0 0
    %399 = vmatprep.subr.bf16.mxu0 0
    %400 = vmatpush2.bf16.msra.mxu0 0
    %401 = vmatprep.subr.bf16.mxu0 0
    %402 = vmatpush2.bf16.msra.mxu0 0
    %403 = vmatprep.subr.bf16.mxu0 0
    %404 = vmatpush2.bf16.msra.mxu0 0
    %405 = vmatprep.subr.bf16.mxu0 0
    %406 = vmatpush2.bf16.msra.mxu0 0
    %407 = vmatprep.mubr.bf16.mxu0 0
    %408 = vmatmul.mubr.bf16.gmra.mxu0 %v291
    %v409 = vpop.f32.mrf.mxu0
    %v410 = vadd.f32 %v148, %v409
    %v411 = vpop.f32.mrf.mxu0
    %v412 = vadd.f32 %v152, %v411
    %v413 = vpop.f32.mrf.mxu0
    %v414 = vpop.f32.mrf.mxu0
    %415 = vdwg.mxu0
    %416 = vmatprep.subr.bf16.mxu0 0
    %417 = vmatpush1.bf16.msra.mxu0 0
    %418 = vmatprep.subr.bf16.mxu0 0
    %419 = vmatpush1.bf16.msra.mxu0 0
    %420 = vmatprep.subr.bf16.mxu0 0
    %421 = vmatpush1.bf16.msra.mxu0 0
    %422 = vmatprep.subr.bf16.mxu0 0
    %423 = vmatpush1.bf16.msra.mxu0 0
    %424 = vmatprep.subr.bf16.mxu0 0
    %425 = vmatpush1.bf16.msra.mxu0 0
    %426 = vmatprep.subr.bf16.mxu0 %v264
    %427 = vmatpush1.bf16.msra.mxu0 %v263
    %428 = vmatprep.subr.bf16.mxu0 %v256
    %429 = vmatpush1.bf16.msra.mxu0 %v255
    %430 = vmatprep.subr.bf16.mxu0 %v248
    %431 = vmatpush1.bf16.msra.mxu0 %v247
    %432 = vmatprep.subr.bf16.mxu0 0
    %433 = vmatpush2.bf16.msra.mxu0 0
    %434 = vmatprep.subr.bf16.mxu0 0
    %435 = vmatpush2.bf16.msra.mxu0 0
    %436 = vmatprep.subr.bf16.mxu0 0
    %437 = vmatpush2.bf16.msra.mxu0 0
    %438 = vmatprep.subr.bf16.mxu0 0
    %439 = vmatpush2.bf16.msra.mxu0 0
    %440 = vmatprep.subr.bf16.mxu0 0
    %441 = vmatpush2.bf16.msra.mxu0 0
    %442 = vmatprep.subr.bf16.mxu0 0
    %443 = vmatpush2.bf16.msra.mxu0 0
    %444 = vmatprep.subr.bf16.mxu0 0
    %445 = vmatpush2.bf16.msra.mxu0 0
    %446 = vmatprep.subr.bf16.mxu0 0
    %447 = vmatpush2.bf16.msra.mxu0 0
    %448 = vmatprep.mubr.bf16.mxu0 0
    %449 = vmatmul.mubr.bf16.gmra.mxu0 %v291
    %v450 = vpop.f32.mrf.mxu0
    %v451 = vadd.f32 %v156, %v450
    %v452 = vpop.f32.mrf.mxu0
    %v453 = vadd.f32 %v160, %v452
    %v454 = vpop.f32.mrf.mxu0
    %v455 = vpop.f32.mrf.mxu0
    %456 = vdwg.mxu0
    %v457 = vmax.f32 %v328, 0.0
    %v458 = vmax.f32 %v330, 0.0
    %v459 = vmax.f32 %v369, 0.0
    %v460 = vmax.f32 %v371, 0.0
    %v461 = vmax.f32 %v410, 0.0
    %v462 = vmax.f32 %v412, 0.0
    %v463 = vmax.f32 %v451, 0.0
    %v464 = vmax.f32 %v453, 0.0
    %v465 = vpack.c.bf16 %v457, %v457
    %v466 = vpack.c.bf16 %v458, %v458
    %v467 = vpack.c.bf16 %v459, %v459
    %v468 = vpack.c.bf16 %v460, %v460
    %v469 = vpack.c.bf16 %v461, %v461
    %v470 = vpack.c.bf16 %v462, %v462
    %v471 = vpack.c.bf16 %v463, %v463
    %v472 = vpack.c.bf16 %v464, %v464
    %v473 = vld [vmem:[#allocation8] sm:$0xff]
    %v474 = vld [vmem:[#allocation8 + $0x8] sm:$0xff]
    %v475 = vld [vmem:[#allocation8 + $0x10] sm:$0xff]
    %v476 = vld [vmem:[#allocation8 + $0x18] sm:$0xff]
    %v477 = vld [vmem:[#allocation8 + $0x20] sm:$0xff]
    %v478 = vld [vmem:[#allocation8 + $0x28] sm:$0xff]
    %v479 = vld [vmem:[#allocation8 + $0x30] sm:$0xff]
    %v480 = vld [vmem:[#allocation8 + $0x38] sm:$0xff]
    %v481 = vld [vmem:[#allocation8 + $0x40] sm:$0xff]
    %v482 = vld [vmem:[#allocation8 + $0x48] sm:$0xff]
    %v483 = vld [vmem:[#allocation8 + $0x50] sm:$0xff]
    %v484 = vld [vmem:[#allocation8 + $0x58] sm:$0xff]
    %v485 = vld [vmem:[#allocation8 + $0x60] sm:$0xff]
    %v486 = vld [vmem:[#allocation8 + $0x68] sm:$0xff]
    %v487 = vld [vmem:[#allocation8 + $0x70] sm:$0xff]
    %v488 = vld [vmem:[#allocation8 + $0x78] sm:$0xff]
    %v489 = vld [vmem:[#allocation8 + $0x80] sm:$0xff]
    %v490 = vld [vmem:[#allocation8 + $0x88] sm:$0xff]
    %v491 = vld [vmem:[#allocation8 + $0x90] sm:$0xff]
    %v492 = vld [vmem:[#allocation8 + $0x98] sm:$0xff]
    %v493 = vld [vmem:[#allocation8 + $0xa0] sm:$0xff]
    %v494 = vld [vmem:[#allocation8 + $0xa8] sm:$0xff]
    %v495 = vld [vmem:[#allocation8 + $0xb0] sm:$0xff]
    %v496 = vld [vmem:[#allocation8 + $0xb8] sm:$0xff]
    %v497 = vld [vmem:[#allocation8 + $0xc0] sm:$0xff]
    %v498 = vld [vmem:[#allocation8 + $0xc8] sm:$0xff]
    %v499 = vld [vmem:[#allocation8 + $0xd0] sm:$0xff]
    %v500 = vld [vmem:[#allocation8 + $0xd8] sm:$0xff]
    %v501 = vld [vmem:[#allocation8 + $0xe0] sm:$0xff]
    %v502 = vld [vmem:[#allocation8 + $0xe8] sm:$0xff]
    %v503 = vld [vmem:[#allocation8 + $0xf0] sm:$0xff]
    %v504 = vld [vmem:[#allocation8 + $0xf8] sm:$0xff]
    %v505 = vld [vmem:[#allocation8 + $0x100] sm:$0xff]
    %v506 = vld [vmem:[#allocation8 + $0x108] sm:$0xff]
    %v507 = vld [vmem:[#allocation8 + $0x110] sm:$0xff]
    %v508 = vld [vmem:[#allocation8 + $0x118] sm:$0xff]
    %v509 = vld [vmem:[#allocation8 + $0x120] sm:$0xff]
    %v510 = vld [vmem:[#allocation8 + $0x128] sm:$0xff]
    %v511 = vld [vmem:[#allocation8 + $0x130] sm:$0xff]
    %v512 = vld [vmem:[#allocation8 + $0x138] sm:$0xff]
    %v513 = vld [vmem:[#allocation8 + $0x140] sm:$0xff]
    %v514 = vld [vmem:[#allocation8 + $0x148] sm:$0xff]
    %v515 = vld [vmem:[#allocation8 + $0x150] sm:$0xff]
    %v516 = vld [vmem:[#allocation8 + $0x158] sm:$0xff]
    %v517 = vld [vmem:[#allocation8 + $0x160] sm:$0xff]
    %v518 = vld [vmem:[#allocation8 + $0x168] sm:$0xff]
    %v519 = vld [vmem:[#allocation8 + $0x170] sm:$0xff]
    %v520 = vld [vmem:[#allocation8 + $0x178] sm:$0xff]
    %v521 = vld [vmem:[#allocation8 + $0x180] sm:$0xff]
    %v522 = vld [vmem:[#allocation8 + $0x188] sm:$0xff]
    %v523 = vld [vmem:[#allocation8 + $0x190] sm:$0xff]
    %v524 = vld [vmem:[#allocation8 + $0x198] sm:$0xff]
    %v525 = vld [vmem:[#allocation8 + $0x1a0] sm:$0xff]
    %v526 = vld [vmem:[#allocation8 + $0x1a8] sm:$0xff]
    %v527 = vld [vmem:[#allocation8 + $0x1b0] sm:$0xff]
    %v528 = vld [vmem:[#allocation8 + $0x1b8] sm:$0xff]
    %v529 = vld [vmem:[#allocation8 + $0x1c0] sm:$0xff]
    %v530 = vld [vmem:[#allocation8 + $0x1c8] sm:$0xff]
    %v531 = vld [vmem:[#allocation8 + $0x1d0] sm:$0xff]
    %v532 = vld [vmem:[#allocation8 + $0x1d8] sm:$0xff]
    %v533 = vld [vmem:[#allocation8 + $0x1e0] sm:$0xff]
    %v534 = vld [vmem:[#allocation8 + $0x1e8] sm:$0xff]
    %v535 = vld [vmem:[#allocation8 + $0x1f0] sm:$0xff]
    %v536 = vld [vmem:[#allocation8 + $0x1f8] sm:$0xff]
    %v537 = vld [vmem:[#allocation8 + $0x200] sm:$0xff]
    %v538 = vld [vmem:[#allocation8 + $0x208] sm:$0xff]
    %v539 = vld [vmem:[#allocation8 + $0x210] sm:$0xff]
    %v540 = vld [vmem:[#allocation8 + $0x218] sm:$0xff]
    %v541 = vld [vmem:[#allocation8 + $0x220] sm:$0xff]
    %v542 = vld [vmem:[#allocation8 + $0x228] sm:$0xff]
    %v543 = vld [vmem:[#allocation8 + $0x230] sm:$0xff]
    %v544 = vld [vmem:[#allocation8 + $0x238] sm:$0xff]
    %v545 = vld [vmem:[#allocation8 + $0x240] sm:$0xff]
    %v546 = vld [vmem:[#allocation8 + $0x248] sm:$0xff]
    %v547 = vld [vmem:[#allocation8 + $0x250] sm:$0xff]
    %v548 = vld [vmem:[#allocation8 + $0x258] sm:$0xff]
    %v549 = vld [vmem:[#allocation8 + $0x260] sm:$0xff]
    %v550 = vld [vmem:[#allocation8 + $0x268] sm:$0xff]
    %v551 = vld [vmem:[#allocation8 + $0x270] sm:$0xff]
    %v552 = vld [vmem:[#allocation8 + $0x278] sm:$0xff]
    %v553 = vld [vmem:[#allocation8 + $0x280] sm:$0xff]
    %v554 = vld [vmem:[#allocation8 + $0x288] sm:$0xff]
    %v555 = vld [vmem:[#allocation8 + $0x290] sm:$0xff]
    %v556 = vld [vmem:[#allocation8 + $0x298] sm:$0xff]
    %v557 = vld [vmem:[#allocation8 + $0x2a0] sm:$0xff]
    %v558 = vld [vmem:[#allocation8 + $0x2a8] sm:$0xff]
    %v559 = vld [vmem:[#allocation8 + $0x2b0] sm:$0xff]
    %v560 = vld [vmem:[#allocation8 + $0x2b8] sm:$0xff]
    %v561 = vld [vmem:[#allocation8 + $0x2c0] sm:$0xff]
    %v562 = vld [vmem:[#allocation8 + $0x2c8] sm:$0xff]
    %v563 = vld [vmem:[#allocation8 + $0x2d0] sm:$0xff]
    %v564 = vld [vmem:[#allocation8 + $0x2d8] sm:$0xff]
    %v565 = vld [vmem:[#allocation8 + $0x2e0] sm:$0xff]
    %v566 = vld [vmem:[#allocation8 + $0x2e8] sm:$0xff]
    %v567 = vld [vmem:[#allocation8 + $0x2f0] sm:$0xff]
    %v568 = vld [vmem:[#allocation8 + $0x2f8] sm:$0xff]
    %v569 = vld [vmem:[#allocation8 + $0x300] sm:$0xff]
    %v570 = vld [vmem:[#allocation8 + $0x308] sm:$0xff]
    %v571 = vld [vmem:[#allocation8 + $0x310] sm:$0xff]
    %v572 = vld [vmem:[#allocation8 + $0x318] sm:$0xff]
    %v573 = vld [vmem:[#allocation8 + $0x320] sm:$0xff]
    %v574 = vld [vmem:[#allocation8 + $0x328] sm:$0xff]
    %v575 = vld [vmem:[#allocation8 + $0x330] sm:$0xff]
    %v576 = vld [vmem:[#allocation8 + $0x338] sm:$0xff]
    %v577 = vld [vmem:[#allocation8 + $0x340] sm:$0xff]
    %v578 = vld [vmem:[#allocation8 + $0x348] sm:$0xff]
    %v579 = vld [vmem:[#allocation8 + $0x350] sm:$0xff]
    %v580 = vld [vmem:[#allocation8 + $0x358] sm:$0xff]
    %v581 = vld [vmem:[#allocation8 + $0x360] sm:$0xff]
    %v582 = vld [vmem:[#allocation8 + $0x368] sm:$0xff]
    %v583 = vld [vmem:[#allocation8 + $0x370] sm:$0xff]
    %v584 = vld [vmem:[#allocation8 + $0x378] sm:$0xff]
    %v585 = vld [vmem:[#allocation8 + $0x380] sm:$0xff]
    %v586 = vld [vmem:[#allocation8 + $0x388] sm:$0xff]
    %v587 = vld [vmem:[#allocation8 + $0x390] sm:$0xff]
    %v588 = vld [vmem:[#allocation8 + $0x398] sm:$0xff]
    %v589 = vld [vmem:[#allocation8 + $0x3a0] sm:$0xff]
    %v590 = vld [vmem:[#allocation8 + $0x3a8] sm:$0xff]
    %v591 = vld [vmem:[#allocation8 + $0x3b0] sm:$0xff]
    %v592 = vld [vmem:[#allocation8 + $0x3b8] sm:$0xff]
    %v593 = vld [vmem:[#allocation8 + $0x3c0] sm:$0xff]
    %v594 = vld [vmem:[#allocation8 + $0x3c8] sm:$0xff]
    %v595 = vld [vmem:[#allocation8 + $0x3d0] sm:$0xff]
    %v596 = vld [vmem:[#allocation8 + $0x3d8] sm:$0xff]
    %v597 = vld [vmem:[#allocation8 + $0x3e0] sm:$0xff]
    %v598 = vld [vmem:[#allocation8 + $0x3e8] sm:$0xff]
    %v599 = vld [vmem:[#allocation8 + $0x3f0] sm:$0xff]
    %v600 = vld [vmem:[#allocation8 + $0x3f8] sm:$0xff]
    %v601 = vld [vmem:[#allocation8 + $0x400] sm:$0xff]
    %v602 = vld [vmem:[#allocation8 + $0x408] sm:$0xff]
    %v603 = vld [vmem:[#allocation8 + $0x410] sm:$0xff]
    %v604 = vld [vmem:[#allocation8 + $0x418] sm:$0xff]
    %v605 = vld [vmem:[#allocation8 + $0x420] sm:$0xff]
    %v606 = vld [vmem:[#allocation8 + $0x428] sm:$0xff]
    %v607 = vld [vmem:[#allocation8 + $0x430] sm:$0xff]
    %v608 = vld [vmem:[#allocation8 + $0x438] sm:$0xff]
    %v609 = vld [vmem:[#allocation8 + $0x440] sm:$0xff]
    %v610 = vld [vmem:[#allocation8 + $0x448] sm:$0xff]
    %v611 = vld [vmem:[#allocation8 + $0x450] sm:$0xff]
    %v612 = vld [vmem:[#allocation8 + $0x458] sm:$0xff]
    %v613 = vld [vmem:[#allocation8 + $0x460] sm:$0xff]
    %v614 = vld [vmem:[#allocation8 + $0x468] sm:$0xff]
    %v615 = vld [vmem:[#allocation8 + $0x470] sm:$0xff]
    %v616 = vld [vmem:[#allocation8 + $0x478] sm:$0xff]
    %v617 = vld [vmem:[#allocation8 + $0x480] sm:$0xff]
    %v618 = vld [vmem:[#allocation8 + $0x488] sm:$0xff]
    %v619 = vld [vmem:[#allocation8 + $0x490] sm:$0xff]
    %v620 = vld [vmem:[#allocation8 + $0x498] sm:$0xff]
    %v621 = vld [vmem:[#allocation8 + $0x4a0] sm:$0xff]
    %v622 = vld [vmem:[#allocation8 + $0x4a8] sm:$0xff]
    %v623 = vld [vmem:[#allocation8 + $0x4b0] sm:$0xff]
    %v624 = vld [vmem:[#allocation8 + $0x4b8] sm:$0xff]
    %v625 = vld [vmem:[#allocation8 + $0x4c0] sm:$0xff]
    %v626 = vld [vmem:[#allocation8 + $0x4c8] sm:$0xff]
    %v627 = vld [vmem:[#allocation8 + $0x4d0] sm:$0xff]
    %v628 = vld [vmem:[#allocation8 + $0x4d8] sm:$0xff]
    %v629 = vld [vmem:[#allocation8 + $0x4e0] sm:$0xff]
    %v630 = vld [vmem:[#allocation8 + $0x4e8] sm:$0xff]
    %v631 = vld [vmem:[#allocation8 + $0x4f0] sm:$0xff]
    %v632 = vld [vmem:[#allocation8 + $0x4f8] sm:$0xff]
    %v633 = vld [vmem:[#allocation8 + $0x500] sm:$0xff]
    %v634 = vld [vmem:[#allocation8 + $0x508] sm:$0xff]
    %v635 = vld [vmem:[#allocation8 + $0x510] sm:$0xff]
    %v636 = vld [vmem:[#allocation8 + $0x518] sm:$0xff]
    %v637 = vld [vmem:[#allocation8 + $0x520] sm:$0xff]
    %v638 = vld [vmem:[#allocation8 + $0x528] sm:$0xff]
    %v639 = vld [vmem:[#allocation8 + $0x530] sm:$0xff]
    %v640 = vld [vmem:[#allocation8 + $0x538] sm:$0xff]
    %v641 = vld [vmem:[#allocation8 + $0x540] sm:$0xff]
    %v642 = vld [vmem:[#allocation8 + $0x548] sm:$0xff]
    %v643 = vld [vmem:[#allocation8 + $0x550] sm:$0xff]
    %v644 = vld [vmem:[#allocation8 + $0x558] sm:$0xff]
    %v645 = vld [vmem:[#allocation8 + $0x560] sm:$0xff]
    %v646 = vld [vmem:[#allocation8 + $0x568] sm:$0xff]
    %v647 = vld [vmem:[#allocation8 + $0x570] sm:$0xff]
    %v648 = vld [vmem:[#allocation8 + $0x578] sm:$0xff]
    %v649 = vld [vmem:[#allocation8 + $0x580] sm:$0xff]
    %v650 = vld [vmem:[#allocation8 + $0x588] sm:$0xff]
    %v651 = vld [vmem:[#allocation8 + $0x590] sm:$0xff]
    %v652 = vld [vmem:[#allocation8 + $0x598] sm:$0xff]
    %v653 = vld [vmem:[#allocation8 + $0x5a0] sm:$0xff]
    %v654 = vld [vmem:[#allocation8 + $0x5a8] sm:$0xff]
    %v655 = vld [vmem:[#allocation8 + $0x5b0] sm:$0xff]
    %v656 = vld [vmem:[#allocation8 + $0x5b8] sm:$0xff]
    %v657 = vld [vmem:[#allocation8 + $0x5c0] sm:$0xff]
    %v658 = vld [vmem:[#allocation8 + $0x5c8] sm:$0xff]
    %v659 = vld [vmem:[#allocation8 + $0x5d0] sm:$0xff]
    %v660 = vld [vmem:[#allocation8 + $0x5d8] sm:$0xff]
    %v661 = vld [vmem:[#allocation8 + $0x5e0] sm:$0xff]
    %v662 = vld [vmem:[#allocation8 + $0x5e8] sm:$0xff]
    %v663 = vld [vmem:[#allocation8 + $0x5f0] sm:$0xff]
    %v664 = vld [vmem:[#allocation8 + $0x5f8] sm:$0xff]
    %v665 = vld [vmem:[#allocation8 + $0x600] sm:$0xff]
    %v666 = vld [vmem:[#allocation8 + $0x608] sm:$0xff]
    %v667 = vld [vmem:[#allocation8 + $0x610] sm:$0xff]
    %v668 = vld [vmem:[#allocation8 + $0x618] sm:$0xff]
    %v669 = vld [vmem:[#allocation8 + $0x620] sm:$0xff]
    %v670 = vld [vmem:[#allocation8 + $0x628] sm:$0xff]
    %v671 = vld [vmem:[#allocation8 + $0x630] sm:$0xff]
    %v672 = vld [vmem:[#allocation8 + $0x638] sm:$0xff]
    %v673 = vld [vmem:[#allocation8 + $0x640] sm:$0xff]
    %v674 = vld [vmem:[#allocation8 + $0x648] sm:$0xff]
    %v675 = vld [vmem:[#allocation8 + $0x650] sm:$0xff]
    %v676 = vld [vmem:[#allocation8 + $0x658] sm:$0xff]
    %v677 = vld [vmem:[#allocation8 + $0x660] sm:$0xff]
    %v678 = vld [vmem:[#allocation8 + $0x668] sm:$0xff]
    %v679 = vld [vmem:[#allocation8 + $0x670] sm:$0xff]
    %v680 = vld [vmem:[#allocation8 + $0x678] sm:$0xff]
    %v681 = vld [vmem:[#allocation8 + $0x680] sm:$0xff]
    %v682 = vld [vmem:[#allocation8 + $0x688] sm:$0xff]
    %v683 = vld [vmem:[#allocation8 + $0x690] sm:$0xff]
    %v684 = vld [vmem:[#allocation8 + $0x698] sm:$0xff]
    %v685 = vld [vmem:[#allocation8 + $0x6a0] sm:$0xff]
    %v686 = vld [vmem:[#allocation8 + $0x6a8] sm:$0xff]
    %v687 = vld [vmem:[#allocation8 + $0x6b0] sm:$0xff]
    %v688 = vld [vmem:[#allocation8 + $0x6b8] sm:$0xff]
    %v689 = vld [vmem:[#allocation8 + $0x6c0] sm:$0xff]
    %v690 = vld [vmem:[#allocation8 + $0x6c8] sm:$0xff]
    %v691 = vld [vmem:[#allocation8 + $0x6d0] sm:$0xff]
    %v692 = vld [vmem:[#allocation8 + $0x6d8] sm:$0xff]
    %v693 = vld [vmem:[#allocation8 + $0x6e0] sm:$0xff]
    %v694 = vld [vmem:[#allocation8 + $0x6e8] sm:$0xff]
    %v695 = vld [vmem:[#allocation8 + $0x6f0] sm:$0xff]
    %v696 = vld [vmem:[#allocation8 + $0x6f8] sm:$0xff]
    %v697 = vld [vmem:[#allocation8 + $0x700] sm:$0xff]
    %v698 = vld [vmem:[#allocation8 + $0x708] sm:$0xff]
    %v699 = vld [vmem:[#allocation8 + $0x710] sm:$0xff]
    %v700 = vld [vmem:[#allocation8 + $0x718] sm:$0xff]
    %v701 = vld [vmem:[#allocation8 + $0x720] sm:$0xff]
    %v702 = vld [vmem:[#allocation8 + $0x728] sm:$0xff]
    %v703 = vld [vmem:[#allocation8 + $0x730] sm:$0xff]
    %v704 = vld [vmem:[#allocation8 + $0x738] sm:$0xff]
    %v705 = vld [vmem:[#allocation8 + $0x740] sm:$0xff]
    %v706 = vld [vmem:[#allocation8 + $0x748] sm:$0xff]
    %v707 = vld [vmem:[#allocation8 + $0x750] sm:$0xff]
    %v708 = vld [vmem:[#allocation8 + $0x758] sm:$0xff]
    %v709 = vld [vmem:[#allocation8 + $0x760] sm:$0xff]
    %v710 = vld [vmem:[#allocation8 + $0x768] sm:$0xff]
    %v711 = vld [vmem:[#allocation8 + $0x770] sm:$0xff]
    %v712 = vld [vmem:[#allocation8 + $0x778] sm:$0xff]
    %v713 = vld [vmem:[#allocation8 + $0x780] sm:$0xff]
    %v714 = vld [vmem:[#allocation8 + $0x788] sm:$0xff]
    %v715 = vld [vmem:[#allocation8 + $0x790] sm:$0xff]
    %v716 = vld [vmem:[#allocation8 + $0x798] sm:$0xff]
    %v717 = vld [vmem:[#allocation8 + $0x7a0] sm:$0xff]
    %v718 = vld [vmem:[#allocation8 + $0x7a8] sm:$0xff]
    %v719 = vld [vmem:[#allocation8 + $0x7b0] sm:$0xff]
    %v720 = vld [vmem:[#allocation8 + $0x7b8] sm:$0xff]
    %v721 = vld [vmem:[#allocation8 + $0x7c0] sm:$0xff]
    %v722 = vld [vmem:[#allocation8 + $0x7c8] sm:$0xff]
    %v723 = vld [vmem:[#allocation8 + $0x7d0] sm:$0xff]
    %v724 = vld [vmem:[#allocation8 + $0x7d8] sm:$0xff]
    %v725 = vld [vmem:[#allocation8 + $0x7e0] sm:$0xff]
    %v726 = vld [vmem:[#allocation8 + $0x7e8] sm:$0xff]
    %v727 = vld [vmem:[#allocation8 + $0x7f0] sm:$0xff]
    %v728 = vld [vmem:[#allocation8 + $0x7f8] sm:$0xff]
    %v729 = vld [vmem:[#allocation8 + $0x800] sm:$0xff]
    %v730 = vld [vmem:[#allocation8 + $0x808] sm:$0xff]
    %v731 = vld [vmem:[#allocation8 + $0x810] sm:$0xff]
    %v732 = vld [vmem:[#allocation8 + $0x818] sm:$0xff]
    %v733 = vld [vmem:[#allocation8 + $0x820] sm:$0xff]
    %v734 = vld [vmem:[#allocation8 + $0x828] sm:$0xff]
    %v735 = vld [vmem:[#allocation8 + $0x830] sm:$0xff]
    %v736 = vld [vmem:[#allocation8 + $0x838] sm:$0xff]
    %v737 = vld [vmem:[#allocation8 + $0x840] sm:$0xff]
    %v738 = vld [vmem:[#allocation8 + $0x848] sm:$0xff]
    %v739 = vld [vmem:[#allocation8 + $0x850] sm:$0xff]
    %v740 = vld [vmem:[#allocation8 + $0x858] sm:$0xff]
    %v741 = vld [vmem:[#allocation8 + $0x860] sm:$0xff]
    %v742 = vld [vmem:[#allocation8 + $0x868] sm:$0xff]
    %v743 = vld [vmem:[#allocation8 + $0x870] sm:$0xff]
    %v744 = vld [vmem:[#allocation8 + $0x878] sm:$0xff]
    %v745 = vld [vmem:[#allocation8 + $0x880] sm:$0xff]
    %v746 = vld [vmem:[#allocation8 + $0x888] sm:$0xff]
    %v747 = vld [vmem:[#allocation8 + $0x890] sm:$0xff]
    %v748 = vld [vmem:[#allocation8 + $0x898] sm:$0xff]
    %v749 = vld [vmem:[#allocation8 + $0x8a0] sm:$0xff]
    %v750 = vld [vmem:[#allocation8 + $0x8a8] sm:$0xff]
    %v751 = vld [vmem:[#allocation8 + $0x8b0] sm:$0xff]
    %v752 = vld [vmem:[#allocation8 + $0x8b8] sm:$0xff]
    %v753 = vld [vmem:[#allocation8 + $0x8c0] sm:$0xff]
    %v754 = vld [vmem:[#allocation8 + $0x8c8] sm:$0xff]
    %v755 = vld [vmem:[#allocation8 + $0x8d0] sm:$0xff]
    %v756 = vld [vmem:[#allocation8 + $0x8d8] sm:$0xff]
    %v757 = vld [vmem:[#allocation8 + $0x8e0] sm:$0xff]
    %v758 = vld [vmem:[#allocation8 + $0x8e8] sm:$0xff]
    %v759 = vld [vmem:[#allocation8 + $0x8f0] sm:$0xff]
    %v760 = vld [vmem:[#allocation8 + $0x8f8] sm:$0xff]
    %v761 = vld [vmem:[#allocation8 + $0x900] sm:$0xff]
    %v762 = vld [vmem:[#allocation8 + $0x908] sm:$0xff]
    %v763 = vld [vmem:[#allocation8 + $0x910] sm:$0xff]
    %v764 = vld [vmem:[#allocation8 + $0x918] sm:$0xff]
    %v765 = vld [vmem:[#allocation8 + $0x920] sm:$0xff]
    %v766 = vld [vmem:[#allocation8 + $0x928] sm:$0xff]
    %v767 = vld [vmem:[#allocation8 + $0x930] sm:$0xff]
    %v768 = vld [vmem:[#allocation8 + $0x938] sm:$0xff]
    %v769 = vld [vmem:[#allocation8 + $0x940] sm:$0xff]
    %v770 = vld [vmem:[#allocation8 + $0x948] sm:$0xff]
    %v771 = vld [vmem:[#allocation8 + $0x950] sm:$0xff]
    %v772 = vld [vmem:[#allocation8 + $0x958] sm:$0xff]
    %v773 = vld [vmem:[#allocation8 + $0x960] sm:$0xff]
    %v774 = vld [vmem:[#allocation8 + $0x968] sm:$0xff]
    %v775 = vld [vmem:[#allocation8 + $0x970] sm:$0xff]
    %v776 = vld [vmem:[#allocation8 + $0x978] sm:$0xff]
    %v777 = vld [vmem:[#allocation8 + $0x980] sm:$0xff]
    %v778 = vld [vmem:[#allocation8 + $0x988] sm:$0xff]
    %v779 = vld [vmem:[#allocation8 + $0x990] sm:$0xff]
    %v780 = vld [vmem:[#allocation8 + $0x998] sm:$0xff]
    %v781 = vld [vmem:[#allocation8 + $0x9a0] sm:$0xff]
    %v782 = vld [vmem:[#allocation8 + $0x9a8] sm:$0xff]
    %v783 = vld [vmem:[#allocation8 + $0x9b0] sm:$0xff]
    %v784 = vld [vmem:[#allocation8 + $0x9b8] sm:$0xff]
    %v785 = vld [vmem:[#allocation8 + $0x9c0] sm:$0xff]
    %v786 = vld [vmem:[#allocation8 + $0x9c8] sm:$0xff]
    %v787 = vld [vmem:[#allocation8 + $0x9d0] sm:$0xff]
    %v788 = vld [vmem:[#allocation8 + $0x9d8] sm:$0xff]
    %v789 = vld [vmem:[#allocation8 + $0x9e0] sm:$0xff]
    %v790 = vld [vmem:[#allocation8 + $0x9e8] sm:$0xff]
    %v791 = vld [vmem:[#allocation8 + $0x9f0] sm:$0xff]
    %v792 = vld [vmem:[#allocation8 + $0x9f8] sm:$0xff]
    %v793 = vld [vmem:[#allocation8 + $0xa00] sm:$0xff]
    %v794 = vld [vmem:[#allocation8 + $0xa08] sm:$0xff]
    %v795 = vld [vmem:[#allocation8 + $0xa10] sm:$0xff]
    %v796 = vld [vmem:[#allocation8 + $0xa18] sm:$0xff]
    %v797 = vld [vmem:[#allocation8 + $0xa20] sm:$0xff]
    %v798 = vld [vmem:[#allocation8 + $0xa28] sm:$0xff]
    %v799 = vld [vmem:[#allocation8 + $0xa30] sm:$0xff]
    %v800 = vld [vmem:[#allocation8 + $0xa38] sm:$0xff]
    %v801 = vld [vmem:[#allocation8 + $0xa40] sm:$0xff]
    %v802 = vld [vmem:[#allocation8 + $0xa48] sm:$0xff]
    %v803 = vld [vmem:[#allocation8 + $0xa50] sm:$0xff]
    %v804 = vld [vmem:[#allocation8 + $0xa58] sm:$0xff]
    %v805 = vld [vmem:[#allocation8 + $0xa60] sm:$0xff]
    %v806 = vld [vmem:[#allocation8 + $0xa68] sm:$0xff]
    %v807 = vld [vmem:[#allocation8 + $0xa70] sm:$0xff]
    %v808 = vld [vmem:[#allocation8 + $0xa78] sm:$0xff]
    %v809 = vld [vmem:[#allocation8 + $0xa80] sm:$0xff]
    %v810 = vld [vmem:[#allocation8 + $0xa88] sm:$0xff]
    %v811 = vld [vmem:[#allocation8 + $0xa90] sm:$0xff]
    %v812 = vld [vmem:[#allocation8 + $0xa98] sm:$0xff]
    %v813 = vld [vmem:[#allocation8 + $0xaa0] sm:$0xff]
    %v814 = vld [vmem:[#allocation8 + $0xaa8] sm:$0xff]
    %v815 = vld [vmem:[#allocation8 + $0xab0] sm:$0xff]
    %v816 = vld [vmem:[#allocation8 + $0xab8] sm:$0xff]
    %v817 = vld [vmem:[#allocation8 + $0xac0] sm:$0xff]
    %v818 = vld [vmem:[#allocation8 + $0xac8] sm:$0xff]
    %v819 = vld [vmem:[#allocation8 + $0xad0] sm:$0xff]
    %v820 = vld [vmem:[#allocation8 + $0xad8] sm:$0xff]
    %v821 = vld [vmem:[#allocation8 + $0xae0] sm:$0xff]
    %v822 = vld [vmem:[#allocation8 + $0xae8] sm:$0xff]
    %v823 = vld [vmem:[#allocation8 + $0xaf0] sm:$0xff]
    %v824 = vld [vmem:[#allocation8 + $0xaf8] sm:$0xff]
    %v825 = vld [vmem:[#allocation8 + $0xb00] sm:$0xff]
    %v826 = vld [vmem:[#allocation8 + $0xb08] sm:$0xff]
    %v827 = vld [vmem:[#allocation8 + $0xb10] sm:$0xff]
    %v828 = vld [vmem:[#allocation8 + $0xb18] sm:$0xff]
    %v829 = vld [vmem:[#allocation8 + $0xb20] sm:$0xff]
    %v830 = vld [vmem:[#allocation8 + $0xb28] sm:$0xff]
    %v831 = vld [vmem:[#allocation8 + $0xb30] sm:$0xff]
    %v832 = vld [vmem:[#allocation8 + $0xb38] sm:$0xff]
    %v833 = vld [vmem:[#allocation8 + $0xb40] sm:$0xff]
    %v834 = vld [vmem:[#allocation8 + $0xb48] sm:$0xff]
    %v835 = vld [vmem:[#allocation8 + $0xb50] sm:$0xff]
    %v836 = vld [vmem:[#allocation8 + $0xb58] sm:$0xff]
    %v837 = vld [vmem:[#allocation8 + $0xb60] sm:$0xff]
    %v838 = vld [vmem:[#allocation8 + $0xb68] sm:$0xff]
    %v839 = vld [vmem:[#allocation8 + $0xb70] sm:$0xff]
    %v840 = vld [vmem:[#allocation8 + $0xb78] sm:$0xff]
    %v841 = vld [vmem:[#allocation8 + $0xb80] sm:$0xff]
    %v842 = vld [vmem:[#allocation8 + $0xb88] sm:$0xff]
    %v843 = vld [vmem:[#allocation8 + $0xb90] sm:$0xff]
    %v844 = vld [vmem:[#allocation8 + $0xb98] sm:$0xff]
    %v845 = vld [vmem:[#allocation8 + $0xba0] sm:$0xff]
    %v846 = vld [vmem:[#allocation8 + $0xba8] sm:$0xff]
    %v847 = vld [vmem:[#allocation8 + $0xbb0] sm:$0xff]
    %v848 = vld [vmem:[#allocation8 + $0xbb8] sm:$0xff]
    %v849 = vld [vmem:[#allocation8 + $0xbc0] sm:$0xff]
    %v850 = vld [vmem:[#allocation8 + $0xbc8] sm:$0xff]
    %v851 = vld [vmem:[#allocation8 + $0xbd0] sm:$0xff]
    %v852 = vld [vmem:[#allocation8 + $0xbd8] sm:$0xff]
    %v853 = vld [vmem:[#allocation8 + $0xbe0] sm:$0xff]
    %v854 = vld [vmem:[#allocation8 + $0xbe8] sm:$0xff]
    %v855 = vld [vmem:[#allocation8 + $0xbf0] sm:$0xff]
    %v856 = vld [vmem:[#allocation8 + $0xbf8] sm:$0xff]
    %v857 = vld [vmem:[#allocation8 + $0xc00] sm:$0xff]
    %v858 = vld [vmem:[#allocation8 + $0xc08] sm:$0xff]
    %v859 = vld [vmem:[#allocation8 + $0xc10] sm:$0xff]
    %v860 = vld [vmem:[#allocation8 + $0xc18] sm:$0xff]
    %v861 = vld [vmem:[#allocation8 + $0xc20] sm:$0xff]
    %v862 = vld [vmem:[#allocation8 + $0xc28] sm:$0xff]
    %v863 = vld [vmem:[#allocation8 + $0xc30] sm:$0xff]
    %v864 = vld [vmem:[#allocation8 + $0xc38] sm:$0xff]
    %v865 = vld [vmem:[#allocation8 + $0xc40] sm:$0xff]
    %v866 = vld [vmem:[#allocation8 + $0xc48] sm:$0xff]
    %v867 = vld [vmem:[#allocation8 + $0xc50] sm:$0xff]
    %v868 = vld [vmem:[#allocation8 + $0xc58] sm:$0xff]
    %v869 = vld [vmem:[#allocation8 + $0xc60] sm:$0xff]
    %v870 = vld [vmem:[#allocation8 + $0xc68] sm:$0xff]
    %v871 = vld [vmem:[#allocation8 + $0xc70] sm:$0xff]
    %v872 = vld [vmem:[#allocation8 + $0xc78] sm:$0xff]
    %v873 = vld [vmem:[#allocation8 + $0xc80] sm:$0xff]
    %v874 = vld [vmem:[#allocation8 + $0xc88] sm:$0xff]
    %v875 = vld [vmem:[#allocation8 + $0xc90] sm:$0xff]
    %v876 = vld [vmem:[#allocation8 + $0xc98] sm:$0xff]
    %v877 = vld [vmem:[#allocation8 + $0xca0] sm:$0xff]
    %v878 = vld [vmem:[#allocation8 + $0xca8] sm:$0xff]
    %v879 = vld [vmem:[#allocation8 + $0xcb0] sm:$0xff]
    %v880 = vld [vmem:[#allocation8 + $0xcb8] sm:$0xff]
    %v881 = vld [vmem:[#allocation8 + $0xcc0] sm:$0xff]
    %v882 = vld [vmem:[#allocation8 + $0xcc8] sm:$0xff]
    %v883 = vld [vmem:[#allocation8 + $0xcd0] sm:$0xff]
    %v884 = vld [vmem:[#allocation8 + $0xcd8] sm:$0xff]
    %v885 = vld [vmem:[#allocation8 + $0xce0] sm:$0xff]
    %v886 = vld [vmem:[#allocation8 + $0xce8] sm:$0xff]
    %v887 = vld [vmem:[#allocation8 + $0xcf0] sm:$0xff]
    %v888 = vld [vmem:[#allocation8 + $0xcf8] sm:$0xff]
    %v889 = vld [vmem:[#allocation8 + $0xd00] sm:$0xff]
    %v890 = vld [vmem:[#allocation8 + $0xd08] sm:$0xff]
    %v891 = vld [vmem:[#allocation8 + $0xd10] sm:$0xff]
    %v892 = vld [vmem:[#allocation8 + $0xd18] sm:$0xff]
    %v893 = vld [vmem:[#allocation8 + $0xd20] sm:$0xff]
    %v894 = vld [vmem:[#allocation8 + $0xd28] sm:$0xff]
    %v895 = vld [vmem:[#allocation8 + $0xd30] sm:$0xff]
    %v896 = vld [vmem:[#allocation8 + $0xd38] sm:$0xff]
    %v897 = vld [vmem:[#allocation8 + $0xd40] sm:$0xff]
    %v898 = vld [vmem:[#allocation8 + $0xd48] sm:$0xff]
    %v899 = vld [vmem:[#allocation8 + $0xd50] sm:$0xff]
    %v900 = vld [vmem:[#allocation8 + $0xd58] sm:$0xff]
    %v901 = vld [vmem:[#allocation8 + $0xd60] sm:$0xff]
    %v902 = vld [vmem:[#allocation8 + $0xd68] sm:$0xff]
    %v903 = vld [vmem:[#allocation8 + $0xd70] sm:$0xff]
    %v904 = vld [vmem:[#allocation8 + $0xd78] sm:$0xff]
    %v905 = vld [vmem:[#allocation8 + $0xd80] sm:$0xff]
    %v906 = vld [vmem:[#allocation8 + $0xd88] sm:$0xff]
    %v907 = vld [vmem:[#allocation8 + $0xd90] sm:$0xff]
    %v908 = vld [vmem:[#allocation8 + $0xd98] sm:$0xff]
    %v909 = vld [vmem:[#allocation8 + $0xda0] sm:$0xff]
    %v910 = vld [vmem:[#allocation8 + $0xda8] sm:$0xff]
    %v911 = vld [vmem:[#allocation8 + $0xdb0] sm:$0xff]
    %v912 = vld [vmem:[#allocation8 + $0xdb8] sm:$0xff]
    %v913 = vld [vmem:[#allocation8 + $0xdc0] sm:$0xff]
    %v914 = vld [vmem:[#allocation8 + $0xdc8] sm:$0xff]
    %v915 = vld [vmem:[#allocation8 + $0xdd0] sm:$0xff]
    %v916 = vld [vmem:[#allocation8 + $0xdd8] sm:$0xff]
    %v917 = vld [vmem:[#allocation8 + $0xde0] sm:$0xff]
    %v918 = vld [vmem:[#allocation8 + $0xde8] sm:$0xff]
    %v919 = vld [vmem:[#allocation8 + $0xdf0] sm:$0xff]
    %v920 = vld [vmem:[#allocation8 + $0xdf8] sm:$0xff]
    %v921 = vld [vmem:[#allocation8 + $0xe00] sm:$0xff]
    %v922 = vld [vmem:[#allocation8 + $0xe08] sm:$0xff]
    %v923 = vld [vmem:[#allocation8 + $0xe10] sm:$0xff]
    %v924 = vld [vmem:[#allocation8 + $0xe18] sm:$0xff]
    %v925 = vld [vmem:[#allocation8 + $0xe20] sm:$0xff]
    %v926 = vld [vmem:[#allocation8 + $0xe28] sm:$0xff]
    %v927 = vld [vmem:[#allocation8 + $0xe30] sm:$0xff]
    %v928 = vld [vmem:[#allocation8 + $0xe38] sm:$0xff]
    %v929 = vld [vmem:[#allocation8 + $0xe40] sm:$0xff]
    %v930 = vld [vmem:[#allocation8 + $0xe48] sm:$0xff]
    %v931 = vld [vmem:[#allocation8 + $0xe50] sm:$0xff]
    %v932 = vld [vmem:[#allocation8 + $0xe58] sm:$0xff]
    %v933 = vld [vmem:[#allocation8 + $0xe60] sm:$0xff]
    %v934 = vld [vmem:[#allocation8 + $0xe68] sm:$0xff]
    %v935 = vld [vmem:[#allocation8 + $0xe70] sm:$0xff]
    %v936 = vld [vmem:[#allocation8 + $0xe78] sm:$0xff]
    %v937 = vld [vmem:[#allocation8 + $0xe80] sm:$0xff]
    %v938 = vld [vmem:[#allocation8 + $0xe88] sm:$0xff]
    %v939 = vld [vmem:[#allocation8 + $0xe90] sm:$0xff]
    %v940 = vld [vmem:[#allocation8 + $0xe98] sm:$0xff]
    %v941 = vld [vmem:[#allocation8 + $0xea0] sm:$0xff]
    %v942 = vld [vmem:[#allocation8 + $0xea8] sm:$0xff]
    %v943 = vld [vmem:[#allocation8 + $0xeb0] sm:$0xff]
    %v944 = vld [vmem:[#allocation8 + $0xeb8] sm:$0xff]
    %v945 = vld [vmem:[#allocation8 + $0xec0] sm:$0xff]
    %v946 = vld [vmem:[#allocation8 + $0xec8] sm:$0xff]
    %v947 = vld [vmem:[#allocation8 + $0xed0] sm:$0xff]
    %v948 = vld [vmem:[#allocation8 + $0xed8] sm:$0xff]
    %v949 = vld [vmem:[#allocation8 + $0xee0] sm:$0xff]
    %v950 = vld [vmem:[#allocation8 + $0xee8] sm:$0xff]
    %v951 = vld [vmem:[#allocation8 + $0xef0] sm:$0xff]
    %v952 = vld [vmem:[#allocation8 + $0xef8] sm:$0xff]
    %v953 = vld [vmem:[#allocation8 + $0xf00] sm:$0xff]
    %v954 = vld [vmem:[#allocation8 + $0xf08] sm:$0xff]
    %v955 = vld [vmem:[#allocation8 + $0xf10] sm:$0xff]
    %v956 = vld [vmem:[#allocation8 + $0xf18] sm:$0xff]
    %v957 = vld [vmem:[#allocation8 + $0xf20] sm:$0xff]
    %v958 = vld [vmem:[#allocation8 + $0xf28] sm:$0xff]
    %v959 = vld [vmem:[#allocation8 + $0xf30] sm:$0xff]
    %v960 = vld [vmem:[#allocation8 + $0xf38] sm:$0xff]
    %v961 = vld [vmem:[#allocation8 + $0xf40] sm:$0xff]
    %v962 = vld [vmem:[#allocation8 + $0xf48] sm:$0xff]
    %v963 = vld [vmem:[#allocation8 + $0xf50] sm:$0xff]
    %v964 = vld [vmem:[#allocation8 + $0xf58] sm:$0xff]
    %v965 = vld [vmem:[#allocation8 + $0xf60] sm:$0xff]
    %v966 = vld [vmem:[#allocation8 + $0xf68] sm:$0xff]
    %v967 = vld [vmem:[#allocation8 + $0xf70] sm:$0xff]
    %v968 = vld [vmem:[#allocation8 + $0xf78] sm:$0xff]
    %v969 = vld [vmem:[#allocation8 + $0xf80] sm:$0xff]
    %v970 = vld [vmem:[#allocation8 + $0xf88] sm:$0xff]
    %v971 = vld [vmem:[#allocation8 + $0xf90] sm:$0xff]
    %v972 = vld [vmem:[#allocation8 + $0xf98] sm:$0xff]
    %v973 = vld [vmem:[#allocation8 + $0xfa0] sm:$0xff]
    %v974 = vld [vmem:[#allocation8 + $0xfa8] sm:$0xff]
    %v975 = vld [vmem:[#allocation8 + $0xfb0] sm:$0xff]
    %v976 = vld [vmem:[#allocation8 + $0xfb8] sm:$0xff]
    %v977 = vld [vmem:[#allocation8 + $0xfc0] sm:$0xff]
    %v978 = vld [vmem:[#allocation8 + $0xfc8] sm:$0xff]
    %v979 = vld [vmem:[#allocation8 + $0xfd0] sm:$0xff]
    %v980 = vld [vmem:[#allocation8 + $0xfd8] sm:$0xff]
    %v981 = vld [vmem:[#allocation8 + $0xfe0] sm:$0xff]
    %v982 = vld [vmem:[#allocation8 + $0xfe8] sm:$0xff]
    %v983 = vld [vmem:[#allocation8 + $0xff0] sm:$0xff]
    %v984 = vld [vmem:[#allocation8 + $0xff8] sm:$0xff]
    %v985 = vld [vmem:[#allocation10] sm:$0xff]
    %v987 = vlaneseq
    %v988 = vshrl.u32 %v987, 7
    %v989 = vsub.s32 0, %v988
    %v990 = vrot.slane %v985, %v989
    %v991 = vlaneseq
    %v992 = vshrl.u32 %v991, 7
    %v993 = vsub.s32 1, %v992
    %v994 = vrot.slane %v985, %v993
    %v995 = vlaneseq
    %v996 = vshrl.u32 %v995, 7
    %v997 = vsub.s32 2, %v996
    %v998 = vrot.slane %v985, %v997
    %v999 = vlaneseq
    %v1000 = vshrl.u32 %v999, 7
    %v1001 = vsub.s32 3, %v1000
    %v1002 = vrot.slane %v985, %v1001
    %v1003 = vlaneseq
    %v1004 = vshrl.u32 %v1003, 7
    %v1005 = vsub.s32 4, %v1004
    %v1006 = vrot.slane %v985, %v1005
    %v1007 = vlaneseq
    %v1008 = vshrl.u32 %v1007, 7
    %v1009 = vsub.s32 5, %v1008
    %v1010 = vrot.slane %v985, %v1009
    %v1011 = vlaneseq
    %v1012 = vshrl.u32 %v1011, 7
    %v1013 = vsub.s32 6, %v1012
    %v1014 = vrot.slane %v985, %v1013
    %v1015 = vlaneseq
    %v1016 = vshrl.u32 %v1015, 7
    %v1017 = vsub.s32 7, %v1016
    %v1018 = vrot.slane %v985, %v1017
    %v1539 = vunpack.c.l.b16 %v473
    %v1540 = vunpack.c.h.b16 %v473
    %v1541 = vunpack.c.l.b16 %v474
    %v1542 = vunpack.c.h.b16 %v474
    %v1543 = vunpack.c.l.b16 %v475
    %v1544 = vunpack.c.h.b16 %v475
    %v1545 = vunpack.c.l.b16 %v476
    %v1546 = vunpack.c.h.b16 %v476
    %v1547 = vunpack.c.l.b16 %v477
    %v1548 = vunpack.c.h.b16 %v477
    %v1549 = vunpack.c.l.b16 %v478
    %v1550 = vunpack.c.h.b16 %v478
    %v1551 = vunpack.c.l.b16 %v479
    %v1552 = vunpack.c.h.b16 %v479
    %v1553 = vunpack.c.l.b16 %v480
    %v1554 = vunpack.c.h.b16 %v480
    %v1555 = vunpack.c.l.b16 %v481
    %v1556 = vunpack.c.h.b16 %v481
    %v1557 = vunpack.c.l.b16 %v482
    %v1558 = vunpack.c.h.b16 %v482
    %v1559 = vunpack.c.l.b16 %v483
    %v1560 = vunpack.c.h.b16 %v483
    %v1561 = vunpack.c.l.b16 %v484
    %v1562 = vunpack.c.h.b16 %v484
    %v1563 = vunpack.c.l.b16 %v485
    %v1564 = vunpack.c.h.b16 %v485
    %v1565 = vunpack.c.l.b16 %v486
    %v1566 = vunpack.c.h.b16 %v486
    %v1567 = vunpack.c.l.b16 %v487
    %v1568 = vunpack.c.h.b16 %v487
    %v1569 = vunpack.c.l.b16 %v488
    %v1570 = vunpack.c.h.b16 %v488
    %v1571 = vunpack.c.l.b16 %v489
    %v1572 = vunpack.c.h.b16 %v489
    %v1573 = vunpack.c.l.b16 %v490
    %v1574 = vunpack.c.h.b16 %v490
    %v1575 = vunpack.c.l.b16 %v491
    %v1576 = vunpack.c.h.b16 %v491
    %v1577 = vunpack.c.l.b16 %v492
    %v1578 = vunpack.c.h.b16 %v492
    %v1579 = vunpack.c.l.b16 %v493
    %v1580 = vunpack.c.h.b16 %v493
    %v1581 = vunpack.c.l.b16 %v494
    %v1582 = vunpack.c.h.b16 %v494
    %v1583 = vunpack.c.l.b16 %v495
    %v1584 = vunpack.c.h.b16 %v495
    %v1585 = vunpack.c.l.b16 %v496
    %v1586 = vunpack.c.h.b16 %v496
    %v1587 = vunpack.c.l.b16 %v497
    %v1588 = vunpack.c.h.b16 %v497
    %v1589 = vunpack.c.l.b16 %v498
    %v1590 = vunpack.c.h.b16 %v498
    %v1591 = vunpack.c.l.b16 %v499
    %v1592 = vunpack.c.h.b16 %v499
    %v1593 = vunpack.c.l.b16 %v500
    %v1594 = vunpack.c.h.b16 %v500
    %v1595 = vunpack.c.l.b16 %v501
    %v1596 = vunpack.c.h.b16 %v501
    %v1597 = vunpack.c.l.b16 %v502
    %v1598 = vunpack.c.h.b16 %v502
    %v1599 = vunpack.c.l.b16 %v503
    %v1600 = vunpack.c.h.b16 %v503
    %v1601 = vunpack.c.l.b16 %v504
    %v1602 = vunpack.c.h.b16 %v504
    %v1603 = vunpack.c.l.b16 %v505
    %v1604 = vunpack.c.h.b16 %v505
    %v1605 = vunpack.c.l.b16 %v506
    %v1606 = vunpack.c.h.b16 %v506
    %v1607 = vunpack.c.l.b16 %v507
    %v1608 = vunpack.c.h.b16 %v507
    %v1609 = vunpack.c.l.b16 %v508
    %v1610 = vunpack.c.h.b16 %v508
    %v1611 = vunpack.c.l.b16 %v509
    %v1612 = vunpack.c.h.b16 %v509
    %v1613 = vunpack.c.l.b16 %v510
    %v1614 = vunpack.c.h.b16 %v510
    %v1615 = vunpack.c.l.b16 %v511
    %v1616 = vunpack.c.h.b16 %v511
    %v1617 = vunpack.c.l.b16 %v512
    %v1618 = vunpack.c.h.b16 %v512
    %v1619 = vunpack.c.l.b16 %v513
    %v1620 = vunpack.c.h.b16 %v513
    %v1621 = vunpack.c.l.b16 %v514
    %v1622 = vunpack.c.h.b16 %v514
    %v1623 = vunpack.c.l.b16 %v515
    %v1624 = vunpack.c.h.b16 %v515
    %v1625 = vunpack.c.l.b16 %v516
    %v1626 = vunpack.c.h.b16 %v516
    %v1627 = vunpack.c.l.b16 %v517
    %v1628 = vunpack.c.h.b16 %v517
    %v1629 = vunpack.c.l.b16 %v518
    %v1630 = vunpack.c.h.b16 %v518
    %v1631 = vunpack.c.l.b16 %v519
    %v1632 = vunpack.c.h.b16 %v519
    %v1633 = vunpack.c.l.b16 %v520
    %v1634 = vunpack.c.h.b16 %v520
    %v1635 = vunpack.c.l.b16 %v521
    %v1636 = vunpack.c.h.b16 %v521
    %v1637 = vunpack.c.l.b16 %v522
    %v1638 = vunpack.c.h.b16 %v522
    %v1639 = vunpack.c.l.b16 %v523
    %v1640 = vunpack.c.h.b16 %v523
    %v1641 = vunpack.c.l.b16 %v524
    %v1642 = vunpack.c.h.b16 %v524
    %v1643 = vunpack.c.l.b16 %v525
    %v1644 = vunpack.c.h.b16 %v525
    %v1645 = vunpack.c.l.b16 %v526
    %v1646 = vunpack.c.h.b16 %v526
    %v1647 = vunpack.c.l.b16 %v527
    %v1648 = vunpack.c.h.b16 %v527
    %v1649 = vunpack.c.l.b16 %v528
    %v1650 = vunpack.c.h.b16 %v528
    %v1651 = vunpack.c.l.b16 %v529
    %v1652 = vunpack.c.h.b16 %v529
    %v1653 = vunpack.c.l.b16 %v530
    %v1654 = vunpack.c.h.b16 %v530
    %v1655 = vunpack.c.l.b16 %v531
    %v1656 = vunpack.c.h.b16 %v531
    %v1657 = vunpack.c.l.b16 %v532
    %v1658 = vunpack.c.h.b16 %v532
    %v1659 = vunpack.c.l.b16 %v533
    %v1660 = vunpack.c.h.b16 %v533
    %v1661 = vunpack.c.l.b16 %v534
    %v1662 = vunpack.c.h.b16 %v534
    %v1663 = vunpack.c.l.b16 %v535
    %v1664 = vunpack.c.h.b16 %v535
    %v1665 = vunpack.c.l.b16 %v536
    %v1666 = vunpack.c.h.b16 %v536
    %v1667 = vunpack.c.l.b16 %v537
    %v1668 = vunpack.c.h.b16 %v537
    %v1669 = vunpack.c.l.b16 %v538
    %v1670 = vunpack.c.h.b16 %v538
    %v1671 = vunpack.c.l.b16 %v539
    %v1672 = vunpack.c.h.b16 %v539
    %v1673 = vunpack.c.l.b16 %v540
    %v1674 = vunpack.c.h.b16 %v540
    %v1675 = vunpack.c.l.b16 %v541
    %v1676 = vunpack.c.h.b16 %v541
    %v1677 = vunpack.c.l.b16 %v542
    %v1678 = vunpack.c.h.b16 %v542
    %v1679 = vunpack.c.l.b16 %v543
    %v1680 = vunpack.c.h.b16 %v543
    %v1681 = vunpack.c.l.b16 %v544
    %v1682 = vunpack.c.h.b16 %v544
    %v1683 = vunpack.c.l.b16 %v545
    %v1684 = vunpack.c.h.b16 %v545
    %v1685 = vunpack.c.l.b16 %v546
    %v1686 = vunpack.c.h.b16 %v546
    %v1687 = vunpack.c.l.b16 %v547
    %v1688 = vunpack.c.h.b16 %v547
    %v1689 = vunpack.c.l.b16 %v548
    %v1690 = vunpack.c.h.b16 %v548
    %v1691 = vunpack.c.l.b16 %v549
    %v1692 = vunpack.c.h.b16 %v549
    %v1693 = vunpack.c.l.b16 %v550
    %v1694 = vunpack.c.h.b16 %v550
    %v1695 = vunpack.c.l.b16 %v551
    %v1696 = vunpack.c.h.b16 %v551
    %v1697 = vunpack.c.l.b16 %v552
    %v1698 = vunpack.c.h.b16 %v552
    %v1699 = vunpack.c.l.b16 %v553
    %v1700 = vunpack.c.h.b16 %v553
    %v1701 = vunpack.c.l.b16 %v554
    %v1702 = vunpack.c.h.b16 %v554
    %v1703 = vunpack.c.l.b16 %v555
    %v1704 = vunpack.c.h.b16 %v555
    %v1705 = vunpack.c.l.b16 %v556
    %v1706 = vunpack.c.h.b16 %v556
    %v1707 = vunpack.c.l.b16 %v557
    %v1708 = vunpack.c.h.b16 %v557
    %v1709 = vunpack.c.l.b16 %v558
    %v1710 = vunpack.c.h.b16 %v558
    %v1711 = vunpack.c.l.b16 %v559
    %v1712 = vunpack.c.h.b16 %v559
    %v1713 = vunpack.c.l.b16 %v560
    %v1714 = vunpack.c.h.b16 %v560
    %v1715 = vunpack.c.l.b16 %v561
    %v1716 = vunpack.c.h.b16 %v561
    %v1717 = vunpack.c.l.b16 %v562
    %v1718 = vunpack.c.h.b16 %v562
    %v1719 = vunpack.c.l.b16 %v563
    %v1720 = vunpack.c.h.b16 %v563
    %v1721 = vunpack.c.l.b16 %v564
    %v1722 = vunpack.c.h.b16 %v564
    %v1723 = vunpack.c.l.b16 %v565
    %v1724 = vunpack.c.h.b16 %v565
    %v1725 = vunpack.c.l.b16 %v566
    %v1726 = vunpack.c.h.b16 %v566
    %v1727 = vunpack.c.l.b16 %v567
    %v1728 = vunpack.c.h.b16 %v567
    %v1729 = vunpack.c.l.b16 %v568
    %v1730 = vunpack.c.h.b16 %v568
    %v1731 = vunpack.c.l.b16 %v569
    %v1732 = vunpack.c.h.b16 %v569
    %v1733 = vunpack.c.l.b16 %v570
    %v1734 = vunpack.c.h.b16 %v570
    %v1735 = vunpack.c.l.b16 %v571
    %v1736 = vunpack.c.h.b16 %v571
    %v1737 = vunpack.c.l.b16 %v572
    %v1738 = vunpack.c.h.b16 %v572
    %v1739 = vunpack.c.l.b16 %v573
    %v1740 = vunpack.c.h.b16 %v573
    %v1741 = vunpack.c.l.b16 %v574
    %v1742 = vunpack.c.h.b16 %v574
    %v1743 = vunpack.c.l.b16 %v575
    %v1744 = vunpack.c.h.b16 %v575
    %v1745 = vunpack.c.l.b16 %v576
    %v1746 = vunpack.c.h.b16 %v576
    %v1747 = vunpack.c.l.b16 %v577
    %v1748 = vunpack.c.h.b16 %v577
    %v1749 = vunpack.c.l.b16 %v578
    %v1750 = vunpack.c.h.b16 %v578
    %v1751 = vunpack.c.l.b16 %v579
    %v1752 = vunpack.c.h.b16 %v579
    %v1753 = vunpack.c.l.b16 %v580
    %v1754 = vunpack.c.h.b16 %v580
    %v1755 = vunpack.c.l.b16 %v581
    %v1756 = vunpack.c.h.b16 %v581
    %v1757 = vunpack.c.l.b16 %v582
    %v1758 = vunpack.c.h.b16 %v582
    %v1759 = vunpack.c.l.b16 %v583
    %v1760 = vunpack.c.h.b16 %v583
    %v1761 = vunpack.c.l.b16 %v584
    %v1762 = vunpack.c.h.b16 %v584
    %v1763 = vunpack.c.l.b16 %v585
    %v1764 = vunpack.c.h.b16 %v585
    %v1765 = vunpack.c.l.b16 %v586
    %v1766 = vunpack.c.h.b16 %v586
    %v1767 = vunpack.c.l.b16 %v587
    %v1768 = vunpack.c.h.b16 %v587
    %v1769 = vunpack.c.l.b16 %v588
    %v1770 = vunpack.c.h.b16 %v588
    %v1771 = vunpack.c.l.b16 %v589
    %v1772 = vunpack.c.h.b16 %v589
    %v1773 = vunpack.c.l.b16 %v590
    %v1774 = vunpack.c.h.b16 %v590
    %v1775 = vunpack.c.l.b16 %v591
    %v1776 = vunpack.c.h.b16 %v591
    %v1777 = vunpack.c.l.b16 %v592
    %v1778 = vunpack.c.h.b16 %v592
    %v1779 = vunpack.c.l.b16 %v593
    %v1780 = vunpack.c.h.b16 %v593
    %v1781 = vunpack.c.l.b16 %v594
    %v1782 = vunpack.c.h.b16 %v594
    %v1783 = vunpack.c.l.b16 %v595
    %v1784 = vunpack.c.h.b16 %v595
    %v1785 = vunpack.c.l.b16 %v596
    %v1786 = vunpack.c.h.b16 %v596
    %v1787 = vunpack.c.l.b16 %v597
    %v1788 = vunpack.c.h.b16 %v597
    %v1789 = vunpack.c.l.b16 %v598
    %v1790 = vunpack.c.h.b16 %v598
    %v1791 = vunpack.c.l.b16 %v599
    %v1792 = vunpack.c.h.b16 %v599
    %v1793 = vunpack.c.l.b16 %v600
    %v1794 = vunpack.c.h.b16 %v600
    %v1795 = vunpack.c.l.b16 %v601
    %v1796 = vunpack.c.h.b16 %v601
    %v1797 = vunpack.c.l.b16 %v602
    %v1798 = vunpack.c.h.b16 %v602
    %v1799 = vunpack.c.l.b16 %v603
    %v1800 = vunpack.c.h.b16 %v603
    %v1801 = vunpack.c.l.b16 %v604
    %v1802 = vunpack.c.h.b16 %v604
    %v1803 = vunpack.c.l.b16 %v605
    %v1804 = vunpack.c.h.b16 %v605
    %v1805 = vunpack.c.l.b16 %v606
    %v1806 = vunpack.c.h.b16 %v606
    %v1807 = vunpack.c.l.b16 %v607
    %v1808 = vunpack.c.h.b16 %v607
    %v1809 = vunpack.c.l.b16 %v608
    %v1810 = vunpack.c.h.b16 %v608
    %v1811 = vunpack.c.l.b16 %v609
    %v1812 = vunpack.c.h.b16 %v609
    %v1813 = vunpack.c.l.b16 %v610
    %v1814 = vunpack.c.h.b16 %v610
    %v1815 = vunpack.c.l.b16 %v611
    %v1816 = vunpack.c.h.b16 %v611
    %v1817 = vunpack.c.l.b16 %v612
    %v1818 = vunpack.c.h.b16 %v612
    %v1819 = vunpack.c.l.b16 %v613
    %v1820 = vunpack.c.h.b16 %v613
    %v1821 = vunpack.c.l.b16 %v614
    %v1822 = vunpack.c.h.b16 %v614
    %v1823 = vunpack.c.l.b16 %v615
    %v1824 = vunpack.c.h.b16 %v615
    %v1825 = vunpack.c.l.b16 %v616
    %v1826 = vunpack.c.h.b16 %v616
    %v1827 = vunpack.c.l.b16 %v617
    %v1828 = vunpack.c.h.b16 %v617
    %v1829 = vunpack.c.l.b16 %v618
    %v1830 = vunpack.c.h.b16 %v618
    %v1831 = vunpack.c.l.b16 %v619
    %v1832 = vunpack.c.h.b16 %v619
    %v1833 = vunpack.c.l.b16 %v620
    %v1834 = vunpack.c.h.b16 %v620
    %v1835 = vunpack.c.l.b16 %v621
    %v1836 = vunpack.c.h.b16 %v621
    %v1837 = vunpack.c.l.b16 %v622
    %v1838 = vunpack.c.h.b16 %v622
    %v1839 = vunpack.c.l.b16 %v623
    %v1840 = vunpack.c.h.b16 %v623
    %v1841 = vunpack.c.l.b16 %v624
    %v1842 = vunpack.c.h.b16 %v624
    %v1843 = vunpack.c.l.b16 %v625
    %v1844 = vunpack.c.h.b16 %v625
    %v1845 = vunpack.c.l.b16 %v626
    %v1846 = vunpack.c.h.b16 %v626
    %v1847 = vunpack.c.l.b16 %v627
    %v1848 = vunpack.c.h.b16 %v627
    %v1849 = vunpack.c.l.b16 %v628
    %v1850 = vunpack.c.h.b16 %v628
    %v1851 = vunpack.c.l.b16 %v629
    %v1852 = vunpack.c.h.b16 %v629
    %v1853 = vunpack.c.l.b16 %v630
    %v1854 = vunpack.c.h.b16 %v630
    %v1855 = vunpack.c.l.b16 %v631
    %v1856 = vunpack.c.h.b16 %v631
    %v1857 = vunpack.c.l.b16 %v632
    %v1858 = vunpack.c.h.b16 %v632
    %v1859 = vunpack.c.l.b16 %v633
    %v1860 = vunpack.c.h.b16 %v633
    %v1861 = vunpack.c.l.b16 %v634
    %v1862 = vunpack.c.h.b16 %v634
    %v1863 = vunpack.c.l.b16 %v635
    %v1864 = vunpack.c.h.b16 %v635
    %v1865 = vunpack.c.l.b16 %v636
    %v1866 = vunpack.c.h.b16 %v636
    %v1867 = vunpack.c.l.b16 %v637
    %v1868 = vunpack.c.h.b16 %v637
    %v1869 = vunpack.c.l.b16 %v638
    %v1870 = vunpack.c.h.b16 %v638
    %v1871 = vunpack.c.l.b16 %v639
    %v1872 = vunpack.c.h.b16 %v639
    %v1873 = vunpack.c.l.b16 %v640
    %v1874 = vunpack.c.h.b16 %v640
    %v1875 = vunpack.c.l.b16 %v641
    %v1876 = vunpack.c.h.b16 %v641
    %v1877 = vunpack.c.l.b16 %v642
    %v1878 = vunpack.c.h.b16 %v642
    %v1879 = vunpack.c.l.b16 %v643
    %v1880 = vunpack.c.h.b16 %v643
    %v1881 = vunpack.c.l.b16 %v644
    %v1882 = vunpack.c.h.b16 %v644
    %v1883 = vunpack.c.l.b16 %v645
    %v1884 = vunpack.c.h.b16 %v645
    %v1885 = vunpack.c.l.b16 %v646
    %v1886 = vunpack.c.h.b16 %v646
    %v1887 = vunpack.c.l.b16 %v647
    %v1888 = vunpack.c.h.b16 %v647
    %v1889 = vunpack.c.l.b16 %v648
    %v1890 = vunpack.c.h.b16 %v648
    %v1891 = vunpack.c.l.b16 %v649
    %v1892 = vunpack.c.h.b16 %v649
    %v1893 = vunpack.c.l.b16 %v650
    %v1894 = vunpack.c.h.b16 %v650
    %v1895 = vunpack.c.l.b16 %v651
    %v1896 = vunpack.c.h.b16 %v651
    %v1897 = vunpack.c.l.b16 %v652
    %v1898 = vunpack.c.h.b16 %v652
    %v1899 = vunpack.c.l.b16 %v653
    %v1900 = vunpack.c.h.b16 %v653
    %v1901 = vunpack.c.l.b16 %v654
    %v1902 = vunpack.c.h.b16 %v654
    %v1903 = vunpack.c.l.b16 %v655
    %v1904 = vunpack.c.h.b16 %v655
    %v1905 = vunpack.c.l.b16 %v656
    %v1906 = vunpack.c.h.b16 %v656
    %v1907 = vunpack.c.l.b16 %v657
    %v1908 = vunpack.c.h.b16 %v657
    %v1909 = vunpack.c.l.b16 %v658
    %v1910 = vunpack.c.h.b16 %v658
    %v1911 = vunpack.c.l.b16 %v659
    %v1912 = vunpack.c.h.b16 %v659
    %v1913 = vunpack.c.l.b16 %v660
    %v1914 = vunpack.c.h.b16 %v660
    %v1915 = vunpack.c.l.b16 %v661
    %v1916 = vunpack.c.h.b16 %v661
    %v1917 = vunpack.c.l.b16 %v662
    %v1918 = vunpack.c.h.b16 %v662
    %v1919 = vunpack.c.l.b16 %v663
    %v1920 = vunpack.c.h.b16 %v663
    %v1921 = vunpack.c.l.b16 %v664
    %v1922 = vunpack.c.h.b16 %v664
    %v1923 = vunpack.c.l.b16 %v665
    %v1924 = vunpack.c.h.b16 %v665
    %v1925 = vunpack.c.l.b16 %v666
    %v1926 = vunpack.c.h.b16 %v666
    %v1927 = vunpack.c.l.b16 %v667
    %v1928 = vunpack.c.h.b16 %v667
    %v1929 = vunpack.c.l.b16 %v668
    %v1930 = vunpack.c.h.b16 %v668
    %v1931 = vunpack.c.l.b16 %v669
    %v1932 = vunpack.c.h.b16 %v669
    %v1933 = vunpack.c.l.b16 %v670
    %v1934 = vunpack.c.h.b16 %v670
    %v1935 = vunpack.c.l.b16 %v671
    %v1936 = vunpack.c.h.b16 %v671
    %v1937 = vunpack.c.l.b16 %v672
    %v1938 = vunpack.c.h.b16 %v672
    %v1939 = vunpack.c.l.b16 %v673
    %v1940 = vunpack.c.h.b16 %v673
    %v1941 = vunpack.c.l.b16 %v674
    %v1942 = vunpack.c.h.b16 %v674
    %v1943 = vunpack.c.l.b16 %v675
    %v1944 = vunpack.c.h.b16 %v675
    %v1945 = vunpack.c.l.b16 %v676
    %v1946 = vunpack.c.h.b16 %v676
    %v1947 = vunpack.c.l.b16 %v677
    %v1948 = vunpack.c.h.b16 %v677
    %v1949 = vunpack.c.l.b16 %v678
    %v1950 = vunpack.c.h.b16 %v678
    %v1951 = vunpack.c.l.b16 %v679
    %v1952 = vunpack.c.h.b16 %v679
    %v1953 = vunpack.c.l.b16 %v680
    %v1954 = vunpack.c.h.b16 %v680
    %v1955 = vunpack.c.l.b16 %v681
    %v1956 = vunpack.c.h.b16 %v681
    %v1957 = vunpack.c.l.b16 %v682
    %v1958 = vunpack.c.h.b16 %v682
    %v1959 = vunpack.c.l.b16 %v683
    %v1960 = vunpack.c.h.b16 %v683
    %v1961 = vunpack.c.l.b16 %v684
    %v1962 = vunpack.c.h.b16 %v684
    %v1963 = vunpack.c.l.b16 %v685
    %v1964 = vunpack.c.h.b16 %v685
    %v1965 = vunpack.c.l.b16 %v686
    %v1966 = vunpack.c.h.b16 %v686
    %v1967 = vunpack.c.l.b16 %v687
    %v1968 = vunpack.c.h.b16 %v687
    %v1969 = vunpack.c.l.b16 %v688
    %v1970 = vunpack.c.h.b16 %v688
    %v1971 = vunpack.c.l.b16 %v689
    %v1972 = vunpack.c.h.b16 %v689
    %v1973 = vunpack.c.l.b16 %v690
    %v1974 = vunpack.c.h.b16 %v690
    %v1975 = vunpack.c.l.b16 %v691
    %v1976 = vunpack.c.h.b16 %v691
    %v1977 = vunpack.c.l.b16 %v692
    %v1978 = vunpack.c.h.b16 %v692
    %v1979 = vunpack.c.l.b16 %v693
    %v1980 = vunpack.c.h.b16 %v693
    %v1981 = vunpack.c.l.b16 %v694
    %v1982 = vunpack.c.h.b16 %v694
    %v1983 = vunpack.c.l.b16 %v695
    %v1984 = vunpack.c.h.b16 %v695
    %v1985 = vunpack.c.l.b16 %v696
    %v1986 = vunpack.c.h.b16 %v696
    %v1987 = vunpack.c.l.b16 %v697
    %v1988 = vunpack.c.h.b16 %v697
    %v1989 = vunpack.c.l.b16 %v698
    %v1990 = vunpack.c.h.b16 %v698
    %v1991 = vunpack.c.l.b16 %v699
    %v1992 = vunpack.c.h.b16 %v699
    %v1993 = vunpack.c.l.b16 %v700
    %v1994 = vunpack.c.h.b16 %v700
    %v1995 = vunpack.c.l.b16 %v701
    %v1996 = vunpack.c.h.b16 %v701
    %v1997 = vunpack.c.l.b16 %v702
    %v1998 = vunpack.c.h.b16 %v702
    %v1999 = vunpack.c.l.b16 %v703
    %v2000 = vunpack.c.h.b16 %v703
    %v2001 = vunpack.c.l.b16 %v704
    %v2002 = vunpack.c.h.b16 %v704
    %v2003 = vunpack.c.l.b16 %v705
    %v2004 = vunpack.c.h.b16 %v705
    %v2005 = vunpack.c.l.b16 %v706
    %v2006 = vunpack.c.h.b16 %v706
    %v2007 = vunpack.c.l.b16 %v707
    %v2008 = vunpack.c.h.b16 %v707
    %v2009 = vunpack.c.l.b16 %v708
    %v2010 = vunpack.c.h.b16 %v708
    %v2011 = vunpack.c.l.b16 %v709
    %v2012 = vunpack.c.h.b16 %v709
    %v2013 = vunpack.c.l.b16 %v710
    %v2014 = vunpack.c.h.b16 %v710
    %v2015 = vunpack.c.l.b16 %v711
    %v2016 = vunpack.c.h.b16 %v711
    %v2017 = vunpack.c.l.b16 %v712
    %v2018 = vunpack.c.h.b16 %v712
    %v2019 = vunpack.c.l.b16 %v713
    %v2020 = vunpack.c.h.b16 %v713
    %v2021 = vunpack.c.l.b16 %v714
    %v2022 = vunpack.c.h.b16 %v714
    %v2023 = vunpack.c.l.b16 %v715
    %v2024 = vunpack.c.h.b16 %v715
    %v2025 = vunpack.c.l.b16 %v716
    %v2026 = vunpack.c.h.b16 %v716
    %v2027 = vunpack.c.l.b16 %v717
    %v2028 = vunpack.c.h.b16 %v717
    %v2029 = vunpack.c.l.b16 %v718
    %v2030 = vunpack.c.h.b16 %v718
    %v2031 = vunpack.c.l.b16 %v719
    %v2032 = vunpack.c.h.b16 %v719
    %v2033 = vunpack.c.l.b16 %v720
    %v2034 = vunpack.c.h.b16 %v720
    %v2035 = vunpack.c.l.b16 %v721
    %v2036 = vunpack.c.h.b16 %v721
    %v2037 = vunpack.c.l.b16 %v722
    %v2038 = vunpack.c.h.b16 %v722
    %v2039 = vunpack.c.l.b16 %v723
    %v2040 = vunpack.c.h.b16 %v723
    %v2041 = vunpack.c.l.b16 %v724
    %v2042 = vunpack.c.h.b16 %v724
    %v2043 = vunpack.c.l.b16 %v725
    %v2044 = vunpack.c.h.b16 %v725
    %v2045 = vunpack.c.l.b16 %v726
    %v2046 = vunpack.c.h.b16 %v726
    %v2047 = vunpack.c.l.b16 %v727
    %v2048 = vunpack.c.h.b16 %v727
    %v2049 = vunpack.c.l.b16 %v728
    %v2050 = vunpack.c.h.b16 %v728
    %v2051 = vunpack.c.l.b16 %v729
    %v2052 = vunpack.c.h.b16 %v729
    %v2053 = vunpack.c.l.b16 %v730
    %v2054 = vunpack.c.h.b16 %v730
    %v2055 = vunpack.c.l.b16 %v731
    %v2056 = vunpack.c.h.b16 %v731
    %v2057 = vunpack.c.l.b16 %v732
    %v2058 = vunpack.c.h.b16 %v732
    %v2059 = vunpack.c.l.b16 %v733
    %v2060 = vunpack.c.h.b16 %v733
    %v2061 = vunpack.c.l.b16 %v734
    %v2062 = vunpack.c.h.b16 %v734
    %v2063 = vunpack.c.l.b16 %v735
    %v2064 = vunpack.c.h.b16 %v735
    %v2065 = vunpack.c.l.b16 %v736
    %v2066 = vunpack.c.h.b16 %v736
    %v2067 = vunpack.c.l.b16 %v737
    %v2068 = vunpack.c.h.b16 %v737
    %v2069 = vunpack.c.l.b16 %v738
    %v2070 = vunpack.c.h.b16 %v738
    %v2071 = vunpack.c.l.b16 %v739
    %v2072 = vunpack.c.h.b16 %v739
    %v2073 = vunpack.c.l.b16 %v740
    %v2074 = vunpack.c.h.b16 %v740
    %v2075 = vunpack.c.l.b16 %v741
    %v2076 = vunpack.c.h.b16 %v741
    %v2077 = vunpack.c.l.b16 %v742
    %v2078 = vunpack.c.h.b16 %v742
    %v2079 = vunpack.c.l.b16 %v743
    %v2080 = vunpack.c.h.b16 %v743
    %v2081 = vunpack.c.l.b16 %v744
    %v2082 = vunpack.c.h.b16 %v744
    %v2083 = vunpack.c.l.b16 %v745
    %v2084 = vunpack.c.h.b16 %v745
    %v2085 = vunpack.c.l.b16 %v746
    %v2086 = vunpack.c.h.b16 %v746
    %v2087 = vunpack.c.l.b16 %v747
    %v2088 = vunpack.c.h.b16 %v747
    %v2089 = vunpack.c.l.b16 %v748
    %v2090 = vunpack.c.h.b16 %v748
    %v2091 = vunpack.c.l.b16 %v749
    %v2092 = vunpack.c.h.b16 %v749
    %v2093 = vunpack.c.l.b16 %v750
    %v2094 = vunpack.c.h.b16 %v750
    %v2095 = vunpack.c.l.b16 %v751
    %v2096 = vunpack.c.h.b16 %v751
    %v2097 = vunpack.c.l.b16 %v752
    %v2098 = vunpack.c.h.b16 %v752
    %v2099 = vunpack.c.l.b16 %v753
    %v2100 = vunpack.c.h.b16 %v753
    %v2101 = vunpack.c.l.b16 %v754
    %v2102 = vunpack.c.h.b16 %v754
    %v2103 = vunpack.c.l.b16 %v755
    %v2104 = vunpack.c.h.b16 %v755
    %v2105 = vunpack.c.l.b16 %v756
    %v2106 = vunpack.c.h.b16 %v756
    %v2107 = vunpack.c.l.b16 %v757
    %v2108 = vunpack.c.h.b16 %v757
    %v2109 = vunpack.c.l.b16 %v758
    %v2110 = vunpack.c.h.b16 %v758
    %v2111 = vunpack.c.l.b16 %v759
    %v2112 = vunpack.c.h.b16 %v759
    %v2113 = vunpack.c.l.b16 %v760
    %v2114 = vunpack.c.h.b16 %v760
    %v2115 = vunpack.c.l.b16 %v761
    %v2116 = vunpack.c.h.b16 %v761
    %v2117 = vunpack.c.l.b16 %v762
    %v2118 = vunpack.c.h.b16 %v762
    %v2119 = vunpack.c.l.b16 %v763
    %v2120 = vunpack.c.h.b16 %v763
    %v2121 = vunpack.c.l.b16 %v764
    %v2122 = vunpack.c.h.b16 %v764
    %v2123 = vunpack.c.l.b16 %v765
    %v2124 = vunpack.c.h.b16 %v765
    %v2125 = vunpack.c.l.b16 %v766
    %v2126 = vunpack.c.h.b16 %v766
    %v2127 = vunpack.c.l.b16 %v767
    %v2128 = vunpack.c.h.b16 %v767
    %v2129 = vunpack.c.l.b16 %v768
    %v2130 = vunpack.c.h.b16 %v768
    %v2131 = vunpack.c.l.b16 %v769
    %v2132 = vunpack.c.h.b16 %v769
    %v2133 = vunpack.c.l.b16 %v770
    %v2134 = vunpack.c.h.b16 %v770
    %v2135 = vunpack.c.l.b16 %v771
    %v2136 = vunpack.c.h.b16 %v771
    %v2137 = vunpack.c.l.b16 %v772
    %v2138 = vunpack.c.h.b16 %v772
    %v2139 = vunpack.c.l.b16 %v773
    %v2140 = vunpack.c.h.b16 %v773
    %v2141 = vunpack.c.l.b16 %v774
    %v2142 = vunpack.c.h.b16 %v774
    %v2143 = vunpack.c.l.b16 %v775
    %v2144 = vunpack.c.h.b16 %v775
    %v2145 = vunpack.c.l.b16 %v776
    %v2146 = vunpack.c.h.b16 %v776
    %v2147 = vunpack.c.l.b16 %v777
    %v2148 = vunpack.c.h.b16 %v777
    %v2149 = vunpack.c.l.b16 %v778
    %v2150 = vunpack.c.h.b16 %v778
    %v2151 = vunpack.c.l.b16 %v779
    %v2152 = vunpack.c.h.b16 %v779
    %v2153 = vunpack.c.l.b16 %v780
    %v2154 = vunpack.c.h.b16 %v780
    %v2155 = vunpack.c.l.b16 %v781
    %v2156 = vunpack.c.h.b16 %v781
    %v2157 = vunpack.c.l.b16 %v782
    %v2158 = vunpack.c.h.b16 %v782
    %v2159 = vunpack.c.l.b16 %v783
    %v2160 = vunpack.c.h.b16 %v783
    %v2161 = vunpack.c.l.b16 %v784
    %v2162 = vunpack.c.h.b16 %v784
    %v2163 = vunpack.c.l.b16 %v785
    %v2164 = vunpack.c.h.b16 %v785
    %v2165 = vunpack.c.l.b16 %v786
    %v2166 = vunpack.c.h.b16 %v786
    %v2167 = vunpack.c.l.b16 %v787
    %v2168 = vunpack.c.h.b16 %v787
    %v2169 = vunpack.c.l.b16 %v788
    %v2170 = vunpack.c.h.b16 %v788
    %v2171 = vunpack.c.l.b16 %v789
    %v2172 = vunpack.c.h.b16 %v789
    %v2173 = vunpack.c.l.b16 %v790
    %v2174 = vunpack.c.h.b16 %v790
    %v2175 = vunpack.c.l.b16 %v791
    %v2176 = vunpack.c.h.b16 %v791
    %v2177 = vunpack.c.l.b16 %v792
    %v2178 = vunpack.c.h.b16 %v792
    %v2179 = vunpack.c.l.b16 %v793
    %v2180 = vunpack.c.h.b16 %v793
    %v2181 = vunpack.c.l.b16 %v794
    %v2182 = vunpack.c.h.b16 %v794
    %v2183 = vunpack.c.l.b16 %v795
    %v2184 = vunpack.c.h.b16 %v795
    %v2185 = vunpack.c.l.b16 %v796
    %v2186 = vunpack.c.h.b16 %v796
    %v2187 = vunpack.c.l.b16 %v797
    %v2188 = vunpack.c.h.b16 %v797
    %v2189 = vunpack.c.l.b16 %v798
    %v2190 = vunpack.c.h.b16 %v798
    %v2191 = vunpack.c.l.b16 %v799
    %v2192 = vunpack.c.h.b16 %v799
    %v2193 = vunpack.c.l.b16 %v800
    %v2194 = vunpack.c.h.b16 %v800
    %v2195 = vunpack.c.l.b16 %v801
    %v2196 = vunpack.c.h.b16 %v801
    %v2197 = vunpack.c.l.b16 %v802
    %v2198 = vunpack.c.h.b16 %v802
    %v2199 = vunpack.c.l.b16 %v803
    %v2200 = vunpack.c.h.b16 %v803
    %v2201 = vunpack.c.l.b16 %v804
    %v2202 = vunpack.c.h.b16 %v804
    %v2203 = vunpack.c.l.b16 %v805
    %v2204 = vunpack.c.h.b16 %v805
    %v2205 = vunpack.c.l.b16 %v806
    %v2206 = vunpack.c.h.b16 %v806
    %v2207 = vunpack.c.l.b16 %v807
    %v2208 = vunpack.c.h.b16 %v807
    %v2209 = vunpack.c.l.b16 %v808
    %v2210 = vunpack.c.h.b16 %v808
    %v2211 = vunpack.c.l.b16 %v809
    %v2212 = vunpack.c.h.b16 %v809
    %v2213 = vunpack.c.l.b16 %v810
    %v2214 = vunpack.c.h.b16 %v810
    %v2215 = vunpack.c.l.b16 %v811
    %v2216 = vunpack.c.h.b16 %v811
    %v2217 = vunpack.c.l.b16 %v812
    %v2218 = vunpack.c.h.b16 %v812
    %v2219 = vunpack.c.l.b16 %v813
    %v2220 = vunpack.c.h.b16 %v813
    %v2221 = vunpack.c.l.b16 %v814
    %v2222 = vunpack.c.h.b16 %v814
    %v2223 = vunpack.c.l.b16 %v815
    %v2224 = vunpack.c.h.b16 %v815
    %v2225 = vunpack.c.l.b16 %v816
    %v2226 = vunpack.c.h.b16 %v816
    %v2227 = vunpack.c.l.b16 %v817
    %v2228 = vunpack.c.h.b16 %v817
    %v2229 = vunpack.c.l.b16 %v818
    %v2230 = vunpack.c.h.b16 %v818
    %v2231 = vunpack.c.l.b16 %v819
    %v2232 = vunpack.c.h.b16 %v819
    %v2233 = vunpack.c.l.b16 %v820
    %v2234 = vunpack.c.h.b16 %v820
    %v2235 = vunpack.c.l.b16 %v821
    %v2236 = vunpack.c.h.b16 %v821
    %v2237 = vunpack.c.l.b16 %v822
    %v2238 = vunpack.c.h.b16 %v822
    %v2239 = vunpack.c.l.b16 %v823
    %v2240 = vunpack.c.h.b16 %v823
    %v2241 = vunpack.c.l.b16 %v824
    %v2242 = vunpack.c.h.b16 %v824
    %v2243 = vunpack.c.l.b16 %v825
    %v2244 = vunpack.c.h.b16 %v825
    %v2245 = vunpack.c.l.b16 %v826
    %v2246 = vunpack.c.h.b16 %v826
    %v2247 = vunpack.c.l.b16 %v827
    %v2248 = vunpack.c.h.b16 %v827
    %v2249 = vunpack.c.l.b16 %v828
    %v2250 = vunpack.c.h.b16 %v828
    %v2251 = vunpack.c.l.b16 %v829
    %v2252 = vunpack.c.h.b16 %v829
    %v2253 = vunpack.c.l.b16 %v830
    %v2254 = vunpack.c.h.b16 %v830
    %v2255 = vunpack.c.l.b16 %v831
    %v2256 = vunpack.c.h.b16 %v831
    %v2257 = vunpack.c.l.b16 %v832
    %v2258 = vunpack.c.h.b16 %v832
    %v2259 = vunpack.c.l.b16 %v833
    %v2260 = vunpack.c.h.b16 %v833
    %v2261 = vunpack.c.l.b16 %v834
    %v2262 = vunpack.c.h.b16 %v834
    %v2263 = vunpack.c.l.b16 %v835
    %v2264 = vunpack.c.h.b16 %v835
    %v2265 = vunpack.c.l.b16 %v836
    %v2266 = vunpack.c.h.b16 %v836
    %v2267 = vunpack.c.l.b16 %v837
    %v2268 = vunpack.c.h.b16 %v837
    %v2269 = vunpack.c.l.b16 %v838
    %v2270 = vunpack.c.h.b16 %v838
    %v2271 = vunpack.c.l.b16 %v839
    %v2272 = vunpack.c.h.b16 %v839
    %v2273 = vunpack.c.l.b16 %v840
    %v2274 = vunpack.c.h.b16 %v840
    %v2275 = vunpack.c.l.b16 %v841
    %v2276 = vunpack.c.h.b16 %v841
    %v2277 = vunpack.c.l.b16 %v842
    %v2278 = vunpack.c.h.b16 %v842
    %v2279 = vunpack.c.l.b16 %v843
    %v2280 = vunpack.c.h.b16 %v843
    %v2281 = vunpack.c.l.b16 %v844
    %v2282 = vunpack.c.h.b16 %v844
    %v2283 = vunpack.c.l.b16 %v845
    %v2284 = vunpack.c.h.b16 %v845
    %v2285 = vunpack.c.l.b16 %v846
    %v2286 = vunpack.c.h.b16 %v846
    %v2287 = vunpack.c.l.b16 %v847
    %v2288 = vunpack.c.h.b16 %v847
    %v2289 = vunpack.c.l.b16 %v848
    %v2290 = vunpack.c.h.b16 %v848
    %v2291 = vunpack.c.l.b16 %v849
    %v2292 = vunpack.c.h.b16 %v849
    %v2293 = vunpack.c.l.b16 %v850
    %v2294 = vunpack.c.h.b16 %v850
    %v2295 = vunpack.c.l.b16 %v851
    %v2296 = vunpack.c.h.b16 %v851
    %v2297 = vunpack.c.l.b16 %v852
    %v2298 = vunpack.c.h.b16 %v852
    %v2299 = vunpack.c.l.b16 %v853
    %v2300 = vunpack.c.h.b16 %v853
    %v2301 = vunpack.c.l.b16 %v854
    %v2302 = vunpack.c.h.b16 %v854
    %v2303 = vunpack.c.l.b16 %v855
    %v2304 = vunpack.c.h.b16 %v855
    %v2305 = vunpack.c.l.b16 %v856
    %v2306 = vunpack.c.h.b16 %v856
    %v2307 = vunpack.c.l.b16 %v857
    %v2308 = vunpack.c.h.b16 %v857
    %v2309 = vunpack.c.l.b16 %v858
    %v2310 = vunpack.c.h.b16 %v858
    %v2311 = vunpack.c.l.b16 %v859
    %v2312 = vunpack.c.h.b16 %v859
    %v2313 = vunpack.c.l.b16 %v860
    %v2314 = vunpack.c.h.b16 %v860
    %v2315 = vunpack.c.l.b16 %v861
    %v2316 = vunpack.c.h.b16 %v861
    %v2317 = vunpack.c.l.b16 %v862
    %v2318 = vunpack.c.h.b16 %v862
    %v2319 = vunpack.c.l.b16 %v863
    %v2320 = vunpack.c.h.b16 %v863
    %v2321 = vunpack.c.l.b16 %v864
    %v2322 = vunpack.c.h.b16 %v864
    %v2323 = vunpack.c.l.b16 %v865
    %v2324 = vunpack.c.h.b16 %v865
    %v2325 = vunpack.c.l.b16 %v866
    %v2326 = vunpack.c.h.b16 %v866
    %v2327 = vunpack.c.l.b16 %v867
    %v2328 = vunpack.c.h.b16 %v867
    %v2329 = vunpack.c.l.b16 %v868
    %v2330 = vunpack.c.h.b16 %v868
    %v2331 = vunpack.c.l.b16 %v869
    %v2332 = vunpack.c.h.b16 %v869
    %v2333 = vunpack.c.l.b16 %v870
    %v2334 = vunpack.c.h.b16 %v870
    %v2335 = vunpack.c.l.b16 %v871
    %v2336 = vunpack.c.h.b16 %v871
    %v2337 = vunpack.c.l.b16 %v872
    %v2338 = vunpack.c.h.b16 %v872
    %v2339 = vunpack.c.l.b16 %v873
    %v2340 = vunpack.c.h.b16 %v873
    %v2341 = vunpack.c.l.b16 %v874
    %v2342 = vunpack.c.h.b16 %v874
    %v2343 = vunpack.c.l.b16 %v875
    %v2344 = vunpack.c.h.b16 %v875
    %v2345 = vunpack.c.l.b16 %v876
    %v2346 = vunpack.c.h.b16 %v876
    %v2347 = vunpack.c.l.b16 %v877
    %v2348 = vunpack.c.h.b16 %v877
    %v2349 = vunpack.c.l.b16 %v878
    %v2350 = vunpack.c.h.b16 %v878
    %v2351 = vunpack.c.l.b16 %v879
    %v2352 = vunpack.c.h.b16 %v879
    %v2353 = vunpack.c.l.b16 %v880
    %v2354 = vunpack.c.h.b16 %v880
    %v2355 = vunpack.c.l.b16 %v881
    %v2356 = vunpack.c.h.b16 %v881
    %v2357 = vunpack.c.l.b16 %v882
    %v2358 = vunpack.c.h.b16 %v882
    %v2359 = vunpack.c.l.b16 %v883
    %v2360 = vunpack.c.h.b16 %v883
    %v2361 = vunpack.c.l.b16 %v884
    %v2362 = vunpack.c.h.b16 %v884
    %v2363 = vunpack.c.l.b16 %v885
    %v2364 = vunpack.c.h.b16 %v885
    %v2365 = vunpack.c.l.b16 %v886
    %v2366 = vunpack.c.h.b16 %v886
    %v2367 = vunpack.c.l.b16 %v887
    %v2368 = vunpack.c.h.b16 %v887
    %v2369 = vunpack.c.l.b16 %v888
    %v2370 = vunpack.c.h.b16 %v888
    %v2371 = vunpack.c.l.b16 %v889
    %v2372 = vunpack.c.h.b16 %v889
    %v2373 = vunpack.c.l.b16 %v890
    %v2374 = vunpack.c.h.b16 %v890
    %v2375 = vunpack.c.l.b16 %v891
    %v2376 = vunpack.c.h.b16 %v891
    %v2377 = vunpack.c.l.b16 %v892
    %v2378 = vunpack.c.h.b16 %v892
    %v2379 = vunpack.c.l.b16 %v893
    %v2380 = vunpack.c.h.b16 %v893
    %v2381 = vunpack.c.l.b16 %v894
    %v2382 = vunpack.c.h.b16 %v894
    %v2383 = vunpack.c.l.b16 %v895
    %v2384 = vunpack.c.h.b16 %v895
    %v2385 = vunpack.c.l.b16 %v896
    %v2386 = vunpack.c.h.b16 %v896
    %v2387 = vunpack.c.l.b16 %v897
    %v2388 = vunpack.c.h.b16 %v897
    %v2389 = vunpack.c.l.b16 %v898
    %v2390 = vunpack.c.h.b16 %v898
    %v2391 = vunpack.c.l.b16 %v899
    %v2392 = vunpack.c.h.b16 %v899
    %v2393 = vunpack.c.l.b16 %v900
    %v2394 = vunpack.c.h.b16 %v900
    %v2395 = vunpack.c.l.b16 %v901
    %v2396 = vunpack.c.h.b16 %v901
    %v2397 = vunpack.c.l.b16 %v902
    %v2398 = vunpack.c.h.b16 %v902
    %v2399 = vunpack.c.l.b16 %v903
    %v2400 = vunpack.c.h.b16 %v903
    %v2401 = vunpack.c.l.b16 %v904
    %v2402 = vunpack.c.h.b16 %v904
    %v2403 = vunpack.c.l.b16 %v905
    %v2404 = vunpack.c.h.b16 %v905
    %v2405 = vunpack.c.l.b16 %v906
    %v2406 = vunpack.c.h.b16 %v906
    %v2407 = vunpack.c.l.b16 %v907
    %v2408 = vunpack.c.h.b16 %v907
    %v2409 = vunpack.c.l.b16 %v908
    %v2410 = vunpack.c.h.b16 %v908
    %v2411 = vunpack.c.l.b16 %v909
    %v2412 = vunpack.c.h.b16 %v909
    %v2413 = vunpack.c.l.b16 %v910
    %v2414 = vunpack.c.h.b16 %v910
    %v2415 = vunpack.c.l.b16 %v911
    %v2416 = vunpack.c.h.b16 %v911
    %v2417 = vunpack.c.l.b16 %v912
    %v2418 = vunpack.c.h.b16 %v912
    %v2419 = vunpack.c.l.b16 %v913
    %v2420 = vunpack.c.h.b16 %v913
    %v2421 = vunpack.c.l.b16 %v914
    %v2422 = vunpack.c.h.b16 %v914
    %v2423 = vunpack.c.l.b16 %v915
    %v2424 = vunpack.c.h.b16 %v915
    %v2425 = vunpack.c.l.b16 %v916
    %v2426 = vunpack.c.h.b16 %v916
    %v2427 = vunpack.c.l.b16 %v917
    %v2428 = vunpack.c.h.b16 %v917
    %v2429 = vunpack.c.l.b16 %v918
    %v2430 = vunpack.c.h.b16 %v918
    %v2431 = vunpack.c.l.b16 %v919
    %v2432 = vunpack.c.h.b16 %v919
    %v2433 = vunpack.c.l.b16 %v920
    %v2434 = vunpack.c.h.b16 %v920
    %v2435 = vunpack.c.l.b16 %v921
    %v2436 = vunpack.c.h.b16 %v921
    %v2437 = vunpack.c.l.b16 %v922
    %v2438 = vunpack.c.h.b16 %v922
    %v2439 = vunpack.c.l.b16 %v923
    %v2440 = vunpack.c.h.b16 %v923
    %v2441 = vunpack.c.l.b16 %v924
    %v2442 = vunpack.c.h.b16 %v924
    %v2443 = vunpack.c.l.b16 %v925
    %v2444 = vunpack.c.h.b16 %v925
    %v2445 = vunpack.c.l.b16 %v926
    %v2446 = vunpack.c.h.b16 %v926
    %v2447 = vunpack.c.l.b16 %v927
    %v2448 = vunpack.c.h.b16 %v927
    %v2449 = vunpack.c.l.b16 %v928
    %v2450 = vunpack.c.h.b16 %v928
    %v2451 = vunpack.c.l.b16 %v929
    %v2452 = vunpack.c.h.b16 %v929
    %v2453 = vunpack.c.l.b16 %v930
    %v2454 = vunpack.c.h.b16 %v930
    %v2455 = vunpack.c.l.b16 %v931
    %v2456 = vunpack.c.h.b16 %v931
    %v2457 = vunpack.c.l.b16 %v932
    %v2458 = vunpack.c.h.b16 %v932
    %v2459 = vunpack.c.l.b16 %v933
    %v2460 = vunpack.c.h.b16 %v933
    %v2461 = vunpack.c.l.b16 %v934
    %v2462 = vunpack.c.h.b16 %v934
    %v2463 = vunpack.c.l.b16 %v935
    %v2464 = vunpack.c.h.b16 %v935
    %v2465 = vunpack.c.l.b16 %v936
    %v2466 = vunpack.c.h.b16 %v936
    %v2467 = vunpack.c.l.b16 %v937
    %v2468 = vunpack.c.h.b16 %v937
    %v2469 = vunpack.c.l.b16 %v938
    %v2470 = vunpack.c.h.b16 %v938
    %v2471 = vunpack.c.l.b16 %v939
    %v2472 = vunpack.c.h.b16 %v939
    %v2473 = vunpack.c.l.b16 %v940
    %v2474 = vunpack.c.h.b16 %v940
    %v2475 = vunpack.c.l.b16 %v941
    %v2476 = vunpack.c.h.b16 %v941
    %v2477 = vunpack.c.l.b16 %v942
    %v2478 = vunpack.c.h.b16 %v942
    %v2479 = vunpack.c.l.b16 %v943
    %v2480 = vunpack.c.h.b16 %v943
    %v2481 = vunpack.c.l.b16 %v944
    %v2482 = vunpack.c.h.b16 %v944
    %v2483 = vunpack.c.l.b16 %v945
    %v2484 = vunpack.c.h.b16 %v945
    %v2485 = vunpack.c.l.b16 %v946
    %v2486 = vunpack.c.h.b16 %v946
    %v2487 = vunpack.c.l.b16 %v947
    %v2488 = vunpack.c.h.b16 %v947
    %v2489 = vunpack.c.l.b16 %v948
    %v2490 = vunpack.c.h.b16 %v948
    %v2491 = vunpack.c.l.b16 %v949
    %v2492 = vunpack.c.h.b16 %v949
    %v2493 = vunpack.c.l.b16 %v950
    %v2494 = vunpack.c.h.b16 %v950
    %v2495 = vunpack.c.l.b16 %v951
    %v2496 = vunpack.c.h.b16 %v951
    %v2497 = vunpack.c.l.b16 %v952
    %v2498 = vunpack.c.h.b16 %v952
    %v2499 = vunpack.c.l.b16 %v953
    %v2500 = vunpack.c.h.b16 %v953
    %v2501 = vunpack.c.l.b16 %v954
    %v2502 = vunpack.c.h.b16 %v954
    %v2503 = vunpack.c.l.b16 %v955
    %v2504 = vunpack.c.h.b16 %v955
    %v2505 = vunpack.c.l.b16 %v956
    %v2506 = vunpack.c.h.b16 %v956
    %v2507 = vunpack.c.l.b16 %v957
    %v2508 = vunpack.c.h.b16 %v957
    %v2509 = vunpack.c.l.b16 %v958
    %v2510 = vunpack.c.h.b16 %v958
    %v2511 = vunpack.c.l.b16 %v959
    %v2512 = vunpack.c.h.b16 %v959
    %v2513 = vunpack.c.l.b16 %v960
    %v2514 = vunpack.c.h.b16 %v960
    %v2515 = vunpack.c.l.b16 %v961
    %v2516 = vunpack.c.h.b16 %v961
    %v2517 = vunpack.c.l.b16 %v962
    %v2518 = vunpack.c.h.b16 %v962
    %v2519 = vunpack.c.l.b16 %v963
    %v2520 = vunpack.c.h.b16 %v963
    %v2521 = vunpack.c.l.b16 %v964
    %v2522 = vunpack.c.h.b16 %v964
    %v2523 = vunpack.c.l.b16 %v965
    %v2524 = vunpack.c.h.b16 %v965
    %v2525 = vunpack.c.l.b16 %v966
    %v2526 = vunpack.c.h.b16 %v966
    %v2527 = vunpack.c.l.b16 %v967
    %v2528 = vunpack.c.h.b16 %v967
    %v2529 = vunpack.c.l.b16 %v968
    %v2530 = vunpack.c.h.b16 %v968
    %v2531 = vunpack.c.l.b16 %v969
    %v2532 = vunpack.c.h.b16 %v969
    %v2533 = vunpack.c.l.b16 %v970
    %v2534 = vunpack.c.h.b16 %v970
    %v2535 = vunpack.c.l.b16 %v971
    %v2536 = vunpack.c.h.b16 %v971
    %v2537 = vunpack.c.l.b16 %v972
    %v2538 = vunpack.c.h.b16 %v972
    %v2539 = vunpack.c.l.b16 %v973
    %v2540 = vunpack.c.h.b16 %v973
    %v2541 = vunpack.c.l.b16 %v974
    %v2542 = vunpack.c.h.b16 %v974
    %v2543 = vunpack.c.l.b16 %v975
    %v2544 = vunpack.c.h.b16 %v975
    %v2545 = vunpack.c.l.b16 %v976
    %v2546 = vunpack.c.h.b16 %v976
    %v2547 = vunpack.c.l.b16 %v977
    %v2548 = vunpack.c.h.b16 %v977
    %v2549 = vunpack.c.l.b16 %v978
    %v2550 = vunpack.c.h.b16 %v978
    %v2551 = vunpack.c.l.b16 %v979
    %v2552 = vunpack.c.h.b16 %v979
    %v2553 = vunpack.c.l.b16 %v980
    %v2554 = vunpack.c.h.b16 %v980
    %v2555 = vunpack.c.l.b16 %v981
    %v2556 = vunpack.c.h.b16 %v981
    %v2557 = vunpack.c.l.b16 %v982
    %v2558 = vunpack.c.h.b16 %v982
    %v2559 = vunpack.c.l.b16 %v983
    %v2560 = vunpack.c.h.b16 %v983
    %v2561 = vunpack.c.l.b16 %v984
    %v2562 = vunpack.c.h.b16 %v984
    %v2563 = vpack.c.b16 %v1547, %v1539
    %v2564 = vpack.c.b16 %v1548, %v1540
    %v2565 = vpack.c.b16 %v1549, %v1541
    %v2566 = vpack.c.b16 %v1550, %v1542
    %v2567 = vpack.c.b16 %v1551, %v1543
    %v2568 = vpack.c.b16 %v1552, %v1544
    %v2569 = vpack.c.b16 %v1553, %v1545
    %v2570 = vpack.c.b16 %v1554, %v1546
    %v2571 = vpack.c.b16 %v1563, %v1555
    %v2572 = vpack.c.b16 %v1564, %v1556
    %v2573 = vpack.c.b16 %v1565, %v1557
    %v2574 = vpack.c.b16 %v1566, %v1558
    %v2575 = vpack.c.b16 %v1567, %v1559
    %v2576 = vpack.c.b16 %v1568, %v1560
    %v2577 = vpack.c.b16 %v1569, %v1561
    %v2578 = vpack.c.b16 %v1570, %v1562
    %v2579 = vpack.c.b16 %v1579, %v1571
    %v2580 = vpack.c.b16 %v1580, %v1572
    %v2581 = vpack.c.b16 %v1581, %v1573
    %v2582 = vpack.c.b16 %v1582, %v1574
    %v2583 = vpack.c.b16 %v1583, %v1575
    %v2584 = vpack.c.b16 %v1584, %v1576
    %v2585 = vpack.c.b16 %v1585, %v1577
    %v2586 = vpack.c.b16 %v1586, %v1578
    %v2587 = vpack.c.b16 %v1595, %v1587
    %v2588 = vpack.c.b16 %v1596, %v1588
    %v2589 = vpack.c.b16 %v1597, %v1589
    %v2590 = vpack.c.b16 %v1598, %v1590
    %v2591 = vpack.c.b16 %v1599, %v1591
    %v2592 = vpack.c.b16 %v1600, %v1592
    %v2593 = vpack.c.b16 %v1601, %v1593
    %v2594 = vpack.c.b16 %v1602, %v1594
    %v2595 = vpack.c.b16 %v1611, %v1603
    %v2596 = vpack.c.b16 %v1612, %v1604
    %v2597 = vpack.c.b16 %v1613, %v1605
    %v2598 = vpack.c.b16 %v1614, %v1606
    %v2599 = vpack.c.b16 %v1615, %v1607
    %v2600 = vpack.c.b16 %v1616, %v1608
    %v2601 = vpack.c.b16 %v1617, %v1609
    %v2602 = vpack.c.b16 %v1618, %v1610
    %v2603 = vpack.c.b16 %v1627, %v1619
    %v2604 = vpack.c.b16 %v1628, %v1620
    %v2605 = vpack.c.b16 %v1629, %v1621
    %v2606 = vpack.c.b16 %v1630, %v1622
    %v2607 = vpack.c.b16 %v1631, %v1623
    %v2608 = vpack.c.b16 %v1632, %v1624
    %v2609 = vpack.c.b16 %v1633, %v1625
    %v2610 = vpack.c.b16 %v1634, %v1626
    %v2611 = vpack.c.b16 %v1643, %v1635
    %v2612 = vpack.c.b16 %v1644, %v1636
    %v2613 = vpack.c.b16 %v1645, %v1637
    %v2614 = vpack.c.b16 %v1646, %v1638
    %v2615 = vpack.c.b16 %v1647, %v1639
    %v2616 = vpack.c.b16 %v1648, %v1640
    %v2617 = vpack.c.b16 %v1649, %v1641
    %v2618 = vpack.c.b16 %v1650, %v1642
    %v2619 = vpack.c.b16 %v1659, %v1651
    %v2620 = vpack.c.b16 %v1660, %v1652
    %v2621 = vpack.c.b16 %v1661, %v1653
    %v2622 = vpack.c.b16 %v1662, %v1654
    %v2623 = vpack.c.b16 %v1663, %v1655
    %v2624 = vpack.c.b16 %v1664, %v1656
    %v2625 = vpack.c.b16 %v1665, %v1657
    %v2626 = vpack.c.b16 %v1666, %v1658
    %v2627 = vpack.c.b16 %v1675, %v1667
    %v2628 = vpack.c.b16 %v1676, %v1668
    %v2629 = vpack.c.b16 %v1677, %v1669
    %v2630 = vpack.c.b16 %v1678, %v1670
    %v2631 = vpack.c.b16 %v1679, %v1671
    %v2632 = vpack.c.b16 %v1680, %v1672
    %v2633 = vpack.c.b16 %v1681, %v1673
    %v2634 = vpack.c.b16 %v1682, %v1674
    %v2635 = vpack.c.b16 %v1691, %v1683
    %v2636 = vpack.c.b16 %v1692, %v1684
    %v2637 = vpack.c.b16 %v1693, %v1685
    %v2638 = vpack.c.b16 %v1694, %v1686
    %v2639 = vpack.c.b16 %v1695, %v1687
    %v2640 = vpack.c.b16 %v1696, %v1688
    %v2641 = vpack.c.b16 %v1697, %v1689
    %v2642 = vpack.c.b16 %v1698, %v1690
    %v2643 = vpack.c.b16 %v1707, %v1699
    %v2644 = vpack.c.b16 %v1708, %v1700
    %v2645 = vpack.c.b16 %v1709, %v1701
    %v2646 = vpack.c.b16 %v1710, %v1702
    %v2647 = vpack.c.b16 %v1711, %v1703
    %v2648 = vpack.c.b16 %v1712, %v1704
    %v2649 = vpack.c.b16 %v1713, %v1705
    %v2650 = vpack.c.b16 %v1714, %v1706
    %v2651 = vpack.c.b16 %v1723, %v1715
    %v2652 = vpack.c.b16 %v1724, %v1716
    %v2653 = vpack.c.b16 %v1725, %v1717
    %v2654 = vpack.c.b16 %v1726, %v1718
    %v2655 = vpack.c.b16 %v1727, %v1719
    %v2656 = vpack.c.b16 %v1728, %v1720
    %v2657 = vpack.c.b16 %v1729, %v1721
    %v2658 = vpack.c.b16 %v1730, %v1722
    %v2659 = vpack.c.b16 %v1739, %v1731
    %v2660 = vpack.c.b16 %v1740, %v1732
    %v2661 = vpack.c.b16 %v1741, %v1733
    %v2662 = vpack.c.b16 %v1742, %v1734
    %v2663 = vpack.c.b16 %v1743, %v1735
    %v2664 = vpack.c.b16 %v1744, %v1736
    %v2665 = vpack.c.b16 %v1745, %v1737
    %v2666 = vpack.c.b16 %v1746, %v1738
    %v2667 = vpack.c.b16 %v1755, %v1747
    %v2668 = vpack.c.b16 %v1756, %v1748
    %v2669 = vpack.c.b16 %v1757, %v1749
    %v2670 = vpack.c.b16 %v1758, %v1750
    %v2671 = vpack.c.b16 %v1759, %v1751
    %v2672 = vpack.c.b16 %v1760, %v1752
    %v2673 = vpack.c.b16 %v1761, %v1753
    %v2674 = vpack.c.b16 %v1762, %v1754
    %v2675 = vpack.c.b16 %v1771, %v1763
    %v2676 = vpack.c.b16 %v1772, %v1764
    %v2677 = vpack.c.b16 %v1773, %v1765
    %v2678 = vpack.c.b16 %v1774, %v1766
    %v2679 = vpack.c.b16 %v1775, %v1767
    %v2680 = vpack.c.b16 %v1776, %v1768
    %v2681 = vpack.c.b16 %v1777, %v1769
    %v2682 = vpack.c.b16 %v1778, %v1770
    %v2683 = vpack.c.b16 %v1787, %v1779
    %v2684 = vpack.c.b16 %v1788, %v1780
    %v2685 = vpack.c.b16 %v1789, %v1781
    %v2686 = vpack.c.b16 %v1790, %v1782
    %v2687 = vpack.c.b16 %v1791, %v1783
    %v2688 = vpack.c.b16 %v1792, %v1784
    %v2689 = vpack.c.b16 %v1793, %v1785
    %v2690 = vpack.c.b16 %v1794, %v1786
    %v2691 = vpack.c.b16 %v1803, %v1795
    %v2692 = vpack.c.b16 %v1804, %v1796
    %v2693 = vpack.c.b16 %v1805, %v1797
    %v2694 = vpack.c.b16 %v1806, %v1798
    %v2695 = vpack.c.b16 %v1807, %v1799
    %v2696 = vpack.c.b16 %v1808, %v1800
    %v2697 = vpack.c.b16 %v1809, %v1801
    %v2698 = vpack.c.b16 %v1810, %v1802
    %v2699 = vpack.c.b16 %v1819, %v1811
    %v2700 = vpack.c.b16 %v1820, %v1812
    %v2701 = vpack.c.b16 %v1821, %v1813
    %v2702 = vpack.c.b16 %v1822, %v1814
    %v2703 = vpack.c.b16 %v1823, %v1815
    %v2704 = vpack.c.b16 %v1824, %v1816
    %v2705 = vpack.c.b16 %v1825, %v1817
    %v2706 = vpack.c.b16 %v1826, %v1818
    %v2707 = vpack.c.b16 %v1835, %v1827
    %v2708 = vpack.c.b16 %v1836, %v1828
    %v2709 = vpack.c.b16 %v1837, %v1829
    %v2710 = vpack.c.b16 %v1838, %v1830
    %v2711 = vpack.c.b16 %v1839, %v1831
    %v2712 = vpack.c.b16 %v1840, %v1832
    %v2713 = vpack.c.b16 %v1841, %v1833
    %v2714 = vpack.c.b16 %v1842, %v1834
    %v2715 = vpack.c.b16 %v1851, %v1843
    %v2716 = vpack.c.b16 %v1852, %v1844
    %v2717 = vpack.c.b16 %v1853, %v1845
    %v2718 = vpack.c.b16 %v1854, %v1846
    %v2719 = vpack.c.b16 %v1855, %v1847
    %v2720 = vpack.c.b16 %v1856, %v1848
    %v2721 = vpack.c.b16 %v1857, %v1849
    %v2722 = vpack.c.b16 %v1858, %v1850
    %v2723 = vpack.c.b16 %v1867, %v1859
    %v2724 = vpack.c.b16 %v1868, %v1860
    %v2725 = vpack.c.b16 %v1869, %v1861
    %v2726 = vpack.c.b16 %v1870, %v1862
    %v2727 = vpack.c.b16 %v1871, %v1863
    %v2728 = vpack.c.b16 %v1872, %v1864
    %v2729 = vpack.c.b16 %v1873, %v1865
    %v2730 = vpack.c.b16 %v1874, %v1866
    %v2731 = vpack.c.b16 %v1883, %v1875
    %v2732 = vpack.c.b16 %v1884, %v1876
    %v2733 = vpack.c.b16 %v1885, %v1877
    %v2734 = vpack.c.b16 %v1886, %v1878
    %v2735 = vpack.c.b16 %v1887, %v1879
    %v2736 = vpack.c.b16 %v1888, %v1880
    %v2737 = vpack.c.b16 %v1889, %v1881
    %v2738 = vpack.c.b16 %v1890, %v1882
    %v2739 = vpack.c.b16 %v1899, %v1891
    %v2740 = vpack.c.b16 %v1900, %v1892
    %v2741 = vpack.c.b16 %v1901, %v1893
    %v2742 = vpack.c.b16 %v1902, %v1894
    %v2743 = vpack.c.b16 %v1903, %v1895
    %v2744 = vpack.c.b16 %v1904, %v1896
    %v2745 = vpack.c.b16 %v1905, %v1897
    %v2746 = vpack.c.b16 %v1906, %v1898
    %v2747 = vpack.c.b16 %v1915, %v1907
    %v2748 = vpack.c.b16 %v1916, %v1908
    %v2749 = vpack.c.b16 %v1917, %v1909
    %v2750 = vpack.c.b16 %v1918, %v1910
    %v2751 = vpack.c.b16 %v1919, %v1911
    %v2752 = vpack.c.b16 %v1920, %v1912
    %v2753 = vpack.c.b16 %v1921, %v1913
    %v2754 = vpack.c.b16 %v1922, %v1914
    %v2755 = vpack.c.b16 %v1931, %v1923
    %v2756 = vpack.c.b16 %v1932, %v1924
    %v2757 = vpack.c.b16 %v1933, %v1925
    %v2758 = vpack.c.b16 %v1934, %v1926
    %v2759 = vpack.c.b16 %v1935, %v1927
    %v2760 = vpack.c.b16 %v1936, %v1928
    %v2761 = vpack.c.b16 %v1937, %v1929
    %v2762 = vpack.c.b16 %v1938, %v1930
    %v2763 = vpack.c.b16 %v1947, %v1939
    %v2764 = vpack.c.b16 %v1948, %v1940
    %v2765 = vpack.c.b16 %v1949, %v1941
    %v2766 = vpack.c.b16 %v1950, %v1942
    %v2767 = vpack.c.b16 %v1951, %v1943
    %v2768 = vpack.c.b16 %v1952, %v1944
    %v2769 = vpack.c.b16 %v1953, %v1945
    %v2770 = vpack.c.b16 %v1954, %v1946
    %v2771 = vpack.c.b16 %v1963, %v1955
    %v2772 = vpack.c.b16 %v1964, %v1956
    %v2773 = vpack.c.b16 %v1965, %v1957
    %v2774 = vpack.c.b16 %v1966, %v1958
    %v2775 = vpack.c.b16 %v1967, %v1959
    %v2776 = vpack.c.b16 %v1968, %v1960
    %v2777 = vpack.c.b16 %v1969, %v1961
    %v2778 = vpack.c.b16 %v1970, %v1962
    %v2779 = vpack.c.b16 %v1979, %v1971
    %v2780 = vpack.c.b16 %v1980, %v1972
    %v2781 = vpack.c.b16 %v1981, %v1973
    %v2782 = vpack.c.b16 %v1982, %v1974
    %v2783 = vpack.c.b16 %v1983, %v1975
    %v2784 = vpack.c.b16 %v1984, %v1976
    %v2785 = vpack.c.b16 %v1985, %v1977
    %v2786 = vpack.c.b16 %v1986, %v1978
    %v2787 = vpack.c.b16 %v1995, %v1987
    %v2788 = vpack.c.b16 %v1996, %v1988
    %v2789 = vpack.c.b16 %v1997, %v1989
    %v2790 = vpack.c.b16 %v1998, %v1990
    %v2791 = vpack.c.b16 %v1999, %v1991
    %v2792 = vpack.c.b16 %v2000, %v1992
    %v2793 = vpack.c.b16 %v2001, %v1993
    %v2794 = vpack.c.b16 %v2002, %v1994
    %v2795 = vpack.c.b16 %v2011, %v2003
    %v2796 = vpack.c.b16 %v2012, %v2004
    %v2797 = vpack.c.b16 %v2013, %v2005
    %v2798 = vpack.c.b16 %v2014, %v2006
    %v2799 = vpack.c.b16 %v2015, %v2007
    %v2800 = vpack.c.b16 %v2016, %v2008
    %v2801 = vpack.c.b16 %v2017, %v2009
    %v2802 = vpack.c.b16 %v2018, %v2010
    %v2803 = vpack.c.b16 %v2027, %v2019
    %v2804 = vpack.c.b16 %v2028, %v2020
    %v2805 = vpack.c.b16 %v2029, %v2021
    %v2806 = vpack.c.b16 %v2030, %v2022
    %v2807 = vpack.c.b16 %v2031, %v2023
    %v2808 = vpack.c.b16 %v2032, %v2024
    %v2809 = vpack.c.b16 %v2033, %v2025
    %v2810 = vpack.c.b16 %v2034, %v2026
    %v2811 = vpack.c.b16 %v2043, %v2035
    %v2812 = vpack.c.b16 %v2044, %v2036
    %v2813 = vpack.c.b16 %v2045, %v2037
    %v2814 = vpack.c.b16 %v2046, %v2038
    %v2815 = vpack.c.b16 %v2047, %v2039
    %v2816 = vpack.c.b16 %v2048, %v2040
    %v2817 = vpack.c.b16 %v2049, %v2041
    %v2818 = vpack.c.b16 %v2050, %v2042
    %v2819 = vpack.c.b16 %v2059, %v2051
    %v2820 = vpack.c.b16 %v2060, %v2052
    %v2821 = vpack.c.b16 %v2061, %v2053
    %v2822 = vpack.c.b16 %v2062, %v2054
    %v2823 = vpack.c.b16 %v2063, %v2055
    %v2824 = vpack.c.b16 %v2064, %v2056
    %v2825 = vpack.c.b16 %v2065, %v2057
    %v2826 = vpack.c.b16 %v2066, %v2058
    %v2827 = vpack.c.b16 %v2075, %v2067
    %v2828 = vpack.c.b16 %v2076, %v2068
    %v2829 = vpack.c.b16 %v2077, %v2069
    %v2830 = vpack.c.b16 %v2078, %v2070
    %v2831 = vpack.c.b16 %v2079, %v2071
    %v2832 = vpack.c.b16 %v2080, %v2072
    %v2833 = vpack.c.b16 %v2081, %v2073
    %v2834 = vpack.c.b16 %v2082, %v2074
    %v2835 = vpack.c.b16 %v2091, %v2083
    %v2836 = vpack.c.b16 %v2092, %v2084
    %v2837 = vpack.c.b16 %v2093, %v2085
    %v2838 = vpack.c.b16 %v2094, %v2086
    %v2839 = vpack.c.b16 %v2095, %v2087
    %v2840 = vpack.c.b16 %v2096, %v2088
    %v2841 = vpack.c.b16 %v2097, %v2089
    %v2842 = vpack.c.b16 %v2098, %v2090
    %v2843 = vpack.c.b16 %v2107, %v2099
    %v2844 = vpack.c.b16 %v2108, %v2100
    %v2845 = vpack.c.b16 %v2109, %v2101
    %v2846 = vpack.c.b16 %v2110, %v2102
    %v2847 = vpack.c.b16 %v2111, %v2103
    %v2848 = vpack.c.b16 %v2112, %v2104
    %v2849 = vpack.c.b16 %v2113, %v2105
    %v2850 = vpack.c.b16 %v2114, %v2106
    %v2851 = vpack.c.b16 %v2123, %v2115
    %v2852 = vpack.c.b16 %v2124, %v2116
    %v2853 = vpack.c.b16 %v2125, %v2117
    %v2854 = vpack.c.b16 %v2126, %v2118
    %v2855 = vpack.c.b16 %v2127, %v2119
    %v2856 = vpack.c.b16 %v2128, %v2120
    %v2857 = vpack.c.b16 %v2129, %v2121
    %v2858 = vpack.c.b16 %v2130, %v2122
    %v2859 = vpack.c.b16 %v2139, %v2131
    %v2860 = vpack.c.b16 %v2140, %v2132
    %v2861 = vpack.c.b16 %v2141, %v2133
    %v2862 = vpack.c.b16 %v2142, %v2134
    %v2863 = vpack.c.b16 %v2143, %v2135
    %v2864 = vpack.c.b16 %v2144, %v2136
    %v2865 = vpack.c.b16 %v2145, %v2137
    %v2866 = vpack.c.b16 %v2146, %v2138
    %v2867 = vpack.c.b16 %v2155, %v2147
    %v2868 = vpack.c.b16 %v2156, %v2148
    %v2869 = vpack.c.b16 %v2157, %v2149
    %v2870 = vpack.c.b16 %v2158, %v2150
    %v2871 = vpack.c.b16 %v2159, %v2151
    %v2872 = vpack.c.b16 %v2160, %v2152
    %v2873 = vpack.c.b16 %v2161, %v2153
    %v2874 = vpack.c.b16 %v2162, %v2154
    %v2875 = vpack.c.b16 %v2171, %v2163
    %v2876 = vpack.c.b16 %v2172, %v2164
    %v2877 = vpack.c.b16 %v2173, %v2165
    %v2878 = vpack.c.b16 %v2174, %v2166
    %v2879 = vpack.c.b16 %v2175, %v2167
    %v2880 = vpack.c.b16 %v2176, %v2168
    %v2881 = vpack.c.b16 %v2177, %v2169
    %v2882 = vpack.c.b16 %v2178, %v2170
    %v2883 = vpack.c.b16 %v2187, %v2179
    %v2884 = vpack.c.b16 %v2188, %v2180
    %v2885 = vpack.c.b16 %v2189, %v2181
    %v2886 = vpack.c.b16 %v2190, %v2182
    %v2887 = vpack.c.b16 %v2191, %v2183
    %v2888 = vpack.c.b16 %v2192, %v2184
    %v2889 = vpack.c.b16 %v2193, %v2185
    %v2890 = vpack.c.b16 %v2194, %v2186
    %v2891 = vpack.c.b16 %v2203, %v2195
    %v2892 = vpack.c.b16 %v2204, %v2196
    %v2893 = vpack.c.b16 %v2205, %v2197
    %v2894 = vpack.c.b16 %v2206, %v2198
    %v2895 = vpack.c.b16 %v2207, %v2199
    %v2896 = vpack.c.b16 %v2208, %v2200
    %v2897 = vpack.c.b16 %v2209, %v2201
    %v2898 = vpack.c.b16 %v2210, %v2202
    %v2899 = vpack.c.b16 %v2219, %v2211
    %v2900 = vpack.c.b16 %v2220, %v2212
    %v2901 = vpack.c.b16 %v2221, %v2213
    %v2902 = vpack.c.b16 %v2222, %v2214
    %v2903 = vpack.c.b16 %v2223, %v2215
    %v2904 = vpack.c.b16 %v2224, %v2216
    %v2905 = vpack.c.b16 %v2225, %v2217
    %v2906 = vpack.c.b16 %v2226, %v2218
    %v2907 = vpack.c.b16 %v2235, %v2227
    %v2908 = vpack.c.b16 %v2236, %v2228
    %v2909 = vpack.c.b16 %v2237, %v2229
    %v2910 = vpack.c.b16 %v2238, %v2230
    %v2911 = vpack.c.b16 %v2239, %v2231
    %v2912 = vpack.c.b16 %v2240, %v2232
    %v2913 = vpack.c.b16 %v2241, %v2233
    %v2914 = vpack.c.b16 %v2242, %v2234
    %v2915 = vpack.c.b16 %v2251, %v2243
    %v2916 = vpack.c.b16 %v2252, %v2244
    %v2917 = vpack.c.b16 %v2253, %v2245
    %v2918 = vpack.c.b16 %v2254, %v2246
    %v2919 = vpack.c.b16 %v2255, %v2247
    %v2920 = vpack.c.b16 %v2256, %v2248
    %v2921 = vpack.c.b16 %v2257, %v2249
    %v2922 = vpack.c.b16 %v2258, %v2250
    %v2923 = vpack.c.b16 %v2267, %v2259
    %v2924 = vpack.c.b16 %v2268, %v2260
    %v2925 = vpack.c.b16 %v2269, %v2261
    %v2926 = vpack.c.b16 %v2270, %v2262
    %v2927 = vpack.c.b16 %v2271, %v2263
    %v2928 = vpack.c.b16 %v2272, %v2264
    %v2929 = vpack.c.b16 %v2273, %v2265
    %v2930 = vpack.c.b16 %v2274, %v2266
    %v2931 = vpack.c.b16 %v2283, %v2275
    %v2932 = vpack.c.b16 %v2284, %v2276
    %v2933 = vpack.c.b16 %v2285, %v2277
    %v2934 = vpack.c.b16 %v2286, %v2278
    %v2935 = vpack.c.b16 %v2287, %v2279
    %v2936 = vpack.c.b16 %v2288, %v2280
    %v2937 = vpack.c.b16 %v2289, %v2281
    %v2938 = vpack.c.b16 %v2290, %v2282
    %v2939 = vpack.c.b16 %v2299, %v2291
    %v2940 = vpack.c.b16 %v2300, %v2292
    %v2941 = vpack.c.b16 %v2301, %v2293
    %v2942 = vpack.c.b16 %v2302, %v2294
    %v2943 = vpack.c.b16 %v2303, %v2295
    %v2944 = vpack.c.b16 %v2304, %v2296
    %v2945 = vpack.c.b16 %v2305, %v2297
    %v2946 = vpack.c.b16 %v2306, %v2298
    %v2947 = vpack.c.b16 %v2315, %v2307
    %v2948 = vpack.c.b16 %v2316, %v2308
    %v2949 = vpack.c.b16 %v2317, %v2309
    %v2950 = vpack.c.b16 %v2318, %v2310
    %v2951 = vpack.c.b16 %v2319, %v2311
    %v2952 = vpack.c.b16 %v2320, %v2312
    %v2953 = vpack.c.b16 %v2321, %v2313
    %v2954 = vpack.c.b16 %v2322, %v2314
    %v2955 = vpack.c.b16 %v2331, %v2323
    %v2956 = vpack.c.b16 %v2332, %v2324
    %v2957 = vpack.c.b16 %v2333, %v2325
    %v2958 = vpack.c.b16 %v2334, %v2326
    %v2959 = vpack.c.b16 %v2335, %v2327
    %v2960 = vpack.c.b16 %v2336, %v2328
    %v2961 = vpack.c.b16 %v2337, %v2329
    %v2962 = vpack.c.b16 %v2338, %v2330
    %v2963 = vpack.c.b16 %v2347, %v2339
    %v2964 = vpack.c.b16 %v2348, %v2340
    %v2965 = vpack.c.b16 %v2349, %v2341
    %v2966 = vpack.c.b16 %v2350, %v2342
    %v2967 = vpack.c.b16 %v2351, %v2343
    %v2968 = vpack.c.b16 %v2352, %v2344
    %v2969 = vpack.c.b16 %v2353, %v2345
    %v2970 = vpack.c.b16 %v2354, %v2346
    %v2971 = vpack.c.b16 %v2363, %v2355
    %v2972 = vpack.c.b16 %v2364, %v2356
    %v2973 = vpack.c.b16 %v2365, %v2357
    %v2974 = vpack.c.b16 %v2366, %v2358
    %v2975 = vpack.c.b16 %v2367, %v2359
    %v2976 = vpack.c.b16 %v2368, %v2360
    %v2977 = vpack.c.b16 %v2369, %v2361
    %v2978 = vpack.c.b16 %v2370, %v2362
    %v2979 = vpack.c.b16 %v2379, %v2371
    %v2980 = vpack.c.b16 %v2380, %v2372
    %v2981 = vpack.c.b16 %v2381, %v2373
    %v2982 = vpack.c.b16 %v2382, %v2374
    %v2983 = vpack.c.b16 %v2383, %v2375
    %v2984 = vpack.c.b16 %v2384, %v2376
    %v2985 = vpack.c.b16 %v2385, %v2377
    %v2986 = vpack.c.b16 %v2386, %v2378
    %v2987 = vpack.c.b16 %v2395, %v2387
    %v2988 = vpack.c.b16 %v2396, %v2388
    %v2989 = vpack.c.b16 %v2397, %v2389
    %v2990 = vpack.c.b16 %v2398, %v2390
    %v2991 = vpack.c.b16 %v2399, %v2391
    %v2992 = vpack.c.b16 %v2400, %v2392
    %v2993 = vpack.c.b16 %v2401, %v2393
    %v2994 = vpack.c.b16 %v2402, %v2394
    %v2995 = vpack.c.b16 %v2411, %v2403
    %v2996 = vpack.c.b16 %v2412, %v2404
    %v2997 = vpack.c.b16 %v2413, %v2405
    %v2998 = vpack.c.b16 %v2414, %v2406
    %v2999 = vpack.c.b16 %v2415, %v2407
    %v3000 = vpack.c.b16 %v2416, %v2408
    %v3001 = vpack.c.b16 %v2417, %v2409
    %v3002 = vpack.c.b16 %v2418, %v2410
    %v3003 = vpack.c.b16 %v2427, %v2419
    %v3004 = vpack.c.b16 %v2428, %v2420
    %v3005 = vpack.c.b16 %v2429, %v2421
    %v3006 = vpack.c.b16 %v2430, %v2422
    %v3007 = vpack.c.b16 %v2431, %v2423
    %v3008 = vpack.c.b16 %v2432, %v2424
    %v3009 = vpack.c.b16 %v2433, %v2425
    %v3010 = vpack.c.b16 %v2434, %v2426
    %v3011 = vpack.c.b16 %v2443, %v2435
    %v3012 = vpack.c.b16 %v2444, %v2436
    %v3013 = vpack.c.b16 %v2445, %v2437
    %v3014 = vpack.c.b16 %v2446, %v2438
    %v3015 = vpack.c.b16 %v2447, %v2439
    %v3016 = vpack.c.b16 %v2448, %v2440
    %v3017 = vpack.c.b16 %v2449, %v2441
    %v3018 = vpack.c.b16 %v2450, %v2442
    %v3019 = vpack.c.b16 %v2459, %v2451
    %v3020 = vpack.c.b16 %v2460, %v2452
    %v3021 = vpack.c.b16 %v2461, %v2453
    %v3022 = vpack.c.b16 %v2462, %v2454
    %v3023 = vpack.c.b16 %v2463, %v2455
    %v3024 = vpack.c.b16 %v2464, %v2456
    %v3025 = vpack.c.b16 %v2465, %v2457
    %v3026 = vpack.c.b16 %v2466, %v2458
    %v3027 = vpack.c.b16 %v2475, %v2467
    %v3028 = vpack.c.b16 %v2476, %v2468
    %v3029 = vpack.c.b16 %v2477, %v2469
    %v3030 = vpack.c.b16 %v2478, %v2470
    %v3031 = vpack.c.b16 %v2479, %v2471
    %v3032 = vpack.c.b16 %v2480, %v2472
    %v3033 = vpack.c.b16 %v2481, %v2473
    %v3034 = vpack.c.b16 %v2482, %v2474
    %v3035 = vpack.c.b16 %v2491, %v2483
    %v3036 = vpack.c.b16 %v2492, %v2484
    %v3037 = vpack.c.b16 %v2493, %v2485
    %v3038 = vpack.c.b16 %v2494, %v2486
    %v3039 = vpack.c.b16 %v2495, %v2487
    %v3040 = vpack.c.b16 %v2496, %v2488
    %v3041 = vpack.c.b16 %v2497, %v2489
    %v3042 = vpack.c.b16 %v2498, %v2490
    %v3043 = vpack.c.b16 %v2507, %v2499
    %v3044 = vpack.c.b16 %v2508, %v2500
    %v3045 = vpack.c.b16 %v2509, %v2501
    %v3046 = vpack.c.b16 %v2510, %v2502
    %v3047 = vpack.c.b16 %v2511, %v2503
    %v3048 = vpack.c.b16 %v2512, %v2504
    %v3049 = vpack.c.b16 %v2513, %v2505
    %v3050 = vpack.c.b16 %v2514, %v2506
    %v3051 = vpack.c.b16 %v2523, %v2515
    %v3052 = vpack.c.b16 %v2524, %v2516
    %v3053 = vpack.c.b16 %v2525, %v2517
    %v3054 = vpack.c.b16 %v2526, %v2518
    %v3055 = vpack.c.b16 %v2527, %v2519
    %v3056 = vpack.c.b16 %v2528, %v2520
    %v3057 = vpack.c.b16 %v2529, %v2521
    %v3058 = vpack.c.b16 %v2530, %v2522
    %v3059 = vpack.c.b16 %v2539, %v2531
    %v3060 = vpack.c.b16 %v2540, %v2532
    %v3061 = vpack.c.b16 %v2541, %v2533
    %v3062 = vpack.c.b16 %v2542, %v2534
    %v3063 = vpack.c.b16 %v2543, %v2535
    %v3064 = vpack.c.b16 %v2544, %v2536
    %v3065 = vpack.c.b16 %v2545, %v2537
    %v3066 = vpack.c.b16 %v2546, %v2538
    %v3067 = vpack.c.b16 %v2555, %v2547
    %v3068 = vpack.c.b16 %v2556, %v2548
    %v3069 = vpack.c.b16 %v2557, %v2549
    %v3070 = vpack.c.b16 %v2558, %v2550
    %v3071 = vpack.c.b16 %v2559, %v2551
    %v3072 = vpack.c.b16 %v2560, %v2552
    %v3073 = vpack.c.b16 %v2561, %v2553
    %v3074 = vpack.c.b16 %v2562, %v2554
    %3587 = vmatprep.subr.bf16.mxu0 %v2620
    %3588 = vmatpush1.bf16.msra.mxu0 %v2619
    %3589 = vmatprep.subr.bf16.mxu0 %v2612
    %3590 = vmatpush1.bf16.msra.mxu0 %v2611
    %3591 = vmatprep.subr.bf16.mxu0 %v2604
    %3592 = vmatpush1.bf16.msra.mxu0 %v2603
    %3593 = vmatprep.subr.bf16.mxu0 %v2596
    %3594 = vmatpush1.bf16.msra.mxu0 %v2595
    %3595 = vmatprep.subr.bf16.mxu0 %v2588
    %3596 = vmatpush1.bf16.msra.mxu0 %v2587
    %3597 = vmatprep.subr.bf16.mxu0 %v2580
    %3598 = vmatpush1.bf16.msra.mxu0 %v2579
    %3599 = vmatprep.subr.bf16.mxu0 %v2572
    %3600 = vmatpush1.bf16.msra.mxu0 %v2571
    %3601 = vmatprep.subr.bf16.mxu0 %v2564
    %3602 = vmatpush1.bf16.msra.mxu0 %v2563
    %3603 = vmatprep.subr.bf16.mxu0 %v2684
    %3604 = vmatpush2.bf16.msra.mxu0 %v2683
    %3605 = vmatprep.subr.bf16.mxu0 %v2676
    %3606 = vmatpush2.bf16.msra.mxu0 %v2675
    %3607 = vmatprep.subr.bf16.mxu0 %v2668
    %3608 = vmatpush2.bf16.msra.mxu0 %v2667
    %3609 = vmatprep.subr.bf16.mxu0 %v2660
    %3610 = vmatpush2.bf16.msra.mxu0 %v2659
    %3611 = vmatprep.subr.bf16.mxu0 %v2652
    %3612 = vmatpush2.bf16.msra.mxu0 %v2651
    %3613 = vmatprep.subr.bf16.mxu0 %v2644
    %3614 = vmatpush2.bf16.msra.mxu0 %v2643
    %3615 = vmatprep.subr.bf16.mxu0 %v2636
    %3616 = vmatpush2.bf16.msra.mxu0 %v2635
    %3617 = vmatprep.subr.bf16.mxu0 %v2628
    %3618 = vmatpush2.bf16.msra.mxu0 %v2627
    %3619 = vmatprep.mubr.bf16.mxu0 %v466
    %3620 = vmatmul.mubr.bf16.gmra.mxu0 %v465
    %v3621 = vpop.f32.mrf.mxu0
    %v3622 = vadd.f32 %v990, %v3621
    %v3623 = vpop.f32.mrf.mxu0
    %v3624 = vadd.f32 %v994, %v3623
    %v3625 = vpop.f32.mrf.mxu0
    %v3626 = vpop.f32.mrf.mxu0
    %3627 = vdwg.mxu0
    %3628 = vmatprep.subr.bf16.mxu0 %v2748
    %3629 = vmatpush1.bf16.msra.mxu0 %v2747
    %3630 = vmatprep.subr.bf16.mxu0 %v2740
    %3631 = vmatpush1.bf16.msra.mxu0 %v2739
    %3632 = vmatprep.subr.bf16.mxu0 %v2732
    %3633 = vmatpush1.bf16.msra.mxu0 %v2731
    %3634 = vmatprep.subr.bf16.mxu0 %v2724
    %3635 = vmatpush1.bf16.msra.mxu0 %v2723
    %3636 = vmatprep.subr.bf16.mxu0 %v2716
    %3637 = vmatpush1.bf16.msra.mxu0 %v2715
    %3638 = vmatprep.subr.bf16.mxu0 %v2708
    %3639 = vmatpush1.bf16.msra.mxu0 %v2707
    %3640 = vmatprep.subr.bf16.mxu0 %v2700
    %3641 = vmatpush1.bf16.msra.mxu0 %v2699
    %3642 = vmatprep.subr.bf16.mxu0 %v2692
    %3643 = vmatpush1.bf16.msra.mxu0 %v2691
    %3644 = vmatprep.subr.bf16.mxu0 %v2812
    %3645 = vmatpush2.bf16.msra.mxu0 %v2811
    %3646 = vmatprep.subr.bf16.mxu0 %v2804
    %3647 = vmatpush2.bf16.msra.mxu0 %v2803
    %3648 = vmatprep.subr.bf16.mxu0 %v2796
    %3649 = vmatpush2.bf16.msra.mxu0 %v2795
    %3650 = vmatprep.subr.bf16.mxu0 %v2788
    %3651 = vmatpush2.bf16.msra.mxu0 %v2787
    %3652 = vmatprep.subr.bf16.mxu0 %v2780
    %3653 = vmatpush2.bf16.msra.mxu0 %v2779
    %3654 = vmatprep.subr.bf16.mxu0 %v2772
    %3655 = vmatpush2.bf16.msra.mxu0 %v2771
    %3656 = vmatprep.subr.bf16.mxu0 %v2764
    %3657 = vmatpush2.bf16.msra.mxu0 %v2763
    %3658 = vmatprep.subr.bf16.mxu0 %v2756
    %3659 = vmatpush2.bf16.msra.mxu0 %v2755
    %3660 = vmatprep.mubr.bf16.mxu0 %v468
    %3661 = vmatmul.mubr.bf16.gmra.mxu0 %v467
    %v3662 = vpop.f32.mrf.mxu0
    %v3663 = vadd.f32 %v3622, %v3662
    %v3664 = vpop.f32.mrf.mxu0
    %v3665 = vadd.f32 %v3624, %v3664
    %v3666 = vpop.f32.mrf.mxu0
    %v3667 = vpop.f32.mrf.mxu0
    %3668 = vdwg.mxu0
    %3669 = vmatprep.subr.bf16.mxu0 %v2876
    %3670 = vmatpush1.bf16.msra.mxu0 %v2875
    %3671 = vmatprep.subr.bf16.mxu0 %v2868
    %3672 = vmatpush1.bf16.msra.mxu0 %v2867
    %3673 = vmatprep.subr.bf16.mxu0 %v2860
    %3674 = vmatpush1.bf16.msra.mxu0 %v2859
    %3675 = vmatprep.subr.bf16.mxu0 %v2852
    %3676 = vmatpush1.bf16.msra.mxu0 %v2851
    %3677 = vmatprep.subr.bf16.mxu0 %v2844
    %3678 = vmatpush1.bf16.msra.mxu0 %v2843
    %3679 = vmatprep.subr.bf16.mxu0 %v2836
    %3680 = vmatpush1.bf16.msra.mxu0 %v2835
    %3681 = vmatprep.subr.bf16.mxu0 %v2828
    %3682 = vmatpush1.bf16.msra.mxu0 %v2827
    %3683 = vmatprep.subr.bf16.mxu0 %v2820
    %3684 = vmatpush1.bf16.msra.mxu0 %v2819
    %3685 = vmatprep.subr.bf16.mxu0 %v2940
    %3686 = vmatpush2.bf16.msra.mxu0 %v2939
    %3687 = vmatprep.subr.bf16.mxu0 %v2932
    %3688 = vmatpush2.bf16.msra.mxu0 %v2931
    %3689 = vmatprep.subr.bf16.mxu0 %v2924
    %3690 = vmatpush2.bf16.msra.mxu0 %v2923
    %3691 = vmatprep.subr.bf16.mxu0 %v2916
    %3692 = vmatpush2.bf16.msra.mxu0 %v2915
    %3693 = vmatprep.subr.bf16.mxu0 %v2908
    %3694 = vmatpush2.bf16.msra.mxu0 %v2907
    %3695 = vmatprep.subr.bf16.mxu0 %v2900
    %3696 = vmatpush2.bf16.msra.mxu0 %v2899
    %3697 = vmatprep.subr.bf16.mxu0 %v2892
    %3698 = vmatpush2.bf16.msra.mxu0 %v2891
    %3699 = vmatprep.subr.bf16.mxu0 %v2884
    %3700 = vmatpush2.bf16.msra.mxu0 %v2883
    %3701 = vmatprep.mubr.bf16.mxu0 %v470
    %3702 = vmatmul.mubr.bf16.gmra.mxu0 %v469
    %v3703 = vpop.f32.mrf.mxu0
    %v3704 = vadd.f32 %v3663, %v3703
    %v3705 = vpop.f32.mrf.mxu0
    %v3706 = vadd.f32 %v3665, %v3705
    %v3707 = vpop.f32.mrf.mxu0
    %v3708 = vpop.f32.mrf.mxu0
    %3709 = vdwg.mxu0
    %3710 = vmatprep.subr.bf16.mxu0 %v3004
    %3711 = vmatpush1.bf16.msra.mxu0 %v3003
    %3712 = vmatprep.subr.bf16.mxu0 %v2996
    %3713 = vmatpush1.bf16.msra.mxu0 %v2995
    %3714 = vmatprep.subr.bf16.mxu0 %v2988
    %3715 = vmatpush1.bf16.msra.mxu0 %v2987
    %3716 = vmatprep.subr.bf16.mxu0 %v2980
    %3717 = vmatpush1.bf16.msra.mxu0 %v2979
    %3718 = vmatprep.subr.bf16.mxu0 %v2972
    %3719 = vmatpush1.bf16.msra.mxu0 %v2971
    %3720 = vmatprep.subr.bf16.mxu0 %v2964
    %3721 = vmatpush1.bf16.msra.mxu0 %v2963
    %3722 = vmatprep.subr.bf16.mxu0 %v2956
    %3723 = vmatpush1.bf16.msra.mxu0 %v2955
    %3724 = vmatprep.subr.bf16.mxu0 %v2948
    %3725 = vmatpush1.bf16.msra.mxu0 %v2947
    %3726 = vmatprep.subr.bf16.mxu0 %v3068
    %3727 = vmatpush2.bf16.msra.mxu0 %v3067
    %3728 = vmatprep.subr.bf16.mxu0 %v3060
    %3729 = vmatpush2.bf16.msra.mxu0 %v3059
    %3730 = vmatprep.subr.bf16.mxu0 %v3052
    %3731 = vmatpush2.bf16.msra.mxu0 %v3051
    %3732 = vmatprep.subr.bf16.mxu0 %v3044
    %3733 = vmatpush2.bf16.msra.mxu0 %v3043
    %3734 = vmatprep.subr.bf16.mxu0 %v3036
    %3735 = vmatpush2.bf16.msra.mxu0 %v3035
    %3736 = vmatprep.subr.bf16.mxu0 %v3028
    %3737 = vmatpush2.bf16.msra.mxu0 %v3027
    %3738 = vmatprep.subr.bf16.mxu0 %v3020
    %3739 = vmatpush2.bf16.msra.mxu0 %v3019
    %3740 = vmatprep.subr.bf16.mxu0 %v3012
    %3741 = vmatpush2.bf16.msra.mxu0 %v3011
    %3742 = vmatprep.mubr.bf16.mxu0 %v472
    %3743 = vmatmul.mubr.bf16.gmra.mxu0 %v471
    %v3744 = vpop.f32.mrf.mxu0
    %v3745 = vadd.f32 %v3704, %v3744
    %v3746 = vpop.f32.mrf.mxu0
    %v3747 = vadd.f32 %v3706, %v3746
    %v3748 = vpop.f32.mrf.mxu0
    %v3749 = vpop.f32.mrf.mxu0
    %3750 = vdwg.mxu0
    %3751 = vmatprep.subr.bf16.mxu0 %v2622
    %3752 = vmatpush1.bf16.msra.mxu0 %v2621
    %3753 = vmatprep.subr.bf16.mxu0 %v2614
    %3754 = vmatpush1.bf16.msra.mxu0 %v2613
    %3755 = vmatprep.subr.bf16.mxu0 %v2606
    %3756 = vmatpush1.bf16.msra.mxu0 %v2605
    %3757 = vmatprep.subr.bf16.mxu0 %v2598
    %3758 = vmatpush1.bf16.msra.mxu0 %v2597
    %3759 = vmatprep.subr.bf16.mxu0 %v2590
    %3760 = vmatpush1.bf16.msra.mxu0 %v2589
    %3761 = vmatprep.subr.bf16.mxu0 %v2582
    %3762 = vmatpush1.bf16.msra.mxu0 %v2581
    %3763 = vmatprep.subr.bf16.mxu0 %v2574
    %3764 = vmatpush1.bf16.msra.mxu0 %v2573
    %3765 = vmatprep.subr.bf16.mxu0 %v2566
    %3766 = vmatpush1.bf16.msra.mxu0 %v2565
    %3767 = vmatprep.subr.bf16.mxu0 %v2686
    %3768 = vmatpush2.bf16.msra.mxu0 %v2685
    %3769 = vmatprep.subr.bf16.mxu0 %v2678
    %3770 = vmatpush2.bf16.msra.mxu0 %v2677
    %3771 = vmatprep.subr.bf16.mxu0 %v2670
    %3772 = vmatpush2.bf16.msra.mxu0 %v2669
    %3773 = vmatprep.subr.bf16.mxu0 %v2662
    %3774 = vmatpush2.bf16.msra.mxu0 %v2661
    %3775 = vmatprep.subr.bf16.mxu0 %v2654
    %3776 = vmatpush2.bf16.msra.mxu0 %v2653
    %3777 = vmatprep.subr.bf16.mxu0 %v2646
    %3778 = vmatpush2.bf16.msra.mxu0 %v2645
    %3779 = vmatprep.subr.bf16.mxu0 %v2638
    %3780 = vmatpush2.bf16.msra.mxu0 %v2637
    %3781 = vmatprep.subr.bf16.mxu0 %v2630
    %3782 = vmatpush2.bf16.msra.mxu0 %v2629
    %3783 = vmatprep.mubr.bf16.mxu0 %v466
    %3784 = vmatmul.mubr.bf16.gmra.mxu0 %v465
    %v3785 = vpop.f32.mrf.mxu0
    %v3786 = vadd.f32 %v998, %v3785
    %v3787 = vpop.f32.mrf.mxu0
    %v3788 = vadd.f32 %v1002, %v3787
    %v3789 = vpop.f32.mrf.mxu0
    %v3790 = vpop.f32.mrf.mxu0
    %3791 = vdwg.mxu0
    %3792 = vmatprep.subr.bf16.mxu0 %v2750
    %3793 = vmatpush1.bf16.msra.mxu0 %v2749
    %3794 = vmatprep.subr.bf16.mxu0 %v2742
    %3795 = vmatpush1.bf16.msra.mxu0 %v2741
    %3796 = vmatprep.subr.bf16.mxu0 %v2734
    %3797 = vmatpush1.bf16.msra.mxu0 %v2733
    %3798 = vmatprep.subr.bf16.mxu0 %v2726
    %3799 = vmatpush1.bf16.msra.mxu0 %v2725
    %3800 = vmatprep.subr.bf16.mxu0 %v2718
    %3801 = vmatpush1.bf16.msra.mxu0 %v2717
    %3802 = vmatprep.subr.bf16.mxu0 %v2710
    %3803 = vmatpush1.bf16.msra.mxu0 %v2709
    %3804 = vmatprep.subr.bf16.mxu0 %v2702
    %3805 = vmatpush1.bf16.msra.mxu0 %v2701
    %3806 = vmatprep.subr.bf16.mxu0 %v2694
    %3807 = vmatpush1.bf16.msra.mxu0 %v2693
    %3808 = vmatprep.subr.bf16.mxu0 %v2814
    %3809 = vmatpush2.bf16.msra.mxu0 %v2813
    %3810 = vmatprep.subr.bf16.mxu0 %v2806
    %3811 = vmatpush2.bf16.msra.mxu0 %v2805
    %3812 = vmatprep.subr.bf16.mxu0 %v2798
    %3813 = vmatpush2.bf16.msra.mxu0 %v2797
    %3814 = vmatprep.subr.bf16.mxu0 %v2790
    %3815 = vmatpush2.bf16.msra.mxu0 %v2789
    %3816 = vmatprep.subr.bf16.mxu0 %v2782
    %3817 = vmatpush2.bf16.msra.mxu0 %v2781
    %3818 = vmatprep.subr.bf16.mxu0 %v2774
    %3819 = vmatpush2.bf16.msra.mxu0 %v2773
    %3820 = vmatprep.subr.bf16.mxu0 %v2766
    %3821 = vmatpush2.bf16.msra.mxu0 %v2765
    %3822 = vmatprep.subr.bf16.mxu0 %v2758
    %3823 = vmatpush2.bf16.msra.mxu0 %v2757
    %3824 = vmatprep.mubr.bf16.mxu0 %v468
    %3825 = vmatmul.mubr.bf16.gmra.mxu0 %v467
    %v3826 = vpop.f32.mrf.mxu0
    %v3827 = vadd.f32 %v3786, %v3826
    %v3828 = vpop.f32.mrf.mxu0
    %v3829 = vadd.f32 %v3788, %v3828
    %v3830 = vpop.f32.mrf.mxu0
    %v3831 = vpop.f32.mrf.mxu0
    %3832 = vdwg.mxu0
    %3833 = vmatprep.subr.bf16.mxu0 %v2878
    %3834 = vmatpush1.bf16.msra.mxu0 %v2877
    %3835 = vmatprep.subr.bf16.mxu0 %v2870
    %3836 = vmatpush1.bf16.msra.mxu0 %v2869
    %3837 = vmatprep.subr.bf16.mxu0 %v2862
    %3838 = vmatpush1.bf16.msra.mxu0 %v2861
    %3839 = vmatprep.subr.bf16.mxu0 %v2854
    %3840 = vmatpush1.bf16.msra.mxu0 %v2853
    %3841 = vmatprep.subr.bf16.mxu0 %v2846
    %3842 = vmatpush1.bf16.msra.mxu0 %v2845
    %3843 = vmatprep.subr.bf16.mxu0 %v2838
    %3844 = vmatpush1.bf16.msra.mxu0 %v2837
    %3845 = vmatprep.subr.bf16.mxu0 %v2830
    %3846 = vmatpush1.bf16.msra.mxu0 %v2829
    %3847 = vmatprep.subr.bf16.mxu0 %v2822
    %3848 = vmatpush1.bf16.msra.mxu0 %v2821
    %3849 = vmatprep.subr.bf16.mxu0 %v2942
    %3850 = vmatpush2.bf16.msra.mxu0 %v2941
    %3851 = vmatprep.subr.bf16.mxu0 %v2934
    %3852 = vmatpush2.bf16.msra.mxu0 %v2933
    %3853 = vmatprep.subr.bf16.mxu0 %v2926
    %3854 = vmatpush2.bf16.msra.mxu0 %v2925
    %3855 = vmatprep.subr.bf16.mxu0 %v2918
    %3856 = vmatpush2.bf16.msra.mxu0 %v2917
    %3857 = vmatprep.subr.bf16.mxu0 %v2910
    %3858 = vmatpush2.bf16.msra.mxu0 %v2909
    %3859 = vmatprep.subr.bf16.mxu0 %v2902
    %3860 = vmatpush2.bf16.msra.mxu0 %v2901
    %3861 = vmatprep.subr.bf16.mxu0 %v2894
    %3862 = vmatpush2.bf16.msra.mxu0 %v2893
    %3863 = vmatprep.subr.bf16.mxu0 %v2886
    %3864 = vmatpush2.bf16.msra.mxu0 %v2885
    %3865 = vmatprep.mubr.bf16.mxu0 %v470
    %3866 = vmatmul.mubr.bf16.gmra.mxu0 %v469
    %v3867 = vpop.f32.mrf.mxu0
    %v3868 = vadd.f32 %v3827, %v3867
    %v3869 = vpop.f32.mrf.mxu0
    %v3870 = vadd.f32 %v3829, %v3869
    %v3871 = vpop.f32.mrf.mxu0
    %v3872 = vpop.f32.mrf.mxu0
    %3873 = vdwg.mxu0
    %3874 = vmatprep.subr.bf16.mxu0 %v3006
    %3875 = vmatpush1.bf16.msra.mxu0 %v3005
    %3876 = vmatprep.subr.bf16.mxu0 %v2998
    %3877 = vmatpush1.bf16.msra.mxu0 %v2997
    %3878 = vmatprep.subr.bf16.mxu0 %v2990
    %3879 = vmatpush1.bf16.msra.mxu0 %v2989
    %3880 = vmatprep.subr.bf16.mxu0 %v2982
    %3881 = vmatpush1.bf16.msra.mxu0 %v2981
    %3882 = vmatprep.subr.bf16.mxu0 %v2974
    %3883 = vmatpush1.bf16.msra.mxu0 %v2973
    %3884 = vmatprep.subr.bf16.mxu0 %v2966
    %3885 = vmatpush1.bf16.msra.mxu0 %v2965
    %3886 = vmatprep.subr.bf16.mxu0 %v2958
    %3887 = vmatpush1.bf16.msra.mxu0 %v2957
    %3888 = vmatprep.subr.bf16.mxu0 %v2950
    %3889 = vmatpush1.bf16.msra.mxu0 %v2949
    %3890 = vmatprep.subr.bf16.mxu0 %v3070
    %3891 = vmatpush2.bf16.msra.mxu0 %v3069
    %3892 = vmatprep.subr.bf16.mxu0 %v3062
    %3893 = vmatpush2.bf16.msra.mxu0 %v3061
    %3894 = vmatprep.subr.bf16.mxu0 %v3054
    %3895 = vmatpush2.bf16.msra.mxu0 %v3053
    %3896 = vmatprep.subr.bf16.mxu0 %v3046
    %3897 = vmatpush2.bf16.msra.mxu0 %v3045
    %3898 = vmatprep.subr.bf16.mxu0 %v3038
    %3899 = vmatpush2.bf16.msra.mxu0 %v3037
    %3900 = vmatprep.subr.bf16.mxu0 %v3030
    %3901 = vmatpush2.bf16.msra.mxu0 %v3029
    %3902 = vmatprep.subr.bf16.mxu0 %v3022
    %3903 = vmatpush2.bf16.msra.mxu0 %v3021
    %3904 = vmatprep.subr.bf16.mxu0 %v3014
    %3905 = vmatpush2.bf16.msra.mxu0 %v3013
    %3906 = vmatprep.mubr.bf16.mxu0 %v472
    %3907 = vmatmul.mubr.bf16.gmra.mxu0 %v471
    %v3908 = vpop.f32.mrf.mxu0
    %v3909 = vadd.f32 %v3868, %v3908
    %v3910 = vpop.f32.mrf.mxu0
    %v3911 = vadd.f32 %v3870, %v3910
    %v3912 = vpop.f32.mrf.mxu0
    %v3913 = vpop.f32.mrf.mxu0
    %3914 = vdwg.mxu0
    %3915 = vmatprep.subr.bf16.mxu0 %v2624
    %3916 = vmatpush1.bf16.msra.mxu0 %v2623
    %3917 = vmatprep.subr.bf16.mxu0 %v2616
    %3918 = vmatpush1.bf16.msra.mxu0 %v2615
    %3919 = vmatprep.subr.bf16.mxu0 %v2608
    %3920 = vmatpush1.bf16.msra.mxu0 %v2607
    %3921 = vmatprep.subr.bf16.mxu0 %v2600
    %3922 = vmatpush1.bf16.msra.mxu0 %v2599
    %3923 = vmatprep.subr.bf16.mxu0 %v2592
    %3924 = vmatpush1.bf16.msra.mxu0 %v2591
    %3925 = vmatprep.subr.bf16.mxu0 %v2584
    %3926 = vmatpush1.bf16.msra.mxu0 %v2583
    %3927 = vmatprep.subr.bf16.mxu0 %v2576
    %3928 = vmatpush1.bf16.msra.mxu0 %v2575
    %3929 = vmatprep.subr.bf16.mxu0 %v2568
    %3930 = vmatpush1.bf16.msra.mxu0 %v2567
    %3931 = vmatprep.subr.bf16.mxu0 %v2688
    %3932 = vmatpush2.bf16.msra.mxu0 %v2687
    %3933 = vmatprep.subr.bf16.mxu0 %v2680
    %3934 = vmatpush2.bf16.msra.mxu0 %v2679
    %3935 = vmatprep.subr.bf16.mxu0 %v2672
    %3936 = vmatpush2.bf16.msra.mxu0 %v2671
    %3937 = vmatprep.subr.bf16.mxu0 %v2664
    %3938 = vmatpush2.bf16.msra.mxu0 %v2663
    %3939 = vmatprep.subr.bf16.mxu0 %v2656
    %3940 = vmatpush2.bf16.msra.mxu0 %v2655
    %3941 = vmatprep.subr.bf16.mxu0 %v2648
    %3942 = vmatpush2.bf16.msra.mxu0 %v2647
    %3943 = vmatprep.subr.bf16.mxu0 %v2640
    %3944 = vmatpush2.bf16.msra.mxu0 %v2639
    %3945 = vmatprep.subr.bf16.mxu0 %v2632
    %3946 = vmatpush2.bf16.msra.mxu0 %v2631
    %3947 = vmatprep.mubr.bf16.mxu0 %v466
    %3948 = vmatmul.mubr.bf16.gmra.mxu0 %v465
    %v3949 = vpop.f32.mrf.mxu0
    %v3950 = vadd.f32 %v1006, %v3949
    %v3951 = vpop.f32.mrf.mxu0
    %v3952 = vadd.f32 %v1010, %v3951
    %v3953 = vpop.f32.mrf.mxu0
    %v3954 = vpop.f32.mrf.mxu0
    %3955 = vdwg.mxu0
    %3956 = vmatprep.subr.bf16.mxu0 %v2752
    %3957 = vmatpush1.bf16.msra.mxu0 %v2751
    %3958 = vmatprep.subr.bf16.mxu0 %v2744
    %3959 = vmatpush1.bf16.msra.mxu0 %v2743
    %3960 = vmatprep.subr.bf16.mxu0 %v2736
    %3961 = vmatpush1.bf16.msra.mxu0 %v2735
    %3962 = vmatprep.subr.bf16.mxu0 %v2728
    %3963 = vmatpush1.bf16.msra.mxu0 %v2727
    %3964 = vmatprep.subr.bf16.mxu0 %v2720
    %3965 = vmatpush1.bf16.msra.mxu0 %v2719
    %3966 = vmatprep.subr.bf16.mxu0 %v2712
    %3967 = vmatpush1.bf16.msra.mxu0 %v2711
    %3968 = vmatprep.subr.bf16.mxu0 %v2704
    %3969 = vmatpush1.bf16.msra.mxu0 %v2703
    %3970 = vmatprep.subr.bf16.mxu0 %v2696
    %3971 = vmatpush1.bf16.msra.mxu0 %v2695
    %3972 = vmatprep.subr.bf16.mxu0 %v2816
    %3973 = vmatpush2.bf16.msra.mxu0 %v2815
    %3974 = vmatprep.subr.bf16.mxu0 %v2808
    %3975 = vmatpush2.bf16.msra.mxu0 %v2807
    %3976 = vmatprep.subr.bf16.mxu0 %v2800
    %3977 = vmatpush2.bf16.msra.mxu0 %v2799
    %3978 = vmatprep.subr.bf16.mxu0 %v2792
    %3979 = vmatpush2.bf16.msra.mxu0 %v2791
    %3980 = vmatprep.subr.bf16.mxu0 %v2784
    %3981 = vmatpush2.bf16.msra.mxu0 %v2783
    %3982 = vmatprep.subr.bf16.mxu0 %v2776
    %3983 = vmatpush2.bf16.msra.mxu0 %v2775
    %3984 = vmatprep.subr.bf16.mxu0 %v2768
    %3985 = vmatpush2.bf16.msra.mxu0 %v2767
    %3986 = vmatprep.subr.bf16.mxu0 %v2760
    %3987 = vmatpush2.bf16.msra.mxu0 %v2759
    %3988 = vmatprep.mubr.bf16.mxu0 %v468
    %3989 = vmatmul.mubr.bf16.gmra.mxu0 %v467
    %v3990 = vpop.f32.mrf.mxu0
    %v3991 = vadd.f32 %v3950, %v3990
    %v3992 = vpop.f32.mrf.mxu0
    %v3993 = vadd.f32 %v3952, %v3992
    %v3994 = vpop.f32.mrf.mxu0
    %v3995 = vpop.f32.mrf.mxu0
    %3996 = vdwg.mxu0
    %3997 = vmatprep.subr.bf16.mxu0 %v2880
    %3998 = vmatpush1.bf16.msra.mxu0 %v2879
    %3999 = vmatprep.subr.bf16.mxu0 %v2872
    %4000 = vmatpush1.bf16.msra.mxu0 %v2871
    %4001 = vmatprep.subr.bf16.mxu0 %v2864
    %4002 = vmatpush1.bf16.msra.mxu0 %v2863
    %4003 = vmatprep.subr.bf16.mxu0 %v2856
    %4004 = vmatpush1.bf16.msra.mxu0 %v2855
    %4005 = vmatprep.subr.bf16.mxu0 %v2848
    %4006 = vmatpush1.bf16.msra.mxu0 %v2847
    %4007 = vmatprep.subr.bf16.mxu0 %v2840
    %4008 = vmatpush1.bf16.msra.mxu0 %v2839
    %4009 = vmatprep.subr.bf16.mxu0 %v2832
    %4010 = vmatpush1.bf16.msra.mxu0 %v2831
    %4011 = vmatprep.subr.bf16.mxu0 %v2824
    %4012 = vmatpush1.bf16.msra.mxu0 %v2823
    %4013 = vmatprep.subr.bf16.mxu0 %v2944
    %4014 = vmatpush2.bf16.msra.mxu0 %v2943
    %4015 = vmatprep.subr.bf16.mxu0 %v2936
    %4016 = vmatpush2.bf16.msra.mxu0 %v2935
    %4017 = vmatprep.subr.bf16.mxu0 %v2928
    %4018 = vmatpush2.bf16.msra.mxu0 %v2927
    %4019 = vmatprep.subr.bf16.mxu0 %v2920
    %4020 = vmatpush2.bf16.msra.mxu0 %v2919
    %4021 = vmatprep.subr.bf16.mxu0 %v2912
    %4022 = vmatpush2.bf16.msra.mxu0 %v2911
    %4023 = vmatprep.subr.bf16.mxu0 %v2904
    %4024 = vmatpush2.bf16.msra.mxu0 %v2903
    %4025 = vmatprep.subr.bf16.mxu0 %v2896
    %4026 = vmatpush2.bf16.msra.mxu0 %v2895
    %4027 = vmatprep.subr.bf16.mxu0 %v2888
    %4028 = vmatpush2.bf16.msra.mxu0 %v2887
    %4029 = vmatprep.mubr.bf16.mxu0 %v470
    %4030 = vmatmul.mubr.bf16.gmra.mxu0 %v469
    %v4031 = vpop.f32.mrf.mxu0
    %v4032 = vadd.f32 %v3991, %v4031
    %v4033 = vpop.f32.mrf.mxu0
    %v4034 = vadd.f32 %v3993, %v4033
    %v4035 = vpop.f32.mrf.mxu0
    %v4036 = vpop.f32.mrf.mxu0
    %4037 = vdwg.mxu0
    %4038 = vmatprep.subr.bf16.mxu0 %v3008
    %4039 = vmatpush1.bf16.msra.mxu0 %v3007
    %4040 = vmatprep.subr.bf16.mxu0 %v3000
    %4041 = vmatpush1.bf16.msra.mxu0 %v2999
    %4042 = vmatprep.subr.bf16.mxu0 %v2992
    %4043 = vmatpush1.bf16.msra.mxu0 %v2991
    %4044 = vmatprep.subr.bf16.mxu0 %v2984
    %4045 = vmatpush1.bf16.msra.mxu0 %v2983
    %4046 = vmatprep.subr.bf16.mxu0 %v2976
    %4047 = vmatpush1.bf16.msra.mxu0 %v2975
    %4048 = vmatprep.subr.bf16.mxu0 %v2968
    %4049 = vmatpush1.bf16.msra.mxu0 %v2967
    %4050 = vmatprep.subr.bf16.mxu0 %v2960
    %4051 = vmatpush1.bf16.msra.mxu0 %v2959
    %4052 = vmatprep.subr.bf16.mxu0 %v2952
    %4053 = vmatpush1.bf16.msra.mxu0 %v2951
    %4054 = vmatprep.subr.bf16.mxu0 %v3072
    %4055 = vmatpush2.bf16.msra.mxu0 %v3071
    %4056 = vmatprep.subr.bf16.mxu0 %v3064
    %4057 = vmatpush2.bf16.msra.mxu0 %v3063
    %4058 = vmatprep.subr.bf16.mxu0 %v3056
    %4059 = vmatpush2.bf16.msra.mxu0 %v3055
    %4060 = vmatprep.subr.bf16.mxu0 %v3048
    %4061 = vmatpush2.bf16.msra.mxu0 %v3047
    %4062 = vmatprep.subr.bf16.mxu0 %v3040
    %4063 = vmatpush2.bf16.msra.mxu0 %v3039
    %4064 = vmatprep.subr.bf16.mxu0 %v3032
    %4065 = vmatpush2.bf16.msra.mxu0 %v3031
    %4066 = vmatprep.subr.bf16.mxu0 %v3024
    %4067 = vmatpush2.bf16.msra.mxu0 %v3023
    %4068 = vmatprep.subr.bf16.mxu0 %v3016
    %4069 = vmatpush2.bf16.msra.mxu0 %v3015
    %4070 = vmatprep.mubr.bf16.mxu0 %v472
    %4071 = vmatmul.mubr.bf16.gmra.mxu0 %v471
    %v4072 = vpop.f32.mrf.mxu0
    %v4073 = vadd.f32 %v4032, %v4072
    %v4074 = vpop.f32.mrf.mxu0
    %v4075 = vadd.f32 %v4034, %v4074
    %v4076 = vpop.f32.mrf.mxu0
    %v4077 = vpop.f32.mrf.mxu0
    %4078 = vdwg.mxu0
    %4079 = vmatprep.subr.bf16.mxu0 %v2626
    %4080 = vmatpush1.bf16.msra.mxu0 %v2625
    %4081 = vmatprep.subr.bf16.mxu0 %v2618
    %4082 = vmatpush1.bf16.msra.mxu0 %v2617
    %4083 = vmatprep.subr.bf16.mxu0 %v2610
    %4084 = vmatpush1.bf16.msra.mxu0 %v2609
    %4085 = vmatprep.subr.bf16.mxu0 %v2602
    %4086 = vmatpush1.bf16.msra.mxu0 %v2601
    %4087 = vmatprep.subr.bf16.mxu0 %v2594
    %4088 = vmatpush1.bf16.msra.mxu0 %v2593
    %4089 = vmatprep.subr.bf16.mxu0 %v2586
    %4090 = vmatpush1.bf16.msra.mxu0 %v2585
    %4091 = vmatprep.subr.bf16.mxu0 %v2578
    %4092 = vmatpush1.bf16.msra.mxu0 %v2577
    %4093 = vmatprep.subr.bf16.mxu0 %v2570
    %4094 = vmatpush1.bf16.msra.mxu0 %v2569
    %4095 = vmatprep.subr.bf16.mxu0 %v2690
    %4096 = vmatpush2.bf16.msra.mxu0 %v2689
    %4097 = vmatprep.subr.bf16.mxu0 %v2682
    %4098 = vmatpush2.bf16.msra.mxu0 %v2681
    %4099 = vmatprep.subr.bf16.mxu0 %v2674
    %4100 = vmatpush2.bf16.msra.mxu0 %v2673
    %4101 = vmatprep.subr.bf16.mxu0 %v2666
    %4102 = vmatpush2.bf16.msra.mxu0 %v2665
    %4103 = vmatprep.subr.bf16.mxu0 %v2658
    %4104 = vmatpush2.bf16.msra.mxu0 %v2657
    %4105 = vmatprep.subr.bf16.mxu0 %v2650
    %4106 = vmatpush2.bf16.msra.mxu0 %v2649
    %4107 = vmatprep.subr.bf16.mxu0 %v2642
    %4108 = vmatpush2.bf16.msra.mxu0 %v2641
    %4109 = vmatprep.subr.bf16.mxu0 %v2634
    %4110 = vmatpush2.bf16.msra.mxu0 %v2633
    %4111 = vmatprep.mubr.bf16.mxu0 %v466
    %4112 = vmatmul.mubr.bf16.gmra.mxu0 %v465
    %v4113 = vpop.f32.mrf.mxu0
    %v4114 = vadd.f32 %v1014, %v4113
    %v4115 = vpop.f32.mrf.mxu0
    %v4116 = vadd.f32 %v1018, %v4115
    %v4117 = vpop.f32.mrf.mxu0
    %v4118 = vpop.f32.mrf.mxu0
    %4119 = vdwg.mxu0
    %4120 = vmatprep.subr.bf16.mxu0 %v2754
    %4121 = vmatpush1.bf16.msra.mxu0 %v2753
    %4122 = vmatprep.subr.bf16.mxu0 %v2746
    %4123 = vmatpush1.bf16.msra.mxu0 %v2745
    %4124 = vmatprep.subr.bf16.mxu0 %v2738
    %4125 = vmatpush1.bf16.msra.mxu0 %v2737
    %4126 = vmatprep.subr.bf16.mxu0 %v2730
    %4127 = vmatpush1.bf16.msra.mxu0 %v2729
    %4128 = vmatprep.subr.bf16.mxu0 %v2722
    %4129 = vmatpush1.bf16.msra.mxu0 %v2721
    %4130 = vmatprep.subr.bf16.mxu0 %v2714
    %4131 = vmatpush1.bf16.msra.mxu0 %v2713
    %4132 = vmatprep.subr.bf16.mxu0 %v2706
    %4133 = vmatpush1.bf16.msra.mxu0 %v2705
    %4134 = vmatprep.subr.bf16.mxu0 %v2698
    %4135 = vmatpush1.bf16.msra.mxu0 %v2697
    %4136 = vmatprep.subr.bf16.mxu0 %v2818
    %4137 = vmatpush2.bf16.msra.mxu0 %v2817
    %4138 = vmatprep.subr.bf16.mxu0 %v2810
    %4139 = vmatpush2.bf16.msra.mxu0 %v2809
    %4140 = vmatprep.subr.bf16.mxu0 %v2802
    %4141 = vmatpush2.bf16.msra.mxu0 %v2801
    %4142 = vmatprep.subr.bf16.mxu0 %v2794
    %4143 = vmatpush2.bf16.msra.mxu0 %v2793
    %4144 = vmatprep.subr.bf16.mxu0 %v2786
    %4145 = vmatpush2.bf16.msra.mxu0 %v2785
    %4146 = vmatprep.subr.bf16.mxu0 %v2778
    %4147 = vmatpush2.bf16.msra.mxu0 %v2777
    %4148 = vmatprep.subr.bf16.mxu0 %v2770
    %4149 = vmatpush2.bf16.msra.mxu0 %v2769
    %4150 = vmatprep.subr.bf16.mxu0 %v2762
    %4151 = vmatpush2.bf16.msra.mxu0 %v2761
    %4152 = vmatprep.mubr.bf16.mxu0 %v468
    %4153 = vmatmul.mubr.bf16.gmra.mxu0 %v467
    %v4154 = vpop.f32.mrf.mxu0
    %v4155 = vadd.f32 %v4114, %v4154
    %v4156 = vpop.f32.mrf.mxu0
    %v4157 = vadd.f32 %v4116, %v4156
    %v4158 = vpop.f32.mrf.mxu0
    %v4159 = vpop.f32.mrf.mxu0
    %4160 = vdwg.mxu0
    %4161 = vmatprep.subr.bf16.mxu0 %v2882
    %4162 = vmatpush1.bf16.msra.mxu0 %v2881
    %4163 = vmatprep.subr.bf16.mxu0 %v2874
    %4164 = vmatpush1.bf16.msra.mxu0 %v2873
    %4165 = vmatprep.subr.bf16.mxu0 %v2866
    %4166 = vmatpush1.bf16.msra.mxu0 %v2865
    %4167 = vmatprep.subr.bf16.mxu0 %v2858
    %4168 = vmatpush1.bf16.msra.mxu0 %v2857
    %4169 = vmatprep.subr.bf16.mxu0 %v2850
    %4170 = vmatpush1.bf16.msra.mxu0 %v2849
    %4171 = vmatprep.subr.bf16.mxu0 %v2842
    %4172 = vmatpush1.bf16.msra.mxu0 %v2841
    %4173 = vmatprep.subr.bf16.mxu0 %v2834
    %4174 = vmatpush1.bf16.msra.mxu0 %v2833
    %4175 = vmatprep.subr.bf16.mxu0 %v2826
    %4176 = vmatpush1.bf16.msra.mxu0 %v2825
    %4177 = vmatprep.subr.bf16.mxu0 %v2946
    %4178 = vmatpush2.bf16.msra.mxu0 %v2945
    %4179 = vmatprep.subr.bf16.mxu0 %v2938
    %4180 = vmatpush2.bf16.msra.mxu0 %v2937
    %4181 = vmatprep.subr.bf16.mxu0 %v2930
    %4182 = vmatpush2.bf16.msra.mxu0 %v2929
    %4183 = vmatprep.subr.bf16.mxu0 %v2922
    %4184 = vmatpush2.bf16.msra.mxu0 %v2921
    %4185 = vmatprep.subr.bf16.mxu0 %v2914
    %4186 = vmatpush2.bf16.msra.mxu0 %v2913
    %4187 = vmatprep.subr.bf16.mxu0 %v2906
    %4188 = vmatpush2.bf16.msra.mxu0 %v2905
    %4189 = vmatprep.subr.bf16.mxu0 %v2898
    %4190 = vmatpush2.bf16.msra.mxu0 %v2897
    %4191 = vmatprep.subr.bf16.mxu0 %v2890
    %4192 = vmatpush2.bf16.msra.mxu0 %v2889
    %4193 = vmatprep.mubr.bf16.mxu0 %v470
    %4194 = vmatmul.mubr.bf16.gmra.mxu0 %v469
    %v4195 = vpop.f32.mrf.mxu0
    %v4196 = vadd.f32 %v4155, %v4195
    %v4197 = vpop.f32.mrf.mxu0
    %v4198 = vadd.f32 %v4157, %v4197
    %v4199 = vpop.f32.mrf.mxu0
    %v4200 = vpop.f32.mrf.mxu0
    %4201 = vdwg.mxu0
    %4202 = vmatprep.subr.bf16.mxu0 %v3010
    %4203 = vmatpush1.bf16.msra.mxu0 %v3009
    %4204 = vmatprep.subr.bf16.mxu0 %v3002
    %4205 = vmatpush1.bf16.msra.mxu0 %v3001
    %4206 = vmatprep.subr.bf16.mxu0 %v2994
    %4207 = vmatpush1.bf16.msra.mxu0 %v2993
    %4208 = vmatprep.subr.bf16.mxu0 %v2986
    %4209 = vmatpush1.bf16.msra.mxu0 %v2985
    %4210 = vmatprep.subr.bf16.mxu0 %v2978
    %4211 = vmatpush1.bf16.msra.mxu0 %v2977
    %4212 = vmatprep.subr.bf16.mxu0 %v2970
    %4213 = vmatpush1.bf16.msra.mxu0 %v2969
    %4214 = vmatprep.subr.bf16.mxu0 %v2962
    %4215 = vmatpush1.bf16.msra.mxu0 %v2961
    %4216 = vmatprep.subr.bf16.mxu0 %v2954
    %4217 = vmatpush1.bf16.msra.mxu0 %v2953
    %4218 = vmatprep.subr.bf16.mxu0 %v3074
    %4219 = vmatpush2.bf16.msra.mxu0 %v3073
    %4220 = vmatprep.subr.bf16.mxu0 %v3066
    %4221 = vmatpush2.bf16.msra.mxu0 %v3065
    %4222 = vmatprep.subr.bf16.mxu0 %v3058
    %4223 = vmatpush2.bf16.msra.mxu0 %v3057
    %4224 = vmatprep.subr.bf16.mxu0 %v3050
    %4225 = vmatpush2.bf16.msra.mxu0 %v3049
    %4226 = vmatprep.subr.bf16.mxu0 %v3042
    %4227 = vmatpush2.bf16.msra.mxu0 %v3041
    %4228 = vmatprep.subr.bf16.mxu0 %v3034
    %4229 = vmatpush2.bf16.msra.mxu0 %v3033
    %4230 = vmatprep.subr.bf16.mxu0 %v3026
    %4231 = vmatpush2.bf16.msra.mxu0 %v3025
    %4232 = vmatprep.subr.bf16.mxu0 %v3018
    %4233 = vmatpush2.bf16.msra.mxu0 %v3017
    %4234 = vmatprep.mubr.bf16.mxu0 %v472
    %4235 = vmatmul.mubr.bf16.gmra.mxu0 %v471
    %v4236 = vpop.f32.mrf.mxu0
    %v4237 = vadd.f32 %v4196, %v4236
    %v4238 = vpop.f32.mrf.mxu0
    %v4239 = vadd.f32 %v4198, %v4238
    %v4240 = vpop.f32.mrf.mxu0
    %v4241 = vpop.f32.mrf.mxu0
    %4242 = vdwg.mxu0
    %v4243 = vmax.f32 %v3745, 0.0
    %v4244 = vmax.f32 %v3747, 0.0
    %v4245 = vmax.f32 %v3909, 0.0
    %v4246 = vmax.f32 %v3911, 0.0
    %v4247 = vmax.f32 %v4073, 0.0
    %v4248 = vmax.f32 %v4075, 0.0
    %v4249 = vmax.f32 %v4237, 0.0
    %v4250 = vmax.f32 %v4239, 0.0
    %v4251 = vld [vmem:[#allocation11] sm:$0xff]
    %v4252 = vunpack.c.l.bf16 %v4251
    %v4253 = vunpack.c.h.bf16 %v4251
    %v4256 = vlaneseq
    %v4257 = vshrl.u32 %v4256, 7
    %v4258 = vsub.s32 0, %v4257
    %v4259 = vrot.slane %v4252, %v4258
    %v4260 = vlaneseq
    %v4261 = vshrl.u32 %v4260, 7
    %v4262 = vsub.s32 2, %v4261
    %v4263 = vrot.slane %v4252, %v4262
    %v4264 = vlaneseq
    %v4265 = vshrl.u32 %v4264, 7
    %v4266 = vsub.s32 4, %v4265
    %v4267 = vrot.slane %v4252, %v4266
    %v4268 = vlaneseq
    %v4269 = vshrl.u32 %v4268, 7
    %v4270 = vsub.s32 6, %v4269
    %v4271 = vrot.slane %v4252, %v4270
    %v4272 = vlaneseq
    %v4273 = vshrl.u32 %v4272, 7
    %v4274 = vsub.s32 0, %v4273
    %v4275 = vrot.slane %v4253, %v4274
    %v4276 = vlaneseq
    %v4277 = vshrl.u32 %v4276, 7
    %v4278 = vsub.s32 2, %v4277
    %v4279 = vrot.slane %v4253, %v4278
    %v4280 = vlaneseq
    %v4281 = vshrl.u32 %v4280, 7
    %v4282 = vsub.s32 4, %v4281
    %v4283 = vrot.slane %v4253, %v4282
    %v4284 = vlaneseq
    %v4285 = vshrl.u32 %v4284, 7
    %v4286 = vsub.s32 6, %v4285
    %v4287 = vrot.slane %v4253, %v4286
    %v4296 = vlaneseq
    %v4297 = vshrl.u32 %v4296, 7
    %v4298 = vsub.s32 0, %v4297
    %v4299 = vrot.slane %v4259, %v4298
    %v4300 = vlaneseq
    %v4301 = vshrl.u32 %v4300, 7
    %v4302 = vsub.s32 0, %v4301
    %v4303 = vrot.slane %v4263, %v4302
    %v4304 = vlaneseq
    %v4305 = vshrl.u32 %v4304, 7
    %v4306 = vsub.s32 0, %v4305
    %v4307 = vrot.slane %v4267, %v4306
    %v4308 = vlaneseq
    %v4309 = vshrl.u32 %v4308, 7
    %v4310 = vsub.s32 0, %v4309
    %v4311 = vrot.slane %v4271, %v4310
    %v4312 = vlaneseq
    %v4313 = vshrl.u32 %v4312, 7
    %v4314 = vsub.s32 0, %v4313
    %v4315 = vrot.slane %v4275, %v4314
    %v4316 = vlaneseq
    %v4317 = vshrl.u32 %v4316, 7
    %v4318 = vsub.s32 0, %v4317
    %v4319 = vrot.slane %v4279, %v4318
    %v4320 = vlaneseq
    %v4321 = vshrl.u32 %v4320, 7
    %v4322 = vsub.s32 0, %v4321
    %v4323 = vrot.slane %v4283, %v4322
    %v4324 = vlaneseq
    %v4325 = vshrl.u32 %v4324, 7
    %v4326 = vsub.s32 0, %v4325
    %v4327 = vrot.slane %v4287, %v4326
    %v4328 = vmul.f32 %v4243, %v4299
    %v4329 = vmul.f32 %v4244, %v4303
    %v4330 = vmul.f32 %v4245, %v4307
    %v4331 = vmul.f32 %v4246, %v4311
    %v4332 = vmul.f32 %v4247, %v4315
    %v4333 = vmul.f32 %v4248, %v4319
    %v4334 = vmul.f32 %v4249, %v4323
    %v4335 = vmul.f32 %v4250, %v4327
    %v4336 = vadd.f32 %v4328, %v4329
    %v4337 = vadd.f32 %v4336, %v4330
    %v4338 = vadd.f32 %v4337, %v4331
    %v4339 = vadd.f32 %v4338, %v4332
    %v4340 = vadd.f32 %v4339, %v4333
    %v4341 = vadd.f32 %v4340, %v4334
    %v4342 = vadd.f32 %v4341, %v4335
    %4343 = vadd.xlane.f32.xlu0 %v4342
    %v4344 = vpop.xlane.xlu0 %4343
    %s4345 = sld [smem:[#allocation2]]
    %v4346 = vstv %s4345
    %v4347 = vadd.f32 %v4344, %v4346
    %vm4348 = vcmask 7168
    %4349 = vst.msk [vmem:[%s7] sm:$0xff] %vm4348, %v4347
    // Predicated region
    $region54: #{tpu_custom_call.1} parent=1 // pred_check
      _
    $region55: #{tpu_custom_call.1} parent=1 // pred_check_branch
      %4351 = sbr.rel (0) target = $region57
    $region56: #{tpu_custom_call.1} parent=1 // pred_region
      _
    $region57: #{tpu_custom_call.1} parent=1 // pred_fallthru
      _
    // Predicated region
    $region58: #{tpu_custom_call.1} parent=1 // pred_check
      _
    $region59: #{tpu_custom_call.1} parent=1 // pred_check_branch
      %4353 = sbr.rel (0) target = $region61
    $region60: #{tpu_custom_call.1} parent=1 // pred_region
      _
    $region61: #{tpu_custom_call.1} parent=1 // pred_fallthru
      _
    %4354 = vsyncpa [#allocation4], 1
    %4355 = vsyncpa [#allocation6], 1
    %4356 = vsyncpa [#allocation9], 1
    %4357 = vsyncpa [#allocation12], 1

</llo_original>
